<compile_context>
chip_gen: v7x
topology: tpu7x:2x2x1
jax: 0.10.0
libtpu: 0.0.40
codegen_flags: <defaults>
</compile_context>

<pallas_src>
import numpy as np
import jax
import jax.numpy as jnp
from jax import lax
from jax.experimental import pallas as pl
from jax.experimental.pallas import tpu as pltpu

INF = 1.0e6
EPS = 1e-9  # config.layer_norm_eps

# ---- small synthetic config (FunnelConfig fields) ----
B, S, D = 2, 8, 32          # batch, query seq len, d_model
C = S                       # context_len (key/value length); S == C -> shift = 1
H, DH = 4, 8                # n_head, d_head
HD = H * DH
DINNER = 64                 # d_inner
T = 2 * C                   # relative position embedding length
TPAD = 128                  # lane-padded relative-position length (>= T, multiple of 128)
SCALE = 1.0 / float(np.sqrt(DH))
BS, BC = B * S, B * C


def _gelu_new(x):
    # ACT2FN["gelu_new"]
    return 0.5 * x * (1.0 + jnp.tanh(0.7978845608028654 * (x + 0.044715 * x * x * x)))


def _layer_norm(x, g, b):
    mu = jnp.mean(x, axis=-1, keepdims=True)
    var = jnp.mean((x - mu) ** 2, axis=-1, keepdims=True)
    return (x - mu) * lax.rsqrt(var + EPS) * g + b


# --------------------------- fused FunnelLayer kernel ---------------------------
def _funnel_layer_kernel(q_ref, k_ref, v_ref, tt_ref, cls_ref, madd_ref,
                         wq_ref, wk_ref, wv_ref, hb_ref, rh_ref, seg_ref,
                         wpost_ref, pc_ref, w1_ref, b1_ref, w2_ref, out_ref):
    f32 = jnp.float32
    q2 = q_ref[...]                                            # (BS, D) tokens-major

    # ---- merged-head, lane-dense projections (single 2-D MXU matmuls) ----
    q_head = jnp.dot(q2, wq_ref[...], preferred_element_type=f32) * SCALE       # (BS, HD)
    k_head = jnp.dot(k_ref[...], wk_ref[...], preferred_element_type=f32)       # (BC, HD)
    v_head = jnp.dot(v_ref[...], wv_ref[...], preferred_element_type=f32)       # (BC, HD)

    def split_heads(x):   # (N, HD) -> (H, N, DH): O(H) static lane slices + free stack
        return jnp.stack([x[:, h * DH:(h + 1) * DH] for h in range(H)], axis=0)

    qh = split_heads(q_head)                                   # (H, BS, DH)
    kh = split_heads(k_head) + hb_ref[:, 3:4, :]               # + k bias (head-major)
    vh = split_heads(v_head) + hb_ref[:, 4:5, :]               # + v bias (head-major)

    def bdot(a, b):       # (H,M,DH) x (H,N,DH) -> (H,M,N), contract DH, batch over heads
        return lax.dot_general(a, b, (((2,), (2,)), ((0,), (0,))),
                               preferred_element_type=f32)

    content = bdot(qh + hb_ref[:, 0:1, :], kh)                 # (H, BS, BC)
    pos_raw = bdot(qh + hb_ref[:, 1:2, :], rh_ref[...])        # (H, BS, TPAD)
    tbias = bdot(qh + hb_ref[:, 2:3, :], seg_ref[...])         # (H, BS, 2)

    # ---- relative shift (shift=1, S==C): pos[h, b*S+i, j] = pos_raw[h, b*S+i, C-i+j] ----
    # One strided lane rotate per batch block (O(B) XLU ops, not O(S) slices).
    rolled = [
        pltpu.roll(pos_raw[:, b * S:(b + 1) * S, :], TPAD - C, 2,
                   stride=1, stride_axis=1)
        for b in range(B)
    ]
    pos = jnp.concatenate(rolled, axis=1)[:, :, :C]            # (H, BS, C)
    pos = jnp.concatenate([pos] * B, axis=2)                   # (H, BS, BC) (tiled; off-batch masked)

    # ---- token-type bias: linear blend instead of compare+select ----
    diff = tbias[:, :, 0:1]
    same = tbias[:, :, 1:2]
    tt_attn = diff + tt_ref[...][None] * (same - diff)         # (H, BS, BC)

    score = content + (pos + tt_attn) * cls_ref[...][None] + madd_ref[...][None]

    # ---- softmax (EUP reciprocal) ----
    m = jnp.max(score, axis=-1, keepdims=True)
    e = jnp.exp(score - m)
    prob = e * pl.reciprocal(jnp.sum(e, axis=-1, keepdims=True), approx=True)

    # ---- attention output: head-batched PV, merge heads, single post-proj matmul ----
    attn_vec = lax.dot_general(prob, vh, (((2,), (1,)), ((0,), (0,))),
                               preferred_element_type=f32)     # (H, BS, DH)
    attn_merged = jnp.concatenate([attn_vec[h] for h in range(H)], axis=1)   # (BS, HD)
    attn_out = jnp.dot(attn_merged, wpost_ref[...],
                       preferred_element_type=f32) + pc_ref[0:1, :]          # (BS, D)

    h1 = _layer_norm(q2 + attn_out, pc_ref[1:2, :], pc_ref[2:3, :])          # attention LN
    z = jnp.dot(h1, w1_ref[...], preferred_element_type=f32) + b1_ref[...]
    z = _gelu_new(z)
    z = jnp.dot(z, w2_ref[...], preferred_element_type=f32) + pc_ref[3:4, :]
    out_ref[...] = _layer_norm(h1 + z, pc_ref[4:5, :], pc_ref[5:6, :]).astype(out_ref.dtype)


# --------------------------------- wrapper ---------------------------------
def funnel_layer_pallas(query, key, value, token_type_mat, attention_mask,
                        cls_mask, r_pos, p):
    f32 = jnp.float32

    # ---- activations flattened tokens-major ----
    q2 = query.reshape(BS, D)
    k2 = key.reshape(BC, D)
    v2 = value.reshape(BC, D)

    # ---- precomputed (batch-flattened) attention-side constants ----
    tt_full = jnp.tile(token_type_mat.reshape(BS, C), (1, B))                 # (BS, BC)
    cls_full = jnp.tile(cls_mask, (B, B))                                      # (BS, BC)
    row_b = jnp.repeat(jnp.arange(B), S)
    col_b = jnp.repeat(jnp.arange(B), C)
    block = (row_b[:, None] == col_b[None, :]).astype(f32)                    # same-batch mask
    maskadd = -INF * (1.0 - attention_mask.reshape(1, BC) * block)            # (BS, BC) additive

    # ---- batch-invariant relative-position table, hoisted & lane-padded to 128 ----
    rh = jnp.einsum("td,dnh->tnh", r_pos, p["r_kernel"])                      # (T, H, DH)
    rh_pad = jnp.zeros((H, TPAD, DH), f32).at[:, :T, :].set(jnp.transpose(rh, (1, 0, 2)))

    # ---- all per-head biases packed into one (H, 8, DH) slab ----
    hbias = jnp.zeros((H, 8, DH), f32)
    hbias = hbias.at[:, 0, :].set(p["r_w_bias"] * SCALE)
    hbias = hbias.at[:, 1, :].set(p["r_r_bias"] * SCALE)
    hbias = hbias.at[:, 2, :].set(p["r_s_bias"] * SCALE)
    hbias = hbias.at[:, 3, :].set(p["bk"].reshape(H, DH))
    hbias = hbias.at[:, 4, :].set(p["bv"].reshape(H, DH))

    seg_hm = jnp.transpose(p["seg_embed"], (1, 0, 2))                         # (H, 2, DH)

    # ---- (1, D)-width vectors packed into one (8, D) slab ----
    postc = jnp.zeros((8, D), f32)
    postc = postc.at[0].set(p["bpost"][0])
    postc = postc.at[1].set(p["g1"][0])
    postc = postc.at[2].set(p["beta1"][0])
    postc = postc.at[3].set(p["b2"][0])
    postc = postc.at[4].set(p["g2"][0])
    postc = postc.at[5].set(p["beta2"][0])

    out2 = pl.pallas_call(
        _funnel_layer_kernel,
        out_shape=jax.ShapeDtypeStruct((BS, D), f32),
        compiler_params=pltpu.CompilerParams(vmem_limit_bytes=64 * 1024 * 1024),
    )(q2, k2, v2, tt_full, cls_full, maskadd,
      p["wq"], p["wk"], p["wv"], hbias, rh_pad, seg_hm,
      p["wpost"], postc, p["w1"], p["b1"], p["w2"])
    return out2.reshape(B, S, D)


# --------------------------- pure-JAX reference (for validation) ---------------------------
def funnel_layer_reference(query, key, value, token_type_mat, attention_mask,
                           cls_mask, r_pos, p):
    q_head = (query @ p["wq"]).reshape(B, S, H, DH) * SCALE
    k_head = (key @ p["wk"] + p["bk"]).reshape(B, C, H, DH)
    v_head = (value @ p["wv"] + p["bv"]).reshape(B, C, H, DH)
    content = jnp.einsum("bind,bjnd->bnij", q_head + p["r_w_bias"] * SCALE, k_head)
    r_head = jnp.einsum("td,dnh->tnh", r_pos, p["r_kernel"])
    pos_raw = jnp.einsum("binh,tnh->bnit", q_head + p["r_r_bias"] * SCALE, r_head)
    shift = 1
    pos = pos_raw.reshape(B, H, T, S)[:, :, shift:, :].reshape(B, H, S, T - shift)[..., :C]
    pos = pos * cls_mask
    tt_bias = jnp.einsum("bind,snd->bnis", q_head + p["r_s_bias"] * SCALE, p["seg_embed"])
    diff, same = tt_bias[..., 0:1], tt_bias[..., 1:2]
    ttm = jnp.broadcast_to(token_type_mat[:, None].astype(bool), (B, H, S, C))
    tt_attn = jnp.where(ttm, same, diff) * cls_mask
    score = content + pos + tt_attn
    score = score - INF * (1.0 - attention_mask[:, None, None, :])
    prob = jax.nn.softmax(score, axis=-1)
    attn_vec = jnp.einsum("bnij,bjnd->bind", prob, v_head).reshape(B, S, HD)
    attn_out = attn_vec @ p["wpost"] + p["bpost"]
    h = _layer_norm(query + attn_out, p["g1"], p["beta1"])
    z = _gelu_new(h @ p["w1"] + p["b1"])
    z = z @ p["w2"] + p["b2"]
    return _layer_norm(h + z, p["g2"], p["beta2"])


if __name__ == "__main__":
    root = jax.random.PRNGKey(0)
    ks = jax.random.split(root, 32)
    nrm = lambda k, shape, s=0.02: jax.random.normal(k, shape, jnp.float32) * s

    # ---- deterministic parameter init (shapes from FunnelLayer.__init__) ----
    p = {}
    p["wq"] = nrm(ks[0], (D, HD))
    p["wk"], p["bk"] = nrm(ks[1], (D, HD)), nrm(ks[2], (1, HD))
    p["wv"], p["bv"] = nrm(ks[3], (D, HD)), nrm(ks[4], (1, HD))
    p["r_w_bias"] = nrm(ks[5], (H, DH))
    p["r_r_bias"] = nrm(ks[6], (H, DH))
    p["r_s_bias"] = nrm(ks[7], (H, DH))
    p["r_kernel"] = nrm(ks[8], (D, H, DH))
    p["seg_embed"] = nrm(ks[9], (2, H, DH))
    p["wpost"], p["bpost"] = nrm(ks[10], (HD, D)), nrm(ks[11], (1, D))
    p["g1"] = jnp.ones((1, D), jnp.float32) + nrm(ks[12], (1, D))
    p["beta1"] = nrm(ks[13], (1, D))
    p["w1"], p["b1"] = nrm(ks[14], (D, DINNER)), nrm(ks[15], (1, DINNER))
    p["w2"], p["b2"] = nrm(ks[16], (DINNER, D)), nrm(ks[17], (1, D))
    p["g2"] = jnp.ones((1, D), jnp.float32) + nrm(ks[18], (1, D))
    p["beta2"] = nrm(ks[19], (1, D))

    # ---- deterministic inputs ----
    query = jax.random.normal(ks[20], (B, S, D), jnp.float32)
    key = jax.random.normal(ks[21], (B, C, D), jnp.float32)
    value = jax.random.normal(ks[22], (B, C, D), jnp.float32)
    token_type_mat = jax.random.bernoulli(ks[23], 0.5, (B, S, C)).astype(jnp.float32)
    attention_mask = jnp.ones((B, C), jnp.float32).at[1, -2:].set(0.0)
    cls_mask = jnp.pad(jnp.ones((S - 1, C - 1), jnp.float32), ((1, 0), (1, 0)))
    # r = position_embeds[block_index][shift - 1]  (relative_shift attention)
    r_pos = jax.random.normal(ks[24], (T, D), jnp.float32) * 0.1

    out = jax.jit(funnel_layer_pallas)(query, key, value, token_type_mat,
                                       attention_mask, cls_mask, r_pos, p)
    out = jax.block_until_ready(out)

    ref = funnel_layer_reference(query, key, value, token_type_mat,
                                 attention_mask, cls_mask, r_pos, p)
    np.testing.assert_allclose(np.asarray(out), np.asarray(ref), rtol=2e-2, atol=2e-2)

    print("KERNEL_OK")
</pallas_src>

<mosaic_0001>
module attributes {stable_mosaic.version = 11 : i64} {
  func.func @_funnel_layer_kernel(%arg0: memref<16x32xf32, #tpu.memory_space<vmem>>, %arg1: memref<16x32xf32, #tpu.memory_space<vmem>>, %arg2: memref<16x32xf32, #tpu.memory_space<vmem>>, %arg3: memref<16x16xf32, #tpu.memory_space<vmem>>, %arg4: memref<16x16xf32, #tpu.memory_space<vmem>>, %arg5: memref<16x16xf32, #tpu.memory_space<vmem>>, %arg6: memref<32x32xf32, #tpu.memory_space<vmem>>, %arg7: memref<32x32xf32, #tpu.memory_space<vmem>>, %arg8: memref<32x32xf32, #tpu.memory_space<vmem>>, %arg9: memref<4x8x8xf32, #tpu.memory_space<vmem>>, %arg10: memref<4x128x8xf32, #tpu.memory_space<vmem>>, %arg11: memref<4x2x8xf32, #tpu.memory_space<vmem>>, %arg12: memref<32x32xf32, #tpu.memory_space<vmem>>, %arg13: memref<8x32xf32, #tpu.memory_space<vmem>>, %arg14: memref<32x64xf32, #tpu.memory_space<vmem>>, %arg15: memref<1x64xf32, #tpu.memory_space<vmem>>, %arg16: memref<64x32xf32, #tpu.memory_space<vmem>>, %arg17: memref<16x32xf32, #tpu.memory_space<vmem>>) attributes {dimension_semantics = [], scalar_prefetch = 0 : i64, scratch_operands = 0 : i64, tpu.core_type = #tpu.core_type<tc>} {
    %c0 = arith.constant 0 : index
    %c0_0 = arith.constant 0 : index
    %0 = vector.load %arg0[%c0, %c0_0] : memref<16x32xf32, #tpu.memory_space<vmem>>, vector<16x32xf32>
    %c0_1 = arith.constant 0 : index
    %c0_2 = arith.constant 0 : index
    %1 = vector.load %arg6[%c0_1, %c0_2] : memref<32x32xf32, #tpu.memory_space<vmem>>, vector<32x32xf32>
    %cst = arith.constant dense<0.000000e+00> : vector<16x32xf32>
    %2 = tpu.matmul %0, %1, %cst {dimension_numbers = #tpu.dot_dimension_numbers<[1], [0], [0], [1], [0, 0, 1, 1], [], []>} : vector<16x32xf32>, vector<32x32xf32>, vector<16x32xf32> -> vector<16x32xf32>
    %cst_3 = arith.constant 0.353553385 : f32
    %3 = vector.broadcast %cst_3 : f32 to vector<16x32xf32>
    %4 = arith.mulf %2, %3 : vector<16x32xf32>
    %c0_4 = arith.constant 0 : index
    %c0_5 = arith.constant 0 : index
    %5 = vector.load %arg1[%c0_4, %c0_5] : memref<16x32xf32, #tpu.memory_space<vmem>>, vector<16x32xf32>
    %c0_6 = arith.constant 0 : index
    %c0_7 = arith.constant 0 : index
    %6 = vector.load %arg7[%c0_6, %c0_7] : memref<32x32xf32, #tpu.memory_space<vmem>>, vector<32x32xf32>
    %cst_8 = arith.constant dense<0.000000e+00> : vector<16x32xf32>
    %7 = tpu.matmul %5, %6, %cst_8 {dimension_numbers = #tpu.dot_dimension_numbers<[1], [0], [0], [1], [0, 0, 1, 1], [], []>} : vector<16x32xf32>, vector<32x32xf32>, vector<16x32xf32> -> vector<16x32xf32>
    %c0_9 = arith.constant 0 : index
    %c0_10 = arith.constant 0 : index
    %8 = vector.load %arg2[%c0_9, %c0_10] : memref<16x32xf32, #tpu.memory_space<vmem>>, vector<16x32xf32>
    %c0_11 = arith.constant 0 : index
    %c0_12 = arith.constant 0 : index
    %9 = vector.load %arg8[%c0_11, %c0_12] : memref<32x32xf32, #tpu.memory_space<vmem>>, vector<32x32xf32>
    %cst_13 = arith.constant dense<0.000000e+00> : vector<16x32xf32>
    %10 = tpu.matmul %8, %9, %cst_13 {dimension_numbers = #tpu.dot_dimension_numbers<[1], [0], [0], [1], [0, 0, 1, 1], [], []>} : vector<16x32xf32>, vector<32x32xf32>, vector<16x32xf32> -> vector<16x32xf32>
    %11 = vector.extract_strided_slice %4 {offsets = [0, 0], sizes = [16, 8], strides = [1, 1]} : vector<16x32xf32> to vector<16x8xf32>
    %12 = vector.extract_strided_slice %4 {offsets = [0, 8], sizes = [16, 8], strides = [1, 1]} : vector<16x32xf32> to vector<16x8xf32>
    %13 = vector.extract_strided_slice %4 {offsets = [0, 16], sizes = [16, 8], strides = [1, 1]} : vector<16x32xf32> to vector<16x8xf32>
    %14 = vector.extract_strided_slice %4 {offsets = [0, 24], sizes = [16, 8], strides = [1, 1]} : vector<16x32xf32> to vector<16x8xf32>
    %15 = vector.shape_cast %11 : vector<16x8xf32> to vector<1x16x8xf32>
    %16 = vector.shape_cast %12 : vector<16x8xf32> to vector<1x16x8xf32>
    %17 = vector.shape_cast %13 : vector<16x8xf32> to vector<1x16x8xf32>
    %18 = vector.shape_cast %14 : vector<16x8xf32> to vector<1x16x8xf32>
    %19 = tpu.concatenate %15, %16, %17, %18 in 0 : vector<1x16x8xf32>, vector<1x16x8xf32>, vector<1x16x8xf32>, vector<1x16x8xf32> -> vector<4x16x8xf32>
    %20 = vector.extract_strided_slice %7 {offsets = [0, 0], sizes = [16, 8], strides = [1, 1]} : vector<16x32xf32> to vector<16x8xf32>
    %21 = vector.extract_strided_slice %7 {offsets = [0, 8], sizes = [16, 8], strides = [1, 1]} : vector<16x32xf32> to vector<16x8xf32>
    %22 = vector.extract_strided_slice %7 {offsets = [0, 16], sizes = [16, 8], strides = [1, 1]} : vector<16x32xf32> to vector<16x8xf32>
    %23 = vector.extract_strided_slice %7 {offsets = [0, 24], sizes = [16, 8], strides = [1, 1]} : vector<16x32xf32> to vector<16x8xf32>
    %24 = vector.shape_cast %20 : vector<16x8xf32> to vector<1x16x8xf32>
    %25 = vector.shape_cast %21 : vector<16x8xf32> to vector<1x16x8xf32>
    %26 = vector.shape_cast %22 : vector<16x8xf32> to vector<1x16x8xf32>
    %27 = vector.shape_cast %23 : vector<16x8xf32> to vector<1x16x8xf32>
    %28 = tpu.concatenate %24, %25, %26, %27 in 0 : vector<1x16x8xf32>, vector<1x16x8xf32>, vector<1x16x8xf32>, vector<1x16x8xf32> -> vector<4x16x8xf32>
    %c0_14 = arith.constant 0 : index
    %c3 = arith.constant 3 : index
    %c0_15 = arith.constant 0 : index
    %29 = vector.load %arg9[%c0_14, %c3, %c0_15] : memref<4x8x8xf32, #tpu.memory_space<vmem>>, vector<4x1x8xf32>
    %30 = vector.broadcast %29 : vector<4x1x8xf32> to vector<4x16x8xf32>
    %31 = arith.addf %28, %30 : vector<4x16x8xf32>
    %32 = vector.extract_strided_slice %10 {offsets = [0, 0], sizes = [16, 8], strides = [1, 1]} : vector<16x32xf32> to vector<16x8xf32>
    %33 = vector.extract_strided_slice %10 {offsets = [0, 8], sizes = [16, 8], strides = [1, 1]} : vector<16x32xf32> to vector<16x8xf32>
    %34 = vector.extract_strided_slice %10 {offsets = [0, 16], sizes = [16, 8], strides = [1, 1]} : vector<16x32xf32> to vector<16x8xf32>
    %35 = vector.extract_strided_slice %10 {offsets = [0, 24], sizes = [16, 8], strides = [1, 1]} : vector<16x32xf32> to vector<16x8xf32>
    %36 = vector.shape_cast %32 : vector<16x8xf32> to vector<1x16x8xf32>
    %37 = vector.shape_cast %33 : vector<16x8xf32> to vector<1x16x8xf32>
    %38 = vector.shape_cast %34 : vector<16x8xf32> to vector<1x16x8xf32>
    %39 = vector.shape_cast %35 : vector<16x8xf32> to vector<1x16x8xf32>
    %40 = tpu.concatenate %36, %37, %38, %39 in 0 : vector<1x16x8xf32>, vector<1x16x8xf32>, vector<1x16x8xf32>, vector<1x16x8xf32> -> vector<4x16x8xf32>
    %c0_16 = arith.constant 0 : index
    %c4 = arith.constant 4 : index
    %c0_17 = arith.constant 0 : index
    %41 = vector.load %arg9[%c0_16, %c4, %c0_17] : memref<4x8x8xf32, #tpu.memory_space<vmem>>, vector<4x1x8xf32>
    %42 = vector.broadcast %41 : vector<4x1x8xf32> to vector<4x16x8xf32>
    %43 = arith.addf %40, %42 : vector<4x16x8xf32>
    %c0_18 = arith.constant 0 : index
    %c0_19 = arith.constant 0 : index
    %c0_20 = arith.constant 0 : index
    %44 = vector.load %arg9[%c0_18, %c0_19, %c0_20] : memref<4x8x8xf32, #tpu.memory_space<vmem>>, vector<4x1x8xf32>
    %45 = vector.broadcast %44 : vector<4x1x8xf32> to vector<4x16x8xf32>
    %46 = arith.addf %19, %45 : vector<4x16x8xf32>
    %cst_21 = arith.constant dense<0.000000e+00> : vector<4x16x16xf32>
    %47 = tpu.matmul %46, %31, %cst_21 {dimension_numbers = #tpu.dot_dimension_numbers<[2], [2], [1], [1], [0, 0, 0, 1, 1, 1], [0], [0]>} : vector<4x16x8xf32>, vector<4x16x8xf32>, vector<4x16x16xf32> -> vector<4x16x16xf32>
    %c0_22 = arith.constant 0 : index
    %c1 = arith.constant 1 : index
    %c0_23 = arith.constant 0 : index
    %48 = vector.load %arg9[%c0_22, %c1, %c0_23] : memref<4x8x8xf32, #tpu.memory_space<vmem>>, vector<4x1x8xf32>
    %49 = vector.broadcast %48 : vector<4x1x8xf32> to vector<4x16x8xf32>
    %50 = arith.addf %19, %49 : vector<4x16x8xf32>
    %c0_24 = arith.constant 0 : index
    %c0_25 = arith.constant 0 : index
    %c0_26 = arith.constant 0 : index
    %51 = vector.load %arg10[%c0_24, %c0_25, %c0_26] : memref<4x128x8xf32, #tpu.memory_space<vmem>>, vector<4x128x8xf32>
    %cst_27 = arith.constant dense<0.000000e+00> : vector<4x16x128xf32>
    %52 = tpu.matmul %50, %51, %cst_27 {dimension_numbers = #tpu.dot_dimension_numbers<[2], [2], [1], [1], [0, 0, 0, 1, 1, 1], [0], [0]>} : vector<4x16x8xf32>, vector<4x128x8xf32>, vector<4x16x128xf32> -> vector<4x16x128xf32>
    %c0_28 = arith.constant 0 : index
    %c2 = arith.constant 2 : index
    %c0_29 = arith.constant 0 : index
    %53 = vector.load %arg9[%c0_28, %c2, %c0_29] : memref<4x8x8xf32, #tpu.memory_space<vmem>>, vector<4x1x8xf32>
    %54 = vector.broadcast %53 : vector<4x1x8xf32> to vector<4x16x8xf32>
    %55 = arith.addf %19, %54 : vector<4x16x8xf32>
    %c0_30 = arith.constant 0 : index
    %c0_31 = arith.constant 0 : index
    %c0_32 = arith.constant 0 : index
    %56 = vector.load %arg11[%c0_30, %c0_31, %c0_32] : memref<4x2x8xf32, #tpu.memory_space<vmem>>, vector<4x2x8xf32>
    %cst_33 = arith.constant dense<0.000000e+00> : vector<4x16x2xf32>
    %57 = tpu.matmul %55, %56, %cst_33 {dimension_numbers = #tpu.dot_dimension_numbers<[2], [2], [1], [1], [0, 0, 0, 1, 1, 1], [0], [0]>} : vector<4x16x8xf32>, vector<4x2x8xf32>, vector<4x16x2xf32> -> vector<4x16x2xf32>
    %58 = vector.extract_strided_slice %52 {offsets = [0, 0, 0], sizes = [4, 8, 128], strides = [1, 1, 1]} : vector<4x16x128xf32> to vector<4x8x128xf32>
    %c120_i32 = arith.constant 120 : i32
    %59 = tpu.dynamic_rotate %58 by %c120_i32 dim 2 {stride = 1 : si32, stride_dimension = 1 : si32} : vector<4x8x128xf32>, i32 -> vector<4x8x128xf32>
    %60 = vector.extract_strided_slice %52 {offsets = [0, 8, 0], sizes = [4, 8, 128], strides = [1, 1, 1]} : vector<4x16x128xf32> to vector<4x8x128xf32>
    %c120_i32_34 = arith.constant 120 : i32
    %61 = tpu.dynamic_rotate %60 by %c120_i32_34 dim 2 {stride = 1 : si32, stride_dimension = 1 : si32} : vector<4x8x128xf32>, i32 -> vector<4x8x128xf32>
    %62 = tpu.concatenate %59, %61 in 1 : vector<4x8x128xf32>, vector<4x8x128xf32> -> vector<4x16x128xf32>
    %63 = vector.extract_strided_slice %62 {offsets = [0, 0, 0], sizes = [4, 16, 8], strides = [1, 1, 1]} : vector<4x16x128xf32> to vector<4x16x8xf32>
    %64 = tpu.concatenate %63, %63 in 2 : vector<4x16x8xf32>, vector<4x16x8xf32> -> vector<4x16x16xf32>
    %65 = vector.extract_strided_slice %57 {offsets = [0, 0, 0], sizes = [4, 16, 1], strides = [1, 1, 1]} : vector<4x16x2xf32> to vector<4x16x1xf32>
    %66 = vector.extract_strided_slice %57 {offsets = [0, 0, 1], sizes = [4, 16, 1], strides = [1, 1, 1]} : vector<4x16x2xf32> to vector<4x16x1xf32>
    %c0_35 = arith.constant 0 : index
    %c0_36 = arith.constant 0 : index
    %67 = vector.load %arg3[%c0_35, %c0_36] : memref<16x16xf32, #tpu.memory_space<vmem>>, vector<16x16xf32>
    %68 = vector.shape_cast %67 : vector<16x16xf32> to vector<1x16x16xf32>
    %69 = arith.subf %66, %65 : vector<4x16x1xf32>
    %70 = vector.broadcast %68 : vector<1x16x16xf32> to vector<4x16x16xf32>
    %71 = vector.broadcast %69 : vector<4x16x1xf32> to vector<4x16x16xf32>
    %72 = arith.mulf %70, %71 : vector<4x16x16xf32>
    %73 = vector.broadcast %65 : vector<4x16x1xf32> to vector<4x16x16xf32>
    %74 = arith.addf %73, %72 : vector<4x16x16xf32>
    %75 = arith.addf %64, %74 : vector<4x16x16xf32>
    %c0_37 = arith.constant 0 : index
    %c0_38 = arith.constant 0 : index
    %76 = vector.load %arg4[%c0_37, %c0_38] : memref<16x16xf32, #tpu.memory_space<vmem>>, vector<16x16xf32>
    %77 = vector.shape_cast %76 : vector<16x16xf32> to vector<1x16x16xf32>
    %78 = vector.broadcast %77 : vector<1x16x16xf32> to vector<4x16x16xf32>
    %79 = arith.mulf %75, %78 : vector<4x16x16xf32>
    %80 = arith.addf %47, %79 : vector<4x16x16xf32>
    %c0_39 = arith.constant 0 : index
    %c0_40 = arith.constant 0 : index
    %81 = vector.load %arg5[%c0_39, %c0_40] : memref<16x16xf32, #tpu.memory_space<vmem>>, vector<16x16xf32>
    %82 = vector.shape_cast %81 : vector<16x16xf32> to vector<1x16x16xf32>
    %83 = vector.broadcast %82 : vector<1x16x16xf32> to vector<4x16x16xf32>
    %84 = arith.addf %80, %83 : vector<4x16x16xf32>
    %cst_41 = arith.constant dense<0xFF800000> : vector<4x16xf32>
    %85 = vector.multi_reduction <maximumf>, %84, %cst_41 [2] : vector<4x16x16xf32> to vector<4x16xf32>
    %86 = vector.shape_cast %85 : vector<4x16xf32> to vector<4x16x1xf32>
    %87 = vector.broadcast %86 : vector<4x16x1xf32> to vector<4x16x16xf32>
    %88 = arith.subf %84, %87 : vector<4x16x16xf32>
    %89 = math.exp %88 : vector<4x16x16xf32>
    %cst_42 = arith.constant dense<0.000000e+00> : vector<4x16xf32>
    %90 = vector.multi_reduction <add>, %89, %cst_42 [2] : vector<4x16x16xf32> to vector<4x16xf32>
    %91 = vector.shape_cast %90 : vector<4x16xf32> to vector<4x16x1xf32>
    %92 = tpu.reciprocal %91 {approx = true} : vector<4x16x1xf32> -> vector<4x16x1xf32>
    %93 = vector.broadcast %92 : vector<4x16x1xf32> to vector<4x16x16xf32>
    %94 = arith.mulf %89, %93 : vector<4x16x16xf32>
    %cst_43 = arith.constant dense<0.000000e+00> : vector<4x16x8xf32>
    %95 = tpu.matmul %94, %43, %cst_43 {dimension_numbers = #tpu.dot_dimension_numbers<[2], [1], [1], [2], [0, 0, 0, 1, 1, 2], [0], [0]>} : vector<4x16x16xf32>, vector<4x16x8xf32>, vector<4x16x8xf32> -> vector<4x16x8xf32>
    %96 = vector.extract_strided_slice %95 {offsets = [0, 0, 0], sizes = [1, 16, 8], strides = [1, 1, 1]} : vector<4x16x8xf32> to vector<1x16x8xf32>
    %97 = vector.shape_cast %96 : vector<1x16x8xf32> to vector<16x8xf32>
    %98 = vector.extract_strided_slice %95 {offsets = [1, 0, 0], sizes = [1, 16, 8], strides = [1, 1, 1]} : vector<4x16x8xf32> to vector<1x16x8xf32>
    %99 = vector.shape_cast %98 : vector<1x16x8xf32> to vector<16x8xf32>
    %100 = vector.extract_strided_slice %95 {offsets = [2, 0, 0], sizes = [1, 16, 8], strides = [1, 1, 1]} : vector<4x16x8xf32> to vector<1x16x8xf32>
    %101 = vector.shape_cast %100 : vector<1x16x8xf32> to vector<16x8xf32>
    %102 = vector.extract_strided_slice %95 {offsets = [3, 0, 0], sizes = [1, 16, 8], strides = [1, 1, 1]} : vector<4x16x8xf32> to vector<1x16x8xf32>
    %103 = vector.shape_cast %102 : vector<1x16x8xf32> to vector<16x8xf32>
    %104 = tpu.concatenate %97, %99, %101, %103 in 1 : vector<16x8xf32>, vector<16x8xf32>, vector<16x8xf32>, vector<16x8xf32> -> vector<16x32xf32>
    %c0_44 = arith.constant 0 : index
    %c0_45 = arith.constant 0 : index
    %105 = vector.load %arg12[%c0_44, %c0_45] : memref<32x32xf32, #tpu.memory_space<vmem>>, vector<32x32xf32>
    %cst_46 = arith.constant dense<0.000000e+00> : vector<16x32xf32>
    %106 = tpu.matmul %104, %105, %cst_46 {dimension_numbers = #tpu.dot_dimension_numbers<[1], [0], [0], [1], [0, 0, 1, 1], [], []>} : vector<16x32xf32>, vector<32x32xf32>, vector<16x32xf32> -> vector<16x32xf32>
    %c0_47 = arith.constant 0 : index
    %c0_48 = arith.constant 0 : index
    %107 = vector.load %arg13[%c0_47, %c0_48] : memref<8x32xf32, #tpu.memory_space<vmem>>, vector<1x32xf32>
    %108 = vector.broadcast %107 : vector<1x32xf32> to vector<16x32xf32>
    %109 = arith.addf %106, %108 : vector<16x32xf32>
    %110 = arith.addf %0, %109 : vector<16x32xf32>
    %c1_49 = arith.constant 1 : index
    %c0_50 = arith.constant 0 : index
    %111 = vector.load %arg13[%c1_49, %c0_50] : memref<8x32xf32, #tpu.memory_space<vmem>>, vector<1x32xf32>
    %c2_51 = arith.constant 2 : index
    %c0_52 = arith.constant 0 : index
    %112 = vector.load %arg13[%c2_51, %c0_52] : memref<8x32xf32, #tpu.memory_space<vmem>>, vector<1x32xf32>
    %cst_53 = arith.constant dense<0.000000e+00> : vector<16xf32>
    %113 = vector.multi_reduction <add>, %110, %cst_53 [1] : vector<16x32xf32> to vector<16xf32>
    %114 = vector.shape_cast %113 : vector<16xf32> to vector<16x1xf32>
    %cst_54 = arith.constant 3.200000e+01 : f32
    %115 = vector.broadcast %cst_54 : f32 to vector<16x1xf32>
    %116 = arith.divf %114, %115 : vector<16x1xf32>
    %117 = vector.broadcast %116 : vector<16x1xf32> to vector<16x32xf32>
    %118 = arith.subf %110, %117 : vector<16x32xf32>
    %119 = arith.mulf %118, %118 : vector<16x32xf32>
    %cst_55 = arith.constant dense<0.000000e+00> : vector<16xf32>
    %120 = vector.multi_reduction <add>, %119, %cst_55 [1] : vector<16x32xf32> to vector<16xf32>
    %121 = vector.shape_cast %120 : vector<16xf32> to vector<16x1xf32>
    %cst_56 = arith.constant 3.200000e+01 : f32
    %122 = vector.broadcast %cst_56 : f32 to vector<16x1xf32>
    %123 = arith.divf %121, %122 : vector<16x1xf32>
    %124 = vector.broadcast %116 : vector<16x1xf32> to vector<16x32xf32>
    %125 = arith.subf %110, %124 : vector<16x32xf32>
    %cst_57 = arith.constant 9.99999971E-10 : f32
    %126 = vector.broadcast %cst_57 : f32 to vector<16x1xf32>
    %127 = arith.addf %123, %126 : vector<16x1xf32>
    %128 = math.rsqrt %127 : vector<16x1xf32>
    %129 = vector.broadcast %128 : vector<16x1xf32> to vector<16x32xf32>
    %130 = arith.mulf %125, %129 : vector<16x32xf32>
    %131 = vector.broadcast %111 : vector<1x32xf32> to vector<16x32xf32>
    %132 = arith.mulf %130, %131 : vector<16x32xf32>
    %133 = vector.broadcast %112 : vector<1x32xf32> to vector<16x32xf32>
    %134 = arith.addf %132, %133 : vector<16x32xf32>
    %c0_58 = arith.constant 0 : index
    %c0_59 = arith.constant 0 : index
    %135 = vector.load %arg14[%c0_58, %c0_59] : memref<32x64xf32, #tpu.memory_space<vmem>>, vector<32x64xf32>
    %cst_60 = arith.constant dense<0.000000e+00> : vector<16x64xf32>
    %136 = tpu.matmul %134, %135, %cst_60 {dimension_numbers = #tpu.dot_dimension_numbers<[1], [0], [0], [1], [0, 0, 1, 1], [], []>} : vector<16x32xf32>, vector<32x64xf32>, vector<16x64xf32> -> vector<16x64xf32>
    %c0_61 = arith.constant 0 : index
    %c0_62 = arith.constant 0 : index
    %137 = vector.load %arg15[%c0_61, %c0_62] : memref<1x64xf32, #tpu.memory_space<vmem>>, vector<1x64xf32>
    %138 = vector.broadcast %137 : vector<1x64xf32> to vector<16x64xf32>
    %139 = arith.addf %136, %138 : vector<16x64xf32>
    %cst_63 = arith.constant 5.000000e-01 : f32
    %140 = vector.broadcast %cst_63 : f32 to vector<16x64xf32>
    %141 = arith.mulf %140, %139 : vector<16x64xf32>
    %cst_64 = arith.constant 4.471500e-02 : f32
    %142 = vector.broadcast %cst_64 : f32 to vector<16x64xf32>
    %143 = arith.mulf %142, %139 : vector<16x64xf32>
    %144 = arith.mulf %143, %139 : vector<16x64xf32>
    %145 = arith.mulf %144, %139 : vector<16x64xf32>
    %146 = arith.addf %139, %145 : vector<16x64xf32>
    %cst_65 = arith.constant 0.797884583 : f32
    %147 = vector.broadcast %cst_65 : f32 to vector<16x64xf32>
    %148 = arith.mulf %147, %146 : vector<16x64xf32>
    %149 = math.tanh %148 : vector<16x64xf32>
    %cst_66 = arith.constant 1.000000e+00 : f32
    %150 = vector.broadcast %cst_66 : f32 to vector<16x64xf32>
    %151 = arith.addf %150, %149 : vector<16x64xf32>
    %152 = arith.mulf %141, %151 : vector<16x64xf32>
    %c0_67 = arith.constant 0 : index
    %c0_68 = arith.constant 0 : index
    %153 = vector.load %arg16[%c0_67, %c0_68] : memref<64x32xf32, #tpu.memory_space<vmem>>, vector<64x32xf32>
    %cst_69 = arith.constant dense<0.000000e+00> : vector<16x32xf32>
    %154 = tpu.matmul %152, %153, %cst_69 {dimension_numbers = #tpu.dot_dimension_numbers<[1], [0], [0], [1], [0, 0, 1, 1], [], []>} : vector<16x64xf32>, vector<64x32xf32>, vector<16x32xf32> -> vector<16x32xf32>
    %c3_70 = arith.constant 3 : index
    %c0_71 = arith.constant 0 : index
    %155 = vector.load %arg13[%c3_70, %c0_71] : memref<8x32xf32, #tpu.memory_space<vmem>>, vector<1x32xf32>
    %156 = vector.broadcast %155 : vector<1x32xf32> to vector<16x32xf32>
    %157 = arith.addf %154, %156 : vector<16x32xf32>
    %158 = arith.addf %134, %157 : vector<16x32xf32>
    %c4_72 = arith.constant 4 : index
    %c0_73 = arith.constant 0 : index
    %159 = vector.load %arg13[%c4_72, %c0_73] : memref<8x32xf32, #tpu.memory_space<vmem>>, vector<1x32xf32>
    %c5 = arith.constant 5 : index
    %c0_74 = arith.constant 0 : index
    %160 = vector.load %arg13[%c5, %c0_74] : memref<8x32xf32, #tpu.memory_space<vmem>>, vector<1x32xf32>
    %cst_75 = arith.constant dense<0.000000e+00> : vector<16xf32>
    %161 = vector.multi_reduction <add>, %158, %cst_75 [1] : vector<16x32xf32> to vector<16xf32>
    %162 = vector.shape_cast %161 : vector<16xf32> to vector<16x1xf32>
    %cst_76 = arith.constant 3.200000e+01 : f32
    %163 = vector.broadcast %cst_76 : f32 to vector<16x1xf32>
    %164 = arith.divf %162, %163 : vector<16x1xf32>
    %165 = vector.broadcast %164 : vector<16x1xf32> to vector<16x32xf32>
    %166 = arith.subf %158, %165 : vector<16x32xf32>
    %167 = arith.mulf %166, %166 : vector<16x32xf32>
    %cst_77 = arith.constant dense<0.000000e+00> : vector<16xf32>
    %168 = vector.multi_reduction <add>, %167, %cst_77 [1] : vector<16x32xf32> to vector<16xf32>
    %169 = vector.shape_cast %168 : vector<16xf32> to vector<16x1xf32>
    %cst_78 = arith.constant 3.200000e+01 : f32
    %170 = vector.broadcast %cst_78 : f32 to vector<16x1xf32>
    %171 = arith.divf %169, %170 : vector<16x1xf32>
    %172 = vector.broadcast %164 : vector<16x1xf32> to vector<16x32xf32>
    %173 = arith.subf %158, %172 : vector<16x32xf32>
    %cst_79 = arith.constant 9.99999971E-10 : f32
    %174 = vector.broadcast %cst_79 : f32 to vector<16x1xf32>
    %175 = arith.addf %171, %174 : vector<16x1xf32>
    %176 = math.rsqrt %175 : vector<16x1xf32>
    %177 = vector.broadcast %176 : vector<16x1xf32> to vector<16x32xf32>
    %178 = arith.mulf %173, %177 : vector<16x32xf32>
    %179 = vector.broadcast %159 : vector<1x32xf32> to vector<16x32xf32>
    %180 = arith.mulf %178, %179 : vector<16x32xf32>
    %181 = vector.broadcast %160 : vector<1x32xf32> to vector<16x32xf32>
    %182 = arith.addf %180, %181 : vector<16x32xf32>
    %c0_80 = arith.constant 0 : index
    %c0_81 = arith.constant 0 : index
    %183 = vector.load %arg17[%c0_80, %c0_81] : memref<16x32xf32, #tpu.memory_space<vmem>>, vector<16x32xf32>
    tpu.vector_store %arg17[%c0_80, %c0_81], %182 {strides = array<i32>} : memref<16x32xf32, #tpu.memory_space<vmem>>, vector<16x32xf32>,
    return
  }
}

</mosaic_0001>

<llo_original>
// kernel: tile.17
$region0: #{tile.17}
  %s0 = inlined_call_operand.vmem [shape: f32[2,8,2,8], index: 0, kind: input, shape index: {}]
  %s1 = inlined_call_operand.hbm [shape: f32[16,16], index: 1, kind: output, shape index: {}]
  $region1: #{tile.17} parent=0
    #allocation0 [shape = 'u8[8192]{0}', space=vmem, size = 0x2000, scoped, tag = 'operand span for operand 1']
    #allocation1 [shape = 's32[1]{0}', space=sflag, size = 0x4, scoped, tag = 'scoped memory for tile.17']
    #allocation2 [shape = 'u8[65536]{0}', space=vmem, size = 0x10000, scoped, tag = 'scoped mem for input reshape']
    %2 = vsyncpa [#allocation1], 0
    %s4 = sshllo.u32 0, 2
    %s5 = smul.addr 2, 15
    %s6 = scalar_lea.vmem %s0, %s5
    %v7 = vld [vmem:[%s6] sm:%s4]
    %s8 = scalar_lea.vmem [#allocation2], 120
    %9 = vst [vmem:[%s8] sm:%s4] %v7
    %s10 = smul.addr 2, 14
    %s11 = scalar_lea.vmem %s0, %s10
    %v12 = vld [vmem:[%s11] sm:%s4]
    %s13 = scalar_lea.vmem [#allocation2], 112
    %14 = vst [vmem:[%s13] sm:%s4] %v12
    %s15 = smul.addr 2, 13
    %s16 = scalar_lea.vmem %s0, %s15
    %v17 = vld [vmem:[%s16] sm:%s4]
    %s18 = scalar_lea.vmem [#allocation2], 104
    %19 = vst [vmem:[%s18] sm:%s4] %v17
    %s20 = smul.addr 2, 12
    %s21 = scalar_lea.vmem %s0, %s20
    %v22 = vld [vmem:[%s21] sm:%s4]
    %s23 = scalar_lea.vmem [#allocation2], 96
    %24 = vst [vmem:[%s23] sm:%s4] %v22
    %s25 = smul.addr 2, 11
    %s26 = scalar_lea.vmem %s0, %s25
    %v27 = vld [vmem:[%s26] sm:%s4]
    %s28 = scalar_lea.vmem [#allocation2], 88
    %29 = vst [vmem:[%s28] sm:%s4] %v27
    %s30 = smul.addr 2, 10
    %s31 = scalar_lea.vmem %s0, %s30
    %v32 = vld [vmem:[%s31] sm:%s4]
    %s33 = scalar_lea.vmem [#allocation2], 80
    %34 = vst [vmem:[%s33] sm:%s4] %v32
    %s35 = smul.addr 2, 9
    %s36 = scalar_lea.vmem %s0, %s35
    %v37 = vld [vmem:[%s36] sm:%s4]
    %s38 = scalar_lea.vmem [#allocation2], 72
    %39 = vst [vmem:[%s38] sm:%s4] %v37
    %s40 = smul.addr 2, 8
    %s41 = scalar_lea.vmem %s0, %s40
    %v42 = vld [vmem:[%s41] sm:%s4]
    %s43 = scalar_lea.vmem [#allocation2], 64
    %44 = vst [vmem:[%s43] sm:%s4] %v42
    %s45 = smul.addr 2, 7
    %s46 = scalar_lea.vmem %s0, %s45
    %v47 = vld [vmem:[%s46] sm:%s4]
    %s48 = scalar_lea.vmem [#allocation2], 56
    %49 = vst [vmem:[%s48] sm:%s4] %v47
    %s50 = smul.addr 2, 6
    %s51 = scalar_lea.vmem %s0, %s50
    %v52 = vld [vmem:[%s51] sm:%s4]
    %s53 = scalar_lea.vmem [#allocation2], 48
    %54 = vst [vmem:[%s53] sm:%s4] %v52
    %s55 = smul.addr 2, 5
    %s56 = scalar_lea.vmem %s0, %s55
    %v57 = vld [vmem:[%s56] sm:%s4]
    %s58 = scalar_lea.vmem [#allocation2], 40
    %59 = vst [vmem:[%s58] sm:%s4] %v57
    %s60 = smul.addr 2, 4
    %s61 = scalar_lea.vmem %s0, %s60
    %v62 = vld [vmem:[%s61] sm:%s4]
    %s63 = scalar_lea.vmem [#allocation2], 32
    %64 = vst [vmem:[%s63] sm:%s4] %v62
    %s65 = smul.addr 2, 3
    %s66 = scalar_lea.vmem %s0, %s65
    %v67 = vld [vmem:[%s66] sm:%s4]
    %s68 = scalar_lea.vmem [#allocation2], 24
    %69 = vst [vmem:[%s68] sm:%s4] %v67
    %s70 = smul.addr 2, 2
    %s71 = scalar_lea.vmem %s0, %s70
    %v72 = vld [vmem:[%s71] sm:%s4]
    %s73 = scalar_lea.vmem [#allocation2], 16
    %74 = vst [vmem:[%s73] sm:%s4] %v72
    %s75 = scalar_lea.vmem %s0, 2
    %v76 = vld [vmem:[%s75] sm:%s4]
    %s77 = scalar_lea.vmem [#allocation2], 8
    %78 = vst [vmem:[%s77] sm:%s4] %v76
    %v79 = vld [vmem:[%s0] sm:%s4]
    %80 = vst [vmem:[#allocation2] sm:%s4] %v79
    %v81 = vld [vmem:[#allocation2] ss:$8 sm:$0xf]
    %v82 = vld [vmem:[#allocation2] ss:$8 sm:$0xf0]
    %vm83 = vcmask 1047556
    %v84 = vsel %vm83, %v82, %v81
    %vm85 = vcmask 64512
    %86 = vst.msk [vmem:[#allocation0] sm:$0xff] %vm85, %v84
    %s87 = scalar_lea.vmem [#allocation2], 64
    %v88 = vld [vmem:[%s87] ss:$8 sm:$0xf]
    %s89 = scalar_lea.vmem [#allocation2], 64
    %v90 = vld [vmem:[%s89] ss:$8 sm:$0xf0]
    %vm91 = vcmask 1047556
    %v92 = vsel %vm91, %v90, %v88
    %vm93 = vcmask 64512
    %s94 = scalar_lea.vmem [#allocation0], 8
    %95 = vst.msk [vmem:[%s94] sm:$0xff] %vm93, %v92
    %s96 = scalar_lea.vmem [#allocation2], 1
    %v97 = vld [vmem:[%s96] ss:$8 sm:$0xf]
    %s98 = scalar_lea.vmem [#allocation2], 1
    %v99 = vld [vmem:[%s98] ss:$8 sm:$0xf0]
    %vm100 = vcmask 1047556
    %v101 = vsel %vm100, %v99, %v97
    %102 = vrot.lane.b32.xlu0 %v101, 8
    %v103 = vpop.permute.xlu0 %102
    %vm104 = vcmask 130112
    %105 = vst.msk [vmem:[#allocation0] sm:$0xff] %vm104, %v103
    %s106 = scalar_lea.vmem [#allocation2], 65
    %v107 = vld [vmem:[%s106] ss:$8 sm:$0xf]
    %s108 = scalar_lea.vmem [#allocation2], 65
    %v109 = vld [vmem:[%s108] ss:$8 sm:$0xf0]
    %vm110 = vcmask 1047556
    %v111 = vsel %vm110, %v109, %v107
    %112 = vrot.lane.b32.xlu0 %v111, 8
    %v113 = vpop.permute.xlu0 %112
    %vm114 = vcmask 130112
    %s115 = scalar_lea.vmem [#allocation0], 8
    %116 = vst.msk [vmem:[%s115] sm:$0xff] %vm114, %v113
    %s118 = ssub.s32 256, 256
    %119 = vsyncadd [#allocation1], %s118
    %s121 = sshll.u32 [#allocation0], 4
    %s122 = int_to_ptr.vmem [resolvable:$true] %s121
    %124 = dma.vmem_to_hbm [thread:$0]  %s122, 256, %s1, [#allocation1]
    %125 = dma.done [#allocation1], 256
    %126 = vsyncpa [#allocation1], 1

// kernel: tile.16
$region0: #{tile.16}
  #allocation0 [shape = 's32[1]{0}', space=sflag, size = 0x4, scoped, tag = 'scoped memory for tile.16']
  %s0 = inlined_call_operand.vmem [shape: f32[8,8], index: 0, kind: input, shape index: {}]
  %s1 = inlined_call_operand.vmem [shape: f32[2,8,2,8], index: 1, kind: output, shape index: {}]
  // Predicated region
  $region2: #{tile.16} parent=0 // pred_check
    _
  $region3: #{tile.16} parent=0 // pred_check_branch
    %3 = sbr.rel (0) target = $region5
  $region4: #{tile.16} parent=0 // pred_region
    _
  $region5: #{tile.16} parent=0 // pred_fallthru
    _
  %v4 = vld [vmem:[%s0] ss:$0 sm:$0xff]
  %5 = vst [vmem:[%s1] sm:$0x3] %v4
  %s6 = scalar_lea.vmem %s1, 16
  %7 = vst [vmem:[%s6] sm:$0x3] %v4
  %s8 = scalar_lea.vmem %s0, 1
  %v9 = vld [vmem:[%s8] ss:$0 sm:$0xff]
  %s10 = scalar_lea.vmem %s1, 2
  %11 = vst [vmem:[%s10] sm:$0x3] %v9
  %s12 = scalar_lea.vmem %s1, 18
  %13 = vst [vmem:[%s12] sm:$0x3] %v9
  %s14 = scalar_lea.vmem %s0, 2
  %v15 = vld [vmem:[%s14] ss:$0 sm:$0xff]
  %s16 = scalar_lea.vmem %s1, 4
  %17 = vst [vmem:[%s16] sm:$0x3] %v15
  %s18 = scalar_lea.vmem %s1, 20
  %19 = vst [vmem:[%s18] sm:$0x3] %v15
  %s20 = scalar_lea.vmem %s0, 3
  %v21 = vld [vmem:[%s20] ss:$0 sm:$0xff]
  %s22 = scalar_lea.vmem %s1, 6
  %23 = vst [vmem:[%s22] sm:$0x3] %v21
  %s24 = scalar_lea.vmem %s1, 22
  %25 = vst [vmem:[%s24] sm:$0x3] %v21
  %s26 = scalar_lea.vmem %s0, 4
  %v27 = vld [vmem:[%s26] ss:$0 sm:$0xff]
  %s28 = scalar_lea.vmem %s1, 8
  %29 = vst [vmem:[%s28] sm:$0x3] %v27
  %s30 = scalar_lea.vmem %s1, 24
  %31 = vst [vmem:[%s30] sm:$0x3] %v27
  %s32 = scalar_lea.vmem %s0, 5
  %v33 = vld [vmem:[%s32] ss:$0 sm:$0xff]
  %s34 = scalar_lea.vmem %s1, 10
  %35 = vst [vmem:[%s34] sm:$0x3] %v33
  %s36 = scalar_lea.vmem %s1, 26
  %37 = vst [vmem:[%s36] sm:$0x3] %v33
  %s38 = scalar_lea.vmem %s0, 6
  %v39 = vld [vmem:[%s38] ss:$0 sm:$0xff]
  %s40 = scalar_lea.vmem %s1, 12
  %41 = vst [vmem:[%s40] sm:$0x3] %v39
  %s42 = scalar_lea.vmem %s1, 28
  %43 = vst [vmem:[%s42] sm:$0x3] %v39
  %s44 = scalar_lea.vmem %s0, 7
  %v45 = vld [vmem:[%s44] ss:$0 sm:$0xff]
  %s46 = scalar_lea.vmem %s1, 14
  %47 = vst [vmem:[%s46] sm:$0x3] %v45
  %s48 = scalar_lea.vmem %s1, 30
  %49 = vst [vmem:[%s48] sm:$0x3] %v45

// kernel: eq.8
$region0: #{eq.8}
  %s0 = inlined_call_operand.vmem [shape: s32[2,8], index: 0, kind: input, shape index: {}]
  %s1 = inlined_call_operand.vmem [shape: s32[16], index: 1, kind: output, shape index: {}]
  $region1: #{eq.8} parent=0
    #allocation0 [shape = 'u8[4096]{0}', space=vmem, size = 0x1000, scoped, tag = 'scoped mem for output reshape']
    #allocation1 [shape = 'u8[4096]{0}', space=vmem, size = 0x1000, scoped, tag = 'scoped mem for input reshape']
    %s3 = sshllo.u32 0, 2
    %v4 = vld [vmem:[%s0] sm:%s3]
    %5 = vst [vmem:[#allocation1] sm:%s3] %v4
    %v6 = vld [vmem:[#allocation1] sm:$0x1]
    %vm7 = vcmask 64512
    %8 = vst.msk [vmem:[#allocation0] sm:$0x1] %vm7, %v6
    %s9 = scalar_lea.vmem [#allocation1], 1
    %v10 = vld [vmem:[%s9] sm:$0x1]
    %11 = vrot.lane.b32.xlu0 %v10, 8
    %v12 = vpop.permute.xlu0 %11
    %vm13 = vcmask 130112
    %14 = vst.msk [vmem:[#allocation0] sm:$0x1] %vm13, %v12
    %s16 = sshllo.u32 0, 1
    %v18 = vld [vmem:[#allocation0] sm:%s16]
    %s19 = sshllo.u32 0, 1
    %20 = vst [vmem:[%s1] sm:%s19] %v18

// kernel: mul.11
$region0: #{mul.11}
  %s0 = inlined_call_operand.vmem [shape: f32[2,8], index: 0, kind: input, shape index: {}]
  %s1 = inlined_call_operand.vmem [shape: f32[16], index: 1, kind: output, shape index: {}]
  $region1: #{mul.11} parent=0
    #allocation0 [shape = 'u8[4096]{0}', space=vmem, size = 0x1000, scoped, tag = 'scoped mem for output reshape']
    #allocation1 [shape = 'u8[4096]{0}', space=vmem, size = 0x1000, scoped, tag = 'scoped mem for input reshape']
    %s3 = sshllo.u32 0, 2
    %v4 = vld [vmem:[%s0] sm:%s3]
    %5 = vst [vmem:[#allocation1] sm:%s3] %v4
    %v6 = vld [vmem:[#allocation1] sm:$0x1]
    %vm7 = vcmask 64512
    %8 = vst.msk [vmem:[#allocation0] sm:$0x1] %vm7, %v6
    %s9 = scalar_lea.vmem [#allocation1], 1
    %v10 = vld [vmem:[%s9] sm:$0x1]
    %11 = vrot.lane.b32.xlu0 %v10, 8
    %v12 = vpop.permute.xlu0 %11
    %vm13 = vcmask 130112
    %14 = vst.msk [vmem:[#allocation0] sm:$0x1] %vm13, %v12
    %s16 = sshllo.u32 0, 1
    %v18 = vld [vmem:[#allocation0] sm:%s16]
    %s19 = sshllo.u32 0, 1
    %20 = vst [vmem:[%s1] sm:%s19] %v18

// kernel: funnel_layer_pallas.1
$region0: #{funnel_layer_pallas.1}
  #allocation0 [shape = 'u32[]', space=smem, size = 0x4, offset = 0x4, fixed_abs, tag = 'smem constant byte address 0x4 - core index']
  #allocation1 [shape = 'u32[144,128]{1,0:T(1,128)}', space=vmem, size = 0x12000, scoped, tag = 'internal scratch']
  %s0 = inlined_call_operand.hbm [shape: f32[16,32], index: 0, kind: input, shape index: {}]
  %s1 = inlined_call_operand.hbm [shape: f32[16,32], index: 1, kind: input, shape index: {}]
  %s2 = inlined_call_operand.hbm [shape: f32[16,32], index: 2, kind: input, shape index: {}]
  %s3 = inlined_call_operand.hbm [shape: f32[16,16], index: 3, kind: input, shape index: {}]
  %s4 = inlined_call_operand.hbm [shape: f32[16,16], index: 4, kind: input, shape index: {}]
  %s5 = inlined_call_operand.hbm [shape: f32[16,16], index: 5, kind: input, shape index: {}]
  %s6 = inlined_call_operand.hbm [shape: f32[32,32], index: 6, kind: input, shape index: {}]
  %s7 = inlined_call_operand.hbm [shape: f32[32,32], index: 7, kind: input, shape index: {}]
  %s8 = inlined_call_operand.hbm [shape: f32[32,32], index: 8, kind: input, shape index: {}]
  %s9 = inlined_call_operand.hbm [shape: f32[4,8,8], index: 9, kind: input, shape index: {}]
  %s10 = inlined_call_operand.hbm [shape: f32[4,128,8], index: 10, kind: input, shape index: {}]
  %s11 = inlined_call_operand.hbm [shape: f32[4,2,8], index: 11, kind: input, shape index: {}]
  %s12 = inlined_call_operand.hbm [shape: f32[32,32], index: 12, kind: input, shape index: {}]
  %s13 = inlined_call_operand.hbm [shape: f32[8,32], index: 13, kind: input, shape index: {}]
  %s14 = inlined_call_operand.hbm [shape: f32[32,64], index: 14, kind: input, shape index: {}]
  %s15 = inlined_call_operand.hbm [shape: f32[1,64], index: 15, kind: input, shape index: {}]
  %s16 = inlined_call_operand.hbm [shape: f32[64,32], index: 16, kind: input, shape index: {}]
  %s17 = inlined_call_operand.hbm [shape: f32[16,32], index: 17, kind: output, shape index: {}]
  %s18 = sld [smem:[#allocation0]]
  $region146: #{funnel_layer_pallas.1} parent=0
    _
  %s20 = ssub.s32 1, %s18
  %s21 = scalar_select 0, %s20, %s18
  $region1: #{funnel_layer_pallas.1} parent=0
    #allocation2 [shape = 'u8[8192]{0}', space=vmem, size = 0x2000, scoped, tag = 'input window, operand 0, single buffered']
    #allocation3 [shape = 's32[1]{0}', space=sflag, size = 0x4, scoped, tag = 'scoped memory for funnel_layer_pallas.1']
    #allocation4 [shape = 's32[1]{0}', space=sflag, size = 0x4, scoped, tag = 'scoped memory for funnel_layer_pallas.1']
    #allocation5 [shape = 'u8[8192]{0}', space=vmem, size = 0x2000, scoped, tag = 'input window, operand 1, single buffered']
    #allocation6 [shape = 's32[1]{0}', space=sflag, size = 0x4, scoped, tag = 'scoped memory for funnel_layer_pallas.1']
    #allocation7 [shape = 'u8[8192]{0}', space=vmem, size = 0x2000, scoped, tag = 'input window, operand 2, single buffered']
    #allocation8 [shape = 'u8[8192]{0}', space=vmem, size = 0x2000, scoped, tag = 'input window, operand 3, single buffered']
    #allocation9 [shape = 's32[1]{0}', space=sflag, size = 0x4, scoped, tag = 'scoped memory for funnel_layer_pallas.1']
    #allocation10 [shape = 'u8[8192]{0}', space=vmem, size = 0x2000, scoped, tag = 'input window, operand 4, single buffered']
    #allocation11 [shape = 'u8[8192]{0}', space=vmem, size = 0x2000, scoped, tag = 'input window, operand 5, single buffered']
    #allocation12 [shape = 's32[1]{0}', space=sflag, size = 0x4, scoped, tag = 'scoped memory for funnel_layer_pallas.1']
    #allocation13 [shape = 'u8[16384]{0}', space=vmem, size = 0x4000, scoped, tag = 'input window, operand 6, single buffered']
    #allocation14 [shape = 'u8[16384]{0}', space=vmem, size = 0x4000, scoped, tag = 'input window, operand 7, single buffered']
    #allocation15 [shape = 's32[1]{0}', space=sflag, size = 0x4, scoped, tag = 'scoped memory for funnel_layer_pallas.1']
    #allocation16 [shape = 'u8[16384]{0}', space=vmem, size = 0x4000, scoped, tag = 'input window, operand 8, single buffered']
    #allocation17 [shape = 'u8[16384]{0}', space=vmem, size = 0x4000, scoped, tag = 'input window, operand 9, single buffered']
    #allocation18 [shape = 's32[1]{0}', space=sflag, size = 0x4, scoped, tag = 'scoped memory for funnel_layer_pallas.1']
    #allocation19 [shape = 'u8[262144]{0}', space=vmem, size = 0x40000, scoped, tag = 'input window, operand 10, single buffered']
    #allocation20 [shape = 'u8[4096]{0}', space=vmem, size = 0x1000, scoped, tag = 'input window, operand 11, single buffered']
    #allocation21 [shape = 's32[1]{0}', space=sflag, size = 0x4, scoped, tag = 'scoped memory for funnel_layer_pallas.1']
    #allocation22 [shape = 'u8[16384]{0}', space=vmem, size = 0x4000, scoped, tag = 'input window, operand 12, single buffered']
    #allocation23 [shape = 'u8[4096]{0}', space=vmem, size = 0x1000, scoped, tag = 'input window, operand 13, single buffered']
    #allocation24 [shape = 's32[1]{0}', space=sflag, size = 0x4, scoped, tag = 'scoped memory for funnel_layer_pallas.1']
    #allocation25 [shape = 'u8[16384]{0}', space=vmem, size = 0x4000, scoped, tag = 'input window, operand 14, single buffered']
    #allocation26 [shape = 'u8[512]{0}', space=vmem, size = 0x400, scoped, tag = 'input window, operand 15, single buffered']
    #allocation27 [shape = 's32[1]{0}', space=sflag, size = 0x4, scoped, tag = 'scoped memory for funnel_layer_pallas.1']
    #allocation28 [shape = 'u8[32768]{0}', space=vmem, size = 0x8000, scoped, tag = 'input window, operand 16, single buffered']
    #allocation29 [shape = 'u8[8192]{0}', space=vmem, size = 0x2000, scoped, tag = 'output window, operand 0, single buffered']
    %22 = vsyncpa [#allocation3], 0
    %23 = vsyncpa [#allocation6], 0
    %24 = vsyncpa [#allocation9], 0
    %25 = vsyncpa [#allocation12], 0
    %26 = vsyncpa [#allocation15], 0
    %27 = vsyncpa [#allocation18], 0
    %28 = vsyncpa [#allocation21], 0
    %29 = vsyncpa [#allocation24], 0
    %30 = vsyncpa [#allocation27], 0
    %31 = vsyncpa [#allocation4], 0
    // Predicated region
    $region2: #{funnel_layer_pallas.1} parent=1 // pred_check
      _
    $region3: #{funnel_layer_pallas.1} parent=1 // pred_check_branch
      %33 = sbr.rel (0) target = $region5
    $region4: #{funnel_layer_pallas.1} parent=1 // pred_region
      %s35 = ssub.s32 256, 256
      %36 = vsyncadd [#allocation3], %s35
      %s37 = sshll.u32 [#allocation2], 4
      %s38 = int_to_ptr.vmem [resolvable:$true] %s37
      %43 = dma.hbm_to_vmem [thread:$0]  %s0, 256, %s38, [#allocation3], 128, 128, 8
    $region5: #{funnel_layer_pallas.1} parent=1 // pred_fallthru
      _
    // Predicated region
    $region6: #{funnel_layer_pallas.1} parent=1 // pred_check
      _
    $region7: #{funnel_layer_pallas.1} parent=1 // pred_check_branch
      %45 = sbr.rel (0) target = $region9
    $region8: #{funnel_layer_pallas.1} parent=1 // pred_region
      %s47 = ssub.s32 256, 256
      %48 = vsyncadd [#allocation6], %s47
      %s49 = sshll.u32 [#allocation5], 4
      %s50 = int_to_ptr.vmem [resolvable:$true] %s49
      %55 = dma.hbm_to_vmem [thread:$0]  %s1, 256, %s50, [#allocation6], 128, 128, 8
    $region9: #{funnel_layer_pallas.1} parent=1 // pred_fallthru
      _
    // Predicated region
    $region10: #{funnel_layer_pallas.1} parent=1 // pred_check
      _
    $region11: #{funnel_layer_pallas.1} parent=1 // pred_check_branch
      %57 = sbr.rel (0) target = $region13
    $region12: #{funnel_layer_pallas.1} parent=1 // pred_region
      %s59 = ssub.s32 256, 256
      %60 = vsyncadd [#allocation6], %s59
      %s61 = sshll.u32 [#allocation7], 4
      %s62 = int_to_ptr.vmem [resolvable:$true] %s61
      %67 = dma.hbm_to_vmem [thread:$0]  %s2, 256, %s62, [#allocation6], 128, 128, 8
    $region13: #{funnel_layer_pallas.1} parent=1 // pred_fallthru
      _
    // Predicated region
    $region14: #{funnel_layer_pallas.1} parent=1 // pred_check
      _
    $region15: #{funnel_layer_pallas.1} parent=1 // pred_check_branch
      %69 = sbr.rel (0) target = $region17
    $region16: #{funnel_layer_pallas.1} parent=1 // pred_region
      %s71 = ssub.s32 256, 256
      %72 = vsyncadd [#allocation9], %s71
      %s73 = sshll.u32 [#allocation8], 4
      %s74 = int_to_ptr.vmem [resolvable:$true] %s73
      %79 = dma.hbm_to_vmem [thread:$0]  %s3, 256, %s74, [#allocation9], 128, 128, 8
    $region17: #{funnel_layer_pallas.1} parent=1 // pred_fallthru
      _
    // Predicated region
    $region18: #{funnel_layer_pallas.1} parent=1 // pred_check
      _
    $region19: #{funnel_layer_pallas.1} parent=1 // pred_check_branch
      %81 = sbr.rel (0) target = $region21
    $region20: #{funnel_layer_pallas.1} parent=1 // pred_region
      %s83 = ssub.s32 256, 256
      %84 = vsyncadd [#allocation9], %s83
      %s85 = sshll.u32 [#allocation10], 4
      %s86 = int_to_ptr.vmem [resolvable:$true] %s85
      %91 = dma.hbm_to_vmem [thread:$0]  %s4, 256, %s86, [#allocation9], 128, 128, 8
    $region21: #{funnel_layer_pallas.1} parent=1 // pred_fallthru
      _
    // Predicated region
    $region22: #{funnel_layer_pallas.1} parent=1 // pred_check
      _
    $region23: #{funnel_layer_pallas.1} parent=1 // pred_check_branch
      %93 = sbr.rel (0) target = $region25
    $region24: #{funnel_layer_pallas.1} parent=1 // pred_region
      %s95 = ssub.s32 256, 256
      %96 = vsyncadd [#allocation12], %s95
      %s97 = sshll.u32 [#allocation11], 4
      %s98 = int_to_ptr.vmem [resolvable:$true] %s97
      %103 = dma.hbm_to_vmem [thread:$0]  %s5, 256, %s98, [#allocation12], 128, 128, 8
    $region25: #{funnel_layer_pallas.1} parent=1 // pred_fallthru
      _
    // Predicated region
    $region26: #{funnel_layer_pallas.1} parent=1 // pred_check
      _
    $region27: #{funnel_layer_pallas.1} parent=1 // pred_check_branch
      %105 = sbr.rel (0) target = $region29
    $region28: #{funnel_layer_pallas.1} parent=1 // pred_region
      %s107 = ssub.s32 512, 512
      %108 = vsyncadd [#allocation12], %s107
      %s109 = sshll.u32 [#allocation13], 4
      %s110 = int_to_ptr.vmem [resolvable:$true] %s109
      %115 = dma.hbm_to_vmem [thread:$0]  %s6, 512, %s110, [#allocation12], 128, 128, 8
    $region29: #{funnel_layer_pallas.1} parent=1 // pred_fallthru
      _
    // Predicated region
    $region30: #{funnel_layer_pallas.1} parent=1 // pred_check
      _
    $region31: #{funnel_layer_pallas.1} parent=1 // pred_check_branch
      %117 = sbr.rel (0) target = $region33
    $region32: #{funnel_layer_pallas.1} parent=1 // pred_region
      %s119 = ssub.s32 512, 512
      %120 = vsyncadd [#allocation15], %s119
      %s121 = sshll.u32 [#allocation14], 4
      %s122 = int_to_ptr.vmem [resolvable:$true] %s121
      %127 = dma.hbm_to_vmem [thread:$0]  %s7, 512, %s122, [#allocation15], 128, 128, 8
    $region33: #{funnel_layer_pallas.1} parent=1 // pred_fallthru
      _
    // Predicated region
    $region34: #{funnel_layer_pallas.1} parent=1 // pred_check
      _
    $region35: #{funnel_layer_pallas.1} parent=1 // pred_check_branch
      %129 = sbr.rel (0) target = $region37
    $region36: #{funnel_layer_pallas.1} parent=1 // pred_region
      %s131 = ssub.s32 512, 512
      %132 = vsyncadd [#allocation15], %s131
      %s133 = sshll.u32 [#allocation16], 4
      %s134 = int_to_ptr.vmem [resolvable:$true] %s133
      %139 = dma.hbm_to_vmem [thread:$0]  %s8, 512, %s134, [#allocation15], 128, 128, 8
    $region37: #{funnel_layer_pallas.1} parent=1 // pred_fallthru
      _
    // Predicated region
    $region38: #{funnel_layer_pallas.1} parent=1 // pred_check
      _
    $region39: #{funnel_layer_pallas.1} parent=1 // pred_check_branch
      %141 = sbr.rel (0) target = $region41
    $region40: #{funnel_layer_pallas.1} parent=1 // pred_region
      %s143 = ssub.s32 512, 512
      %144 = vsyncadd [#allocation18], %s143
      %s145 = sshll.u32 [#allocation17], 4
      %s146 = int_to_ptr.vmem [resolvable:$true] %s145
      %151 = dma.hbm_to_vmem [thread:$0]  %s9, 512, %s146, [#allocation18], 128, 128, 8
    $region41: #{funnel_layer_pallas.1} parent=1 // pred_fallthru
      _
    // Predicated region
    $region42: #{funnel_layer_pallas.1} parent=1 // pred_check
      _
    $region43: #{funnel_layer_pallas.1} parent=1 // pred_check_branch
      %153 = sbr.rel (0) target = $region45
    $region44: #{funnel_layer_pallas.1} parent=1 // pred_region
      %s155 = ssub.s32 8192, 8192
      %156 = vsyncadd [#allocation18], %s155
      %s157 = sshll.u32 [#allocation19], 4
      %s158 = int_to_ptr.vmem [resolvable:$true] %s157
      %163 = dma.hbm_to_vmem [thread:$0]  %s10, 8192, %s158, [#allocation18], 128, 128, 8
    $region45: #{funnel_layer_pallas.1} parent=1 // pred_fallthru
      _
    // Predicated region
    $region46: #{funnel_layer_pallas.1} parent=1 // pred_check
      _
    $region47: #{funnel_layer_pallas.1} parent=1 // pred_check_branch
      %165 = sbr.rel (0) target = $region49
    $region48: #{funnel_layer_pallas.1} parent=1 // pred_region
      %s167 = ssub.s32 128, 128
      %168 = vsyncadd [#allocation21], %s167
      %s169 = sshll.u32 [#allocation20], 4
      %s170 = int_to_ptr.vmem [resolvable:$true] %s169
      %175 = dma.hbm_to_vmem [thread:$0]  %s11, 128, %s170, [#allocation21], 32, 32, 2
    $region49: #{funnel_layer_pallas.1} parent=1 // pred_fallthru
      _
    // Predicated region
    $region50: #{funnel_layer_pallas.1} parent=1 // pred_check
      _
    $region51: #{funnel_layer_pallas.1} parent=1 // pred_check_branch
      %177 = sbr.rel (0) target = $region53
    $region52: #{funnel_layer_pallas.1} parent=1 // pred_region
      %s179 = ssub.s32 512, 512
      %180 = vsyncadd [#allocation21], %s179
      %s181 = sshll.u32 [#allocation22], 4
      %s182 = int_to_ptr.vmem [resolvable:$true] %s181
      %187 = dma.hbm_to_vmem [thread:$0]  %s12, 512, %s182, [#allocation21], 128, 128, 8
    $region53: #{funnel_layer_pallas.1} parent=1 // pred_fallthru
      _
    // Predicated region
    $region54: #{funnel_layer_pallas.1} parent=1 // pred_check
      _
    $region55: #{funnel_layer_pallas.1} parent=1 // pred_check_branch
      %189 = sbr.rel (0) target = $region57
    $region56: #{funnel_layer_pallas.1} parent=1 // pred_region
      %s191 = ssub.s32 128, 128
      %192 = vsyncadd [#allocation24], %s191
      %s194 = sshll.u32 [#allocation23], 4
      %s195 = int_to_ptr.vmem [resolvable:$true] %s194
      %197 = dma.hbm_to_vmem [thread:$0]  %s13, 128, %s195, [#allocation24]
    $region57: #{funnel_layer_pallas.1} parent=1 // pred_fallthru
      _
    // Predicated region
    $region58: #{funnel_layer_pallas.1} parent=1 // pred_check
      _
    $region59: #{funnel_layer_pallas.1} parent=1 // pred_check_branch
      %199 = sbr.rel (0) target = $region61
    $region60: #{funnel_layer_pallas.1} parent=1 // pred_region
      %s201 = ssub.s32 512, 512
      %202 = vsyncadd [#allocation24], %s201
      %s203 = sshll.u32 [#allocation25], 4
      %s204 = int_to_ptr.vmem [resolvable:$true] %s203
      %209 = dma.hbm_to_vmem [thread:$0]  %s14, 512, %s204, [#allocation24], 128, 128, 8
    $region61: #{funnel_layer_pallas.1} parent=1 // pred_fallthru
      _
    // Predicated region
    $region62: #{funnel_layer_pallas.1} parent=1 // pred_check
      _
    $region63: #{funnel_layer_pallas.1} parent=1 // pred_check_branch
      %211 = sbr.rel (0) target = $region65
    $region64: #{funnel_layer_pallas.1} parent=1 // pred_region
      %s213 = ssub.s32 16, 16
      %214 = vsyncadd [#allocation27], %s213
      %s216 = sshll.u32 [#allocation26], 4
      %s217 = int_to_ptr.vmem [resolvable:$true] %s216
      %219 = dma.hbm_to_vmem [thread:$0]  %s15, 16, %s217, [#allocation27]
    $region65: #{funnel_layer_pallas.1} parent=1 // pred_fallthru
      _
    // Predicated region
    $region66: #{funnel_layer_pallas.1} parent=1 // pred_check
      _
    $region67: #{funnel_layer_pallas.1} parent=1 // pred_check_branch
      %221 = sbr.rel (0) target = $region69
    $region68: #{funnel_layer_pallas.1} parent=1 // pred_region
      %s223 = ssub.s32 1024, 1024
      %224 = vsyncadd [#allocation27], %s223
      %s225 = sshll.u32 [#allocation28], 4
      %s226 = int_to_ptr.vmem [resolvable:$true] %s225
      %231 = dma.hbm_to_vmem [thread:$0]  %s16, 1024, %s226, [#allocation27], 128, 128, 8
    $region69: #{funnel_layer_pallas.1} parent=1 // pred_fallthru
      _
    // Predicated region
    $region70: #{funnel_layer_pallas.1} parent=1 // pred_check
      _
    $region71: #{funnel_layer_pallas.1} parent=1 // pred_check_branch
      %233 = sbr.rel (0) target = $region73
    $region72: #{funnel_layer_pallas.1} parent=1 // pred_region
      %234 = dma.done [#allocation3], 256
    $region73: #{funnel_layer_pallas.1} parent=1 // pred_fallthru
      _
    // Predicated region
    $region74: #{funnel_layer_pallas.1} parent=1 // pred_check
      _
    $region75: #{funnel_layer_pallas.1} parent=1 // pred_check_branch
      %236 = sbr.rel (0) target = $region77
    $region76: #{funnel_layer_pallas.1} parent=1 // pred_region
      %237 = dma.done [#allocation6], 256
    $region77: #{funnel_layer_pallas.1} parent=1 // pred_fallthru
      _
    // Predicated region
    $region78: #{funnel_layer_pallas.1} parent=1 // pred_check
      _
    $region79: #{funnel_layer_pallas.1} parent=1 // pred_check_branch
      %239 = sbr.rel (0) target = $region81
    $region80: #{funnel_layer_pallas.1} parent=1 // pred_region
      %240 = dma.done [#allocation6], 256
    $region81: #{funnel_layer_pallas.1} parent=1 // pred_fallthru
      _
    // Predicated region
    $region82: #{funnel_layer_pallas.1} parent=1 // pred_check
      _
    $region83: #{funnel_layer_pallas.1} parent=1 // pred_check_branch
      %242 = sbr.rel (0) target = $region85
    $region84: #{funnel_layer_pallas.1} parent=1 // pred_region
      %243 = dma.done [#allocation9], 256
    $region85: #{funnel_layer_pallas.1} parent=1 // pred_fallthru
      _
    // Predicated region
    $region86: #{funnel_layer_pallas.1} parent=1 // pred_check
      _
    $region87: #{funnel_layer_pallas.1} parent=1 // pred_check_branch
      %245 = sbr.rel (0) target = $region89
    $region88: #{funnel_layer_pallas.1} parent=1 // pred_region
      %246 = dma.done [#allocation9], 256
    $region89: #{funnel_layer_pallas.1} parent=1 // pred_fallthru
      _
    // Predicated region
    $region90: #{funnel_layer_pallas.1} parent=1 // pred_check
      _
    $region91: #{funnel_layer_pallas.1} parent=1 // pred_check_branch
      %248 = sbr.rel (0) target = $region93
    $region92: #{funnel_layer_pallas.1} parent=1 // pred_region
      %249 = dma.done [#allocation12], 256
    $region93: #{funnel_layer_pallas.1} parent=1 // pred_fallthru
      _
    // Predicated region
    $region94: #{funnel_layer_pallas.1} parent=1 // pred_check
      _
    $region95: #{funnel_layer_pallas.1} parent=1 // pred_check_branch
      %251 = sbr.rel (0) target = $region97
    $region96: #{funnel_layer_pallas.1} parent=1 // pred_region
      %252 = dma.done [#allocation12], 512
    $region97: #{funnel_layer_pallas.1} parent=1 // pred_fallthru
      _
    // Predicated region
    $region98: #{funnel_layer_pallas.1} parent=1 // pred_check
      _
    $region99: #{funnel_layer_pallas.1} parent=1 // pred_check_branch
      %254 = sbr.rel (0) target = $region101
    $region100: #{funnel_layer_pallas.1} parent=1 // pred_region
      %255 = dma.done [#allocation15], 512
    $region101: #{funnel_layer_pallas.1} parent=1 // pred_fallthru
      _
    // Predicated region
    $region102: #{funnel_layer_pallas.1} parent=1 // pred_check
      _
    $region103: #{funnel_layer_pallas.1} parent=1 // pred_check_branch
      %257 = sbr.rel (0) target = $region105
    $region104: #{funnel_layer_pallas.1} parent=1 // pred_region
      %258 = dma.done [#allocation15], 512
    $region105: #{funnel_layer_pallas.1} parent=1 // pred_fallthru
      _
    // Predicated region
    $region106: #{funnel_layer_pallas.1} parent=1 // pred_check
      _
    $region107: #{funnel_layer_pallas.1} parent=1 // pred_check_branch
      %260 = sbr.rel (0) target = $region109
    $region108: #{funnel_layer_pallas.1} parent=1 // pred_region
      %261 = dma.done [#allocation18], 512
    $region109: #{funnel_layer_pallas.1} parent=1 // pred_fallthru
      _
    // Predicated region
    $region110: #{funnel_layer_pallas.1} parent=1 // pred_check
      _
    $region111: #{funnel_layer_pallas.1} parent=1 // pred_check_branch
      %263 = sbr.rel (0) target = $region113
    $region112: #{funnel_layer_pallas.1} parent=1 // pred_region
      %264 = dma.done [#allocation18], 8192
    $region113: #{funnel_layer_pallas.1} parent=1 // pred_fallthru
      _
    // Predicated region
    $region114: #{funnel_layer_pallas.1} parent=1 // pred_check
      _
    $region115: #{funnel_layer_pallas.1} parent=1 // pred_check_branch
      %266 = sbr.rel (0) target = $region117
    $region116: #{funnel_layer_pallas.1} parent=1 // pred_region
      %267 = dma.done [#allocation21], 128
    $region117: #{funnel_layer_pallas.1} parent=1 // pred_fallthru
      _
    // Predicated region
    $region118: #{funnel_layer_pallas.1} parent=1 // pred_check
      _
    $region119: #{funnel_layer_pallas.1} parent=1 // pred_check_branch
      %269 = sbr.rel (0) target = $region121
    $region120: #{funnel_layer_pallas.1} parent=1 // pred_region
      %270 = dma.done [#allocation21], 512
    $region121: #{funnel_layer_pallas.1} parent=1 // pred_fallthru
      _
    // Predicated region
    $region122: #{funnel_layer_pallas.1} parent=1 // pred_check
      _
    $region123: #{funnel_layer_pallas.1} parent=1 // pred_check_branch
      %272 = sbr.rel (0) target = $region125
    $region124: #{funnel_layer_pallas.1} parent=1 // pred_region
      %273 = dma.done [#allocation24], 128
    $region125: #{funnel_layer_pallas.1} parent=1 // pred_fallthru
      _
    // Predicated region
    $region126: #{funnel_layer_pallas.1} parent=1 // pred_check
      _
    $region127: #{funnel_layer_pallas.1} parent=1 // pred_check_branch
      %275 = sbr.rel (0) target = $region129
    $region128: #{funnel_layer_pallas.1} parent=1 // pred_region
      %276 = dma.done [#allocation24], 512
    $region129: #{funnel_layer_pallas.1} parent=1 // pred_fallthru
      _
    // Predicated region
    $region130: #{funnel_layer_pallas.1} parent=1 // pred_check
      _
    $region131: #{funnel_layer_pallas.1} parent=1 // pred_check_branch
      %278 = sbr.rel (0) target = $region133
    $region132: #{funnel_layer_pallas.1} parent=1 // pred_region
      %279 = dma.done [#allocation27], 16
    $region133: #{funnel_layer_pallas.1} parent=1 // pred_fallthru
      _
    // Predicated region
    $region134: #{funnel_layer_pallas.1} parent=1 // pred_check
      _
    $region135: #{funnel_layer_pallas.1} parent=1 // pred_check_branch
      %281 = sbr.rel (0) target = $region137
    $region136: #{funnel_layer_pallas.1} parent=1 // pred_region
      %282 = dma.done [#allocation27], 1024
    $region137: #{funnel_layer_pallas.1} parent=1 // pred_fallthru
      _
    %v283 = vld [vmem:[#allocation2] sm:$0xff]
    %v284 = vld [vmem:[#allocation2 + $0x8] sm:$0xff]
    %v285 = vld [vmem:[#allocation13] sm:$0xff]
    %v286 = vld [vmem:[#allocation13 + $0x8] sm:$0xff]
    %v287 = vld [vmem:[#allocation13 + $0x10] sm:$0xff]
    %v288 = vld [vmem:[#allocation13 + $0x18] sm:$0xff]
    %vm289 = vcmask 261120
    %v291 = vsel %vm289, %v283, 0
    %v294 = vsel %vm289, %v284, 0
    %296 = vmatprep.subr.mxu0 0.0
    %297 = vmatpush1.msra.mxu0 %v285
    %298 = vmatprep.subr.mxu0 0.0
    %299 = vmatpush1.msra.mxu0 %v286
    %300 = vmatprep.subr.mxu0 0.0
    %301 = vmatpush1.msra.mxu0 %v287
    %302 = vmatprep.subr.mxu0 0.0
    %303 = vmatpush1.msra.mxu0 %v288
    %304 = vmatprep.subr.mxu0 0.0
    %305 = vmatpush1.msra.mxu0 0.0
    %306 = vmatprep.subr.mxu0 0.0
    %307 = vmatpush1.msra.mxu0 0.0
    %308 = vmatprep.subr.mxu0 0.0
    %309 = vmatpush1.msra.mxu0 0.0
    %310 = vmatprep.subr.mxu0 0.0
    %311 = vmatpush1.msra.mxu0 0.0
    %312 = vmatprep.subr.mxu0 0.0
    %313 = vmatpush1.msra.mxu0 0.0
    %314 = vmatprep.subr.mxu0 0.0
    %315 = vmatpush1.msra.mxu0 0.0
    %316 = vmatprep.subr.mxu0 0.0
    %317 = vmatpush1.msra.mxu0 0.0
    %318 = vmatprep.subr.mxu0 0.0
    %319 = vmatpush1.msra.mxu0 0.0
    %320 = vmatprep.subr.mxu0 0.0
    %321 = vmatpush1.msra.mxu0 0.0
    %322 = vmatprep.subr.mxu0 0.0
    %323 = vmatpush1.msra.mxu0 0.0
    %324 = vmatprep.subr.mxu0 0.0
    %325 = vmatpush1.msra.mxu0 0.0
    %326 = vmatprep.subr.mxu0 0.0
    %327 = vmatpush1.msra.mxu0 0.0
    %328 = vmatprep.subr.mxu0 0.0
    %329 = vmatpush1.msra.mxu0 0.0
    %330 = vmatprep.subr.mxu0 0.0
    %331 = vmatpush1.msra.mxu0 0.0
    %332 = vmatprep.subr.mxu0 0.0
    %333 = vmatpush1.msra.mxu0 0.0
    %334 = vmatprep.subr.mxu0 0.0
    %335 = vmatpush1.msra.mxu0 0.0
    %336 = vmatprep.subr.mxu0 0.0
    %337 = vmatpush1.msra.mxu0 0.0
    %338 = vmatprep.subr.mxu0 0.0
    %339 = vmatpush1.msra.mxu0 0.0
    %340 = vmatprep.subr.mxu0 0.0
    %341 = vmatpush1.msra.mxu0 0.0
    %342 = vmatprep.subr.mxu0 0.0
    %343 = vmatpush1.msra.mxu0 0.0
    %344 = vmatprep.subr.mxu0 0.0
    %345 = vmatpush1.msra.mxu0 0.0
    %346 = vmatprep.subr.mxu0 0.0
    %347 = vmatpush1.msra.mxu0 0.0
    %348 = vmatprep.subr.mxu0 0.0
    %349 = vmatpush1.msra.mxu0 0.0
    %350 = vmatprep.subr.mxu0 0.0
    %351 = vmatpush1.msra.mxu0 0.0
    %352 = vmatprep.subr.mxu0 0.0
    %353 = vmatpush1.msra.mxu0 0.0
    %354 = vmatprep.subr.mxu0 0.0
    %355 = vmatpush1.msra.mxu0 0.0
    %356 = vmatprep.subr.mxu0 0.0
    %357 = vmatpush1.msra.mxu0 0.0
    %358 = vmatprep.subr.mxu0 0.0
    %359 = vmatpush1.msra.mxu0 0.0
    %360 = vmatprep.mubr.f32.mxu0 0.0
    %361 = vmatmul.mubr.f32.gmra.mrb[0].mxu0 %v291
    %v362 = vpop.f32.mrb[0].mxu0
    %v363 = vadd.f32 0.0, %v362
    %v364 = vpop.f32.mrb[0].mxu0
    %365 = vmatprep.mubr.f32.mxu0 0.0
    %366 = vmatmul.mubr.f32.gmra.mrb[0].mxu0 %v294
    %v367 = vpop.f32.mrb[0].mxu0
    %v368 = vadd.f32 0.0, %v367
    %v369 = vpop.f32.mrb[0].mxu0
    %370 = vdwg.mxu0
    %v371 = vmul.f32 %v363, 0.35355338
    %v372 = vmul.f32 %v368, 0.35355338
    %v373 = vld [vmem:[#allocation5] sm:$0xff]
    %v374 = vld [vmem:[#allocation5 + $0x8] sm:$0xff]
    %v375 = vld [vmem:[#allocation14] sm:$0xff]
    %v376 = vld [vmem:[#allocation14 + $0x8] sm:$0xff]
    %v377 = vld [vmem:[#allocation14 + $0x10] sm:$0xff]
    %v378 = vld [vmem:[#allocation14 + $0x18] sm:$0xff]
    %v380 = vsel %vm289, %v373, 0
    %v383 = vsel %vm289, %v374, 0
    %385 = vmatprep.subr.mxu0 0.0
    %386 = vmatpush1.msra.mxu0 %v375
    %387 = vmatprep.subr.mxu0 0.0
    %388 = vmatpush1.msra.mxu0 %v376
    %389 = vmatprep.subr.mxu0 0.0
    %390 = vmatpush1.msra.mxu0 %v377
    %391 = vmatprep.subr.mxu0 0.0
    %392 = vmatpush1.msra.mxu0 %v378
    %393 = vmatprep.subr.mxu0 0.0
    %394 = vmatpush1.msra.mxu0 0.0
    %395 = vmatprep.subr.mxu0 0.0
    %396 = vmatpush1.msra.mxu0 0.0
    %397 = vmatprep.subr.mxu0 0.0
    %398 = vmatpush1.msra.mxu0 0.0
    %399 = vmatprep.subr.mxu0 0.0
    %400 = vmatpush1.msra.mxu0 0.0
    %401 = vmatprep.subr.mxu0 0.0
    %402 = vmatpush1.msra.mxu0 0.0
    %403 = vmatprep.subr.mxu0 0.0
    %404 = vmatpush1.msra.mxu0 0.0
    %405 = vmatprep.subr.mxu0 0.0
    %406 = vmatpush1.msra.mxu0 0.0
    %407 = vmatprep.subr.mxu0 0.0
    %408 = vmatpush1.msra.mxu0 0.0
    %409 = vmatprep.subr.mxu0 0.0
    %410 = vmatpush1.msra.mxu0 0.0
    %411 = vmatprep.subr.mxu0 0.0
    %412 = vmatpush1.msra.mxu0 0.0
    %413 = vmatprep.subr.mxu0 0.0
    %414 = vmatpush1.msra.mxu0 0.0
    %415 = vmatprep.subr.mxu0 0.0
    %416 = vmatpush1.msra.mxu0 0.0
    %417 = vmatprep.subr.mxu0 0.0
    %418 = vmatpush1.msra.mxu0 0.0
    %419 = vmatprep.subr.mxu0 0.0
    %420 = vmatpush1.msra.mxu0 0.0
    %421 = vmatprep.subr.mxu0 0.0
    %422 = vmatpush1.msra.mxu0 0.0
    %423 = vmatprep.subr.mxu0 0.0
    %424 = vmatpush1.msra.mxu0 0.0
    %425 = vmatprep.subr.mxu0 0.0
    %426 = vmatpush1.msra.mxu0 0.0
    %427 = vmatprep.subr.mxu0 0.0
    %428 = vmatpush1.msra.mxu0 0.0
    %429 = vmatprep.subr.mxu0 0.0
    %430 = vmatpush1.msra.mxu0 0.0
    %431 = vmatprep.subr.mxu0 0.0
    %432 = vmatpush1.msra.mxu0 0.0
    %433 = vmatprep.subr.mxu0 0.0
    %434 = vmatpush1.msra.mxu0 0.0
    %435 = vmatprep.subr.mxu0 0.0
    %436 = vmatpush1.msra.mxu0 0.0
    %437 = vmatprep.subr.mxu0 0.0
    %438 = vmatpush1.msra.mxu0 0.0
    %439 = vmatprep.subr.mxu0 0.0
    %440 = vmatpush1.msra.mxu0 0.0
    %441 = vmatprep.subr.mxu0 0.0
    %442 = vmatpush1.msra.mxu0 0.0
    %443 = vmatprep.subr.mxu0 0.0
    %444 = vmatpush1.msra.mxu0 0.0
    %445 = vmatprep.subr.mxu0 0.0
    %446 = vmatpush1.msra.mxu0 0.0
    %447 = vmatprep.subr.mxu0 0.0
    %448 = vmatpush1.msra.mxu0 0.0
    %449 = vmatprep.mubr.f32.mxu0 0.0
    %450 = vmatmul.mubr.f32.gmra.mrb[0].mxu0 %v380
    %v451 = vpop.f32.mrb[0].mxu0
    %v452 = vadd.f32 0.0, %v451
    %v453 = vpop.f32.mrb[0].mxu0
    %454 = vmatprep.mubr.f32.mxu0 0.0
    %455 = vmatmul.mubr.f32.gmra.mrb[0].mxu0 %v383
    %v456 = vpop.f32.mrb[0].mxu0
    %v457 = vadd.f32 0.0, %v456
    %v458 = vpop.f32.mrb[0].mxu0
    %459 = vdwg.mxu0
    %v460 = vld [vmem:[#allocation7] sm:$0xff]
    %v461 = vld [vmem:[#allocation7 + $0x8] sm:$0xff]
    %v462 = vld [vmem:[#allocation16] sm:$0xff]
    %v463 = vld [vmem:[#allocation16 + $0x8] sm:$0xff]
    %v464 = vld [vmem:[#allocation16 + $0x10] sm:$0xff]
    %v465 = vld [vmem:[#allocation16 + $0x18] sm:$0xff]
    %v467 = vsel %vm289, %v460, 0
    %v470 = vsel %vm289, %v461, 0
    %472 = vmatprep.subr.mxu0 0.0
    %473 = vmatpush1.msra.mxu0 %v462
    %474 = vmatprep.subr.mxu0 0.0
    %475 = vmatpush1.msra.mxu0 %v463
    %476 = vmatprep.subr.mxu0 0.0
    %477 = vmatpush1.msra.mxu0 %v464
    %478 = vmatprep.subr.mxu0 0.0
    %479 = vmatpush1.msra.mxu0 %v465
    %480 = vmatprep.subr.mxu0 0.0
    %481 = vmatpush1.msra.mxu0 0.0
    %482 = vmatprep.subr.mxu0 0.0
    %483 = vmatpush1.msra.mxu0 0.0
    %484 = vmatprep.subr.mxu0 0.0
    %485 = vmatpush1.msra.mxu0 0.0
    %486 = vmatprep.subr.mxu0 0.0
    %487 = vmatpush1.msra.mxu0 0.0
    %488 = vmatprep.subr.mxu0 0.0
    %489 = vmatpush1.msra.mxu0 0.0
    %490 = vmatprep.subr.mxu0 0.0
    %491 = vmatpush1.msra.mxu0 0.0
    %492 = vmatprep.subr.mxu0 0.0
    %493 = vmatpush1.msra.mxu0 0.0
    %494 = vmatprep.subr.mxu0 0.0
    %495 = vmatpush1.msra.mxu0 0.0
    %496 = vmatprep.subr.mxu0 0.0
    %497 = vmatpush1.msra.mxu0 0.0
    %498 = vmatprep.subr.mxu0 0.0
    %499 = vmatpush1.msra.mxu0 0.0
    %500 = vmatprep.subr.mxu0 0.0
    %501 = vmatpush1.msra.mxu0 0.0
    %502 = vmatprep.subr.mxu0 0.0
    %503 = vmatpush1.msra.mxu0 0.0
    %504 = vmatprep.subr.mxu0 0.0
    %505 = vmatpush1.msra.mxu0 0.0
    %506 = vmatprep.subr.mxu0 0.0
    %507 = vmatpush1.msra.mxu0 0.0
    %508 = vmatprep.subr.mxu0 0.0
    %509 = vmatpush1.msra.mxu0 0.0
    %510 = vmatprep.subr.mxu0 0.0
    %511 = vmatpush1.msra.mxu0 0.0
    %512 = vmatprep.subr.mxu0 0.0
    %513 = vmatpush1.msra.mxu0 0.0
    %514 = vmatprep.subr.mxu0 0.0
    %515 = vmatpush1.msra.mxu0 0.0
    %516 = vmatprep.subr.mxu0 0.0
    %517 = vmatpush1.msra.mxu0 0.0
    %518 = vmatprep.subr.mxu0 0.0
    %519 = vmatpush1.msra.mxu0 0.0
    %520 = vmatprep.subr.mxu0 0.0
    %521 = vmatpush1.msra.mxu0 0.0
    %522 = vmatprep.subr.mxu0 0.0
    %523 = vmatpush1.msra.mxu0 0.0
    %524 = vmatprep.subr.mxu0 0.0
    %525 = vmatpush1.msra.mxu0 0.0
    %526 = vmatprep.subr.mxu0 0.0
    %527 = vmatpush1.msra.mxu0 0.0
    %528 = vmatprep.subr.mxu0 0.0
    %529 = vmatpush1.msra.mxu0 0.0
    %530 = vmatprep.subr.mxu0 0.0
    %531 = vmatpush1.msra.mxu0 0.0
    %532 = vmatprep.subr.mxu0 0.0
    %533 = vmatpush1.msra.mxu0 0.0
    %534 = vmatprep.subr.mxu0 0.0
    %535 = vmatpush1.msra.mxu0 0.0
    %536 = vmatprep.mubr.f32.mxu0 0.0
    %537 = vmatmul.mubr.f32.gmra.mrb[0].mxu0 %v467
    %v538 = vpop.f32.mrb[0].mxu0
    %v539 = vadd.f32 0.0, %v538
    %v540 = vpop.f32.mrb[0].mxu0
    %541 = vmatprep.mubr.f32.mxu0 0.0
    %542 = vmatmul.mubr.f32.gmra.mrb[0].mxu0 %v470
    %v543 = vpop.f32.mrb[0].mxu0
    %v544 = vadd.f32 0.0, %v543
    %v545 = vpop.f32.mrb[0].mxu0
    %546 = vdwg.mxu0
    %549 = vrot.lane.b32.xlu0 %v371, 120
    %v550 = vpop.permute.xlu0 %549
    %551 = vrot.lane.b32.xlu0 %v372, 120
    %v552 = vpop.permute.xlu0 %551
    %555 = vrot.lane.b32.xlu0 %v371, 112
    %v556 = vpop.permute.xlu0 %555
    %557 = vrot.lane.b32.xlu0 %v372, 112
    %v558 = vpop.permute.xlu0 %557
    %561 = vrot.lane.b32.xlu0 %v371, 104
    %v562 = vpop.permute.xlu0 %561
    %563 = vrot.lane.b32.xlu0 %v372, 104
    %v564 = vpop.permute.xlu0 %563
    %569 = vrot.lane.b32.xlu0 %v452, 120
    %v570 = vpop.permute.xlu0 %569
    %571 = vrot.lane.b32.xlu0 %v457, 120
    %v572 = vpop.permute.xlu0 %571
    %575 = vrot.lane.b32.xlu0 %v452, 112
    %v576 = vpop.permute.xlu0 %575
    %577 = vrot.lane.b32.xlu0 %v457, 112
    %v578 = vpop.permute.xlu0 %577
    %581 = vrot.lane.b32.xlu0 %v452, 104
    %v582 = vpop.permute.xlu0 %581
    %583 = vrot.lane.b32.xlu0 %v457, 104
    %v584 = vpop.permute.xlu0 %583
    %v587 = vld [vmem:[#allocation17 + $0x3] sm:$0x1]
    %v588 = vld [vmem:[#allocation17 + $0xb] sm:$0x1]
    %v589 = vld [vmem:[#allocation17 + $0x13] sm:$0x1]
    %v590 = vld [vmem:[#allocation17 + $0x1b] sm:$0x1]
    %v591 = vlaneseq
    %v592 = vshrl.u32 %v591, 7
    %v593 = vsub.s32 0, %v592
    %v594 = vrot.slane %v587, %v593
    %v595 = vlaneseq
    %v596 = vshrl.u32 %v595, 7
    %v597 = vsub.s32 0, %v596
    %v598 = vrot.slane %v588, %v597
    %v599 = vlaneseq
    %v600 = vshrl.u32 %v599, 7
    %v601 = vsub.s32 0, %v600
    %v602 = vrot.slane %v589, %v601
    %v603 = vlaneseq
    %v604 = vshrl.u32 %v603, 7
    %v605 = vsub.s32 0, %v604
    %v606 = vrot.slane %v590, %v605
    %v607 = vadd.f32 %v452, %v594
    %v608 = vadd.f32 %v457, %v594
    %v609 = vadd.f32 %v570, %v598
    %v610 = vadd.f32 %v572, %v598
    %v611 = vadd.f32 %v576, %v602
    %v612 = vadd.f32 %v578, %v602
    %v613 = vadd.f32 %v582, %v606
    %v614 = vadd.f32 %v584, %v606
    %617 = vrot.lane.b32.xlu0 %v539, 120
    %v618 = vpop.permute.xlu0 %617
    %619 = vrot.lane.b32.xlu0 %v544, 120
    %v620 = vpop.permute.xlu0 %619
    %623 = vrot.lane.b32.xlu0 %v539, 112
    %v624 = vpop.permute.xlu0 %623
    %625 = vrot.lane.b32.xlu0 %v544, 112
    %v626 = vpop.permute.xlu0 %625
    %629 = vrot.lane.b32.xlu0 %v539, 104
    %v630 = vpop.permute.xlu0 %629
    %631 = vrot.lane.b32.xlu0 %v544, 104
    %v632 = vpop.permute.xlu0 %631
    %v635 = vld [vmem:[#allocation17 + $0x4] sm:$0x1]
    %v636 = vld [vmem:[#allocation17 + $0xc] sm:$0x1]
    %v637 = vld [vmem:[#allocation17 + $0x14] sm:$0x1]
    %v638 = vld [vmem:[#allocation17 + $0x1c] sm:$0x1]
    %v639 = vlaneseq
    %v640 = vshrl.u32 %v639, 7
    %v641 = vsub.s32 0, %v640
    %v642 = vrot.slane %v635, %v641
    %v643 = vlaneseq
    %v644 = vshrl.u32 %v643, 7
    %v645 = vsub.s32 0, %v644
    %v646 = vrot.slane %v636, %v645
    %v647 = vlaneseq
    %v648 = vshrl.u32 %v647, 7
    %v649 = vsub.s32 0, %v648
    %v650 = vrot.slane %v637, %v649
    %v651 = vlaneseq
    %v652 = vshrl.u32 %v651, 7
    %v653 = vsub.s32 0, %v652
    %v654 = vrot.slane %v638, %v653
    %v655 = vadd.f32 %v539, %v642
    %v656 = vadd.f32 %v544, %v642
    %v657 = vadd.f32 %v618, %v646
    %v658 = vadd.f32 %v620, %v646
    %v659 = vadd.f32 %v624, %v650
    %v660 = vadd.f32 %v626, %v650
    %v661 = vadd.f32 %v630, %v654
    %v662 = vadd.f32 %v632, %v654
    %v663 = vld [vmem:[#allocation17] sm:$0x1]
    %v664 = vld [vmem:[#allocation17 + $0x8] sm:$0x1]
    %v665 = vld [vmem:[#allocation17 + $0x10] sm:$0x1]
    %v666 = vld [vmem:[#allocation17 + $0x18] sm:$0x1]
    %v667 = vlaneseq
    %v668 = vshrl.u32 %v667, 7
    %v669 = vsub.s32 0, %v668
    %v670 = vrot.slane %v663, %v669
    %v671 = vlaneseq
    %v672 = vshrl.u32 %v671, 7
    %v673 = vsub.s32 0, %v672
    %v674 = vrot.slane %v664, %v673
    %v675 = vlaneseq
    %v676 = vshrl.u32 %v675, 7
    %v677 = vsub.s32 0, %v676
    %v678 = vrot.slane %v665, %v677
    %v679 = vlaneseq
    %v680 = vshrl.u32 %v679, 7
    %v681 = vsub.s32 0, %v680
    %v682 = vrot.slane %v666, %v681
    %v683 = vadd.f32 %v371, %v670
    %v684 = vadd.f32 %v372, %v670
    %v685 = vadd.f32 %v550, %v674
    %v686 = vadd.f32 %v552, %v674
    %v687 = vadd.f32 %v556, %v678
    %v688 = vadd.f32 %v558, %v678
    %v689 = vadd.f32 %v562, %v682
    %v690 = vadd.f32 %v564, %v682
    %v691 = vld [vmem:[#allocation17 + $0x1] sm:$0x1]
    %v692 = vld [vmem:[#allocation17 + $0x9] sm:$0x1]
    %v693 = vld [vmem:[#allocation17 + $0x11] sm:$0x1]
    %v694 = vld [vmem:[#allocation17 + $0x19] sm:$0x1]
    %v695 = vlaneseq
    %v696 = vshrl.u32 %v695, 7
    %v697 = vsub.s32 0, %v696
    %v698 = vrot.slane %v691, %v697
    %v699 = vlaneseq
    %v700 = vshrl.u32 %v699, 7
    %v701 = vsub.s32 0, %v700
    %v702 = vrot.slane %v692, %v701
    %v703 = vlaneseq
    %v704 = vshrl.u32 %v703, 7
    %v705 = vsub.s32 0, %v704
    %v706 = vrot.slane %v693, %v705
    %v707 = vlaneseq
    %v708 = vshrl.u32 %v707, 7
    %v709 = vsub.s32 0, %v708
    %v710 = vrot.slane %v694, %v709
    %v711 = vadd.f32 %v371, %v698
    %v712 = vadd.f32 %v372, %v698
    %v713 = vadd.f32 %v550, %v702
    %v714 = vadd.f32 %v552, %v702
    %v715 = vadd.f32 %v556, %v706
    %v716 = vadd.f32 %v558, %v706
    %v717 = vadd.f32 %v562, %v710
    %v718 = vadd.f32 %v564, %v710
    %v719 = vld [vmem:[#allocation19] sm:$0xff]
    %v720 = vld [vmem:[#allocation19 + $0x8] sm:$0xff]
    %v721 = vld [vmem:[#allocation19 + $0x10] sm:$0xff]
    %v722 = vld [vmem:[#allocation19 + $0x18] sm:$0xff]
    %v723 = vld [vmem:[#allocation19 + $0x20] sm:$0xff]
    %v724 = vld [vmem:[#allocation19 + $0x28] sm:$0xff]
    %v725 = vld [vmem:[#allocation19 + $0x30] sm:$0xff]
    %v726 = vld [vmem:[#allocation19 + $0x38] sm:$0xff]
    %v727 = vld [vmem:[#allocation19 + $0x40] sm:$0xff]
    %v728 = vld [vmem:[#allocation19 + $0x48] sm:$0xff]
    %v729 = vld [vmem:[#allocation19 + $0x50] sm:$0xff]
    %v730 = vld [vmem:[#allocation19 + $0x58] sm:$0xff]
    %v731 = vld [vmem:[#allocation19 + $0x60] sm:$0xff]
    %v732 = vld [vmem:[#allocation19 + $0x68] sm:$0xff]
    %v733 = vld [vmem:[#allocation19 + $0x70] sm:$0xff]
    %v734 = vld [vmem:[#allocation19 + $0x78] sm:$0xff]
    %v735 = vld [vmem:[#allocation19 + $0x80] sm:$0xff]
    %v736 = vld [vmem:[#allocation19 + $0x88] sm:$0xff]
    %v737 = vld [vmem:[#allocation19 + $0x90] sm:$0xff]
    %v738 = vld [vmem:[#allocation19 + $0x98] sm:$0xff]
    %v739 = vld [vmem:[#allocation19 + $0xa0] sm:$0xff]
    %v740 = vld [vmem:[#allocation19 + $0xa8] sm:$0xff]
    %v741 = vld [vmem:[#allocation19 + $0xb0] sm:$0xff]
    %v742 = vld [vmem:[#allocation19 + $0xb8] sm:$0xff]
    %v743 = vld [vmem:[#allocation19 + $0xc0] sm:$0xff]
    %v744 = vld [vmem:[#allocation19 + $0xc8] sm:$0xff]
    %v745 = vld [vmem:[#allocation19 + $0xd0] sm:$0xff]
    %v746 = vld [vmem:[#allocation19 + $0xd8] sm:$0xff]
    %v747 = vld [vmem:[#allocation19 + $0xe0] sm:$0xff]
    %v748 = vld [vmem:[#allocation19 + $0xe8] sm:$0xff]
    %v749 = vld [vmem:[#allocation19 + $0xf0] sm:$0xff]
    %v750 = vld [vmem:[#allocation19 + $0xf8] sm:$0xff]
    %v751 = vld [vmem:[#allocation19 + $0x100] sm:$0xff]
    %v752 = vld [vmem:[#allocation19 + $0x108] sm:$0xff]
    %v753 = vld [vmem:[#allocation19 + $0x110] sm:$0xff]
    %v754 = vld [vmem:[#allocation19 + $0x118] sm:$0xff]
    %v755 = vld [vmem:[#allocation19 + $0x120] sm:$0xff]
    %v756 = vld [vmem:[#allocation19 + $0x128] sm:$0xff]
    %v757 = vld [vmem:[#allocation19 + $0x130] sm:$0xff]
    %v758 = vld [vmem:[#allocation19 + $0x138] sm:$0xff]
    %v759 = vld [vmem:[#allocation19 + $0x140] sm:$0xff]
    %v760 = vld [vmem:[#allocation19 + $0x148] sm:$0xff]
    %v761 = vld [vmem:[#allocation19 + $0x150] sm:$0xff]
    %v762 = vld [vmem:[#allocation19 + $0x158] sm:$0xff]
    %v763 = vld [vmem:[#allocation19 + $0x160] sm:$0xff]
    %v764 = vld [vmem:[#allocation19 + $0x168] sm:$0xff]
    %v765 = vld [vmem:[#allocation19 + $0x170] sm:$0xff]
    %v766 = vld [vmem:[#allocation19 + $0x178] sm:$0xff]
    %v767 = vld [vmem:[#allocation19 + $0x180] sm:$0xff]
    %v768 = vld [vmem:[#allocation19 + $0x188] sm:$0xff]
    %v769 = vld [vmem:[#allocation19 + $0x190] sm:$0xff]
    %v770 = vld [vmem:[#allocation19 + $0x198] sm:$0xff]
    %v771 = vld [vmem:[#allocation19 + $0x1a0] sm:$0xff]
    %v772 = vld [vmem:[#allocation19 + $0x1a8] sm:$0xff]
    %v773 = vld [vmem:[#allocation19 + $0x1b0] sm:$0xff]
    %v774 = vld [vmem:[#allocation19 + $0x1b8] sm:$0xff]
    %v775 = vld [vmem:[#allocation19 + $0x1c0] sm:$0xff]
    %v776 = vld [vmem:[#allocation19 + $0x1c8] sm:$0xff]
    %v777 = vld [vmem:[#allocation19 + $0x1d0] sm:$0xff]
    %v778 = vld [vmem:[#allocation19 + $0x1d8] sm:$0xff]
    %v779 = vld [vmem:[#allocation19 + $0x1e0] sm:$0xff]
    %v780 = vld [vmem:[#allocation19 + $0x1e8] sm:$0xff]
    %v781 = vld [vmem:[#allocation19 + $0x1f0] sm:$0xff]
    %v782 = vld [vmem:[#allocation19 + $0x1f8] sm:$0xff]
    %vm783 = vcmask 64512
    %v785 = vsel %vm783, %v711, 0
    %v788 = vsel %vm783, %v712, 0
    %v791 = vsel %vm783, %v719, 0
    %v794 = vsel %vm783, %v720, 0
    %v797 = vsel %vm783, %v721, 0
    %v800 = vsel %vm783, %v722, 0
    %v803 = vsel %vm783, %v723, 0
    %v806 = vsel %vm783, %v724, 0
    %v809 = vsel %vm783, %v725, 0
    %v812 = vsel %vm783, %v726, 0
    %v815 = vsel %vm783, %v727, 0
    %v818 = vsel %vm783, %v728, 0
    %v821 = vsel %vm783, %v729, 0
    %v824 = vsel %vm783, %v730, 0
    %v827 = vsel %vm783, %v731, 0
    %v830 = vsel %vm783, %v732, 0
    %v833 = vsel %vm783, %v733, 0
    %v836 = vsel %vm783, %v734, 0
    %838 = vmatprep.subr.mxu0 0.0
    %839 = vmatpush1.xpose.msra.mxu0 %v791
    %840 = vmatprep.subr.mxu0 0.0
    %841 = vmatpush1.xpose.msra.mxu0 %v794
    %842 = vmatprep.subr.mxu0 0.0
    %843 = vmatpush1.xpose.msra.mxu0 %v797
    %844 = vmatprep.subr.mxu0 0.0
    %845 = vmatpush1.xpose.msra.mxu0 %v800
    %846 = vmatprep.subr.mxu0 0.0
    %847 = vmatpush1.xpose.msra.mxu0 %v803
    %848 = vmatprep.subr.mxu0 0.0
    %849 = vmatpush1.xpose.msra.mxu0 %v806
    %850 = vmatprep.subr.mxu0 0.0
    %851 = vmatpush1.xpose.msra.mxu0 %v809
    %852 = vmatprep.subr.mxu0 0.0
    %853 = vmatpush1.xpose.msra.mxu0 %v812
    %854 = vmatprep.subr.mxu0 0.0
    %855 = vmatpush1.xpose.msra.mxu0 %v815
    %856 = vmatprep.subr.mxu0 0.0
    %857 = vmatpush1.xpose.msra.mxu0 %v818
    %858 = vmatprep.subr.mxu0 0.0
    %859 = vmatpush1.xpose.msra.mxu0 %v821
    %860 = vmatprep.subr.mxu0 0.0
    %861 = vmatpush1.xpose.msra.mxu0 %v824
    %862 = vmatprep.subr.mxu0 0.0
    %863 = vmatpush1.xpose.msra.mxu0 %v827
    %864 = vmatprep.subr.mxu0 0.0
    %865 = vmatpush1.xpose.msra.mxu0 %v830
    %866 = vmatprep.subr.mxu0 0.0
    %867 = vmatpush1.xpose.msra.mxu0 %v833
    %868 = vmatprep.subr.mxu0 0.0
    %869 = vmatpush1.xpose.msra.mxu0 %v836
    %870 = vmatprep.subr.mxu0 0.0
    %871 = vmatpush1.xpose.msra.mxu0 0.0
    %872 = vmatprep.subr.mxu0 0.0
    %873 = vmatpush1.xpose.msra.mxu0 0.0
    %874 = vmatprep.subr.mxu0 0.0
    %875 = vmatpush1.xpose.msra.mxu0 0.0
    %876 = vmatprep.subr.mxu0 0.0
    %877 = vmatpush1.xpose.msra.mxu0 0.0
    %878 = vmatprep.subr.mxu0 0.0
    %879 = vmatpush1.xpose.msra.mxu0 0.0
    %880 = vmatprep.subr.mxu0 0.0
    %881 = vmatpush1.xpose.msra.mxu0 0.0
    %882 = vmatprep.subr.mxu0 0.0
    %883 = vmatpush1.xpose.msra.mxu0 0.0
    %884 = vmatprep.subr.mxu0 0.0
    %885 = vmatpush1.xpose.msra.mxu0 0.0
    %886 = vmatprep.subr.mxu0 0.0
    %887 = vmatpush1.xpose.msra.mxu0 0.0
    %888 = vmatprep.subr.mxu0 0.0
    %889 = vmatpush1.xpose.msra.mxu0 0.0
    %890 = vmatprep.subr.mxu0 0.0
    %891 = vmatpush1.xpose.msra.mxu0 0.0
    %892 = vmatprep.subr.mxu0 0.0
    %893 = vmatpush1.xpose.msra.mxu0 0.0
    %894 = vmatprep.subr.mxu0 0.0
    %895 = vmatpush1.xpose.msra.mxu0 0.0
    %896 = vmatprep.subr.mxu0 0.0
    %897 = vmatpush1.xpose.msra.mxu0 0.0
    %898 = vmatprep.subr.mxu0 0.0
    %899 = vmatpush1.xpose.msra.mxu0 0.0
    %900 = vmatprep.subr.mxu0 0.0
    %901 = vmatpush1.xpose.msra.mxu0 0.0
    %902 = vmatprep.mubr.f32.mxu0 0.0
    %903 = vmatmul.mubr.f32.gmra.mrb[0].mxu0 %v785
    %v904 = vpop.f32.mrb[0].mxu0
    %v905 = vadd.f32 0.0, %v904
    %v906 = vpop.f32.mrb[0].mxu0
    %907 = vmatprep.mubr.f32.mxu0 0.0
    %908 = vmatmul.mubr.f32.gmra.mrb[0].mxu0 %v788
    %v909 = vpop.f32.mrb[0].mxu0
    %v910 = vadd.f32 0.0, %v909
    %v911 = vpop.f32.mrb[0].mxu0
    %912 = vdwg.mxu0
    %v914 = vsel %vm783, %v713, 0
    %v917 = vsel %vm783, %v714, 0
    %v920 = vsel %vm783, %v735, 0
    %v923 = vsel %vm783, %v736, 0
    %v926 = vsel %vm783, %v737, 0
    %v929 = vsel %vm783, %v738, 0
    %v932 = vsel %vm783, %v739, 0
    %v935 = vsel %vm783, %v740, 0
    %v938 = vsel %vm783, %v741, 0
    %v941 = vsel %vm783, %v742, 0
    %v944 = vsel %vm783, %v743, 0
    %v947 = vsel %vm783, %v744, 0
    %v950 = vsel %vm783, %v745, 0
    %v953 = vsel %vm783, %v746, 0
    %v956 = vsel %vm783, %v747, 0
    %v959 = vsel %vm783, %v748, 0
    %v962 = vsel %vm783, %v749, 0
    %v965 = vsel %vm783, %v750, 0
    %967 = vmatprep.subr.mxu0 0.0
    %968 = vmatpush1.xpose.msra.mxu0 %v920
    %969 = vmatprep.subr.mxu0 0.0
    %970 = vmatpush1.xpose.msra.mxu0 %v923
    %971 = vmatprep.subr.mxu0 0.0
    %972 = vmatpush1.xpose.msra.mxu0 %v926
    %973 = vmatprep.subr.mxu0 0.0
    %974 = vmatpush1.xpose.msra.mxu0 %v929
    %975 = vmatprep.subr.mxu0 0.0
    %976 = vmatpush1.xpose.msra.mxu0 %v932
    %977 = vmatprep.subr.mxu0 0.0
    %978 = vmatpush1.xpose.msra.mxu0 %v935
    %979 = vmatprep.subr.mxu0 0.0
    %980 = vmatpush1.xpose.msra.mxu0 %v938
    %981 = vmatprep.subr.mxu0 0.0
    %982 = vmatpush1.xpose.msra.mxu0 %v941
    %983 = vmatprep.subr.mxu0 0.0
    %984 = vmatpush1.xpose.msra.mxu0 %v944
    %985 = vmatprep.subr.mxu0 0.0
    %986 = vmatpush1.xpose.msra.mxu0 %v947
    %987 = vmatprep.subr.mxu0 0.0
    %988 = vmatpush1.xpose.msra.mxu0 %v950
    %989 = vmatprep.subr.mxu0 0.0
    %990 = vmatpush1.xpose.msra.mxu0 %v953
    %991 = vmatprep.subr.mxu0 0.0
    %992 = vmatpush1.xpose.msra.mxu0 %v956
    %993 = vmatprep.subr.mxu0 0.0
    %994 = vmatpush1.xpose.msra.mxu0 %v959
    %995 = vmatprep.subr.mxu0 0.0
    %996 = vmatpush1.xpose.msra.mxu0 %v962
    %997 = vmatprep.subr.mxu0 0.0
    %998 = vmatpush1.xpose.msra.mxu0 %v965
    %999 = vmatprep.subr.mxu0 0.0
    %1000 = vmatpush1.xpose.msra.mxu0 0.0
    %1001 = vmatprep.subr.mxu0 0.0
    %1002 = vmatpush1.xpose.msra.mxu0 0.0
    %1003 = vmatprep.subr.mxu0 0.0
    %1004 = vmatpush1.xpose.msra.mxu0 0.0
    %1005 = vmatprep.subr.mxu0 0.0
    %1006 = vmatpush1.xpose.msra.mxu0 0.0
    %1007 = vmatprep.subr.mxu0 0.0
    %1008 = vmatpush1.xpose.msra.mxu0 0.0
    %1009 = vmatprep.subr.mxu0 0.0
    %1010 = vmatpush1.xpose.msra.mxu0 0.0
    %1011 = vmatprep.subr.mxu0 0.0
    %1012 = vmatpush1.xpose.msra.mxu0 0.0
    %1013 = vmatprep.subr.mxu0 0.0
    %1014 = vmatpush1.xpose.msra.mxu0 0.0
    %1015 = vmatprep.subr.mxu0 0.0
    %1016 = vmatpush1.xpose.msra.mxu0 0.0
    %1017 = vmatprep.subr.mxu0 0.0
    %1018 = vmatpush1.xpose.msra.mxu0 0.0
    %1019 = vmatprep.subr.mxu0 0.0
    %1020 = vmatpush1.xpose.msra.mxu0 0.0
    %1021 = vmatprep.subr.mxu0 0.0
    %1022 = vmatpush1.xpose.msra.mxu0 0.0
    %1023 = vmatprep.subr.mxu0 0.0
    %1024 = vmatpush1.xpose.msra.mxu0 0.0
    %1025 = vmatprep.subr.mxu0 0.0
    %1026 = vmatpush1.xpose.msra.mxu0 0.0
    %1027 = vmatprep.subr.mxu0 0.0
    %1028 = vmatpush1.xpose.msra.mxu0 0.0
    %1029 = vmatprep.subr.mxu0 0.0
    %1030 = vmatpush1.xpose.msra.mxu0 0.0
    %1031 = vmatprep.mubr.f32.mxu0 0.0
    %1032 = vmatmul.mubr.f32.gmra.mrb[0].mxu0 %v914
    %v1033 = vpop.f32.mrb[0].mxu0
    %v1034 = vadd.f32 0.0, %v1033
    %v1035 = vpop.f32.mrb[0].mxu0
    %1036 = vmatprep.mubr.f32.mxu0 0.0
    %1037 = vmatmul.mubr.f32.gmra.mrb[0].mxu0 %v917
    %v1038 = vpop.f32.mrb[0].mxu0
    %v1039 = vadd.f32 0.0, %v1038
    %v1040 = vpop.f32.mrb[0].mxu0
    %1041 = vdwg.mxu0
    %v1043 = vsel %vm783, %v715, 0
    %v1046 = vsel %vm783, %v716, 0
    %v1049 = vsel %vm783, %v751, 0
    %v1052 = vsel %vm783, %v752, 0
    %v1055 = vsel %vm783, %v753, 0
    %v1058 = vsel %vm783, %v754, 0
    %v1061 = vsel %vm783, %v755, 0
    %v1064 = vsel %vm783, %v756, 0
    %v1067 = vsel %vm783, %v757, 0
    %v1070 = vsel %vm783, %v758, 0
    %v1073 = vsel %vm783, %v759, 0
    %v1076 = vsel %vm783, %v760, 0
    %v1079 = vsel %vm783, %v761, 0
    %v1082 = vsel %vm783, %v762, 0
    %v1085 = vsel %vm783, %v763, 0
    %v1088 = vsel %vm783, %v764, 0
    %v1091 = vsel %vm783, %v765, 0
    %v1094 = vsel %vm783, %v766, 0
    %1096 = vmatprep.subr.mxu0 0.0
    %1097 = vmatpush1.xpose.msra.mxu0 %v1049
    %1098 = vmatprep.subr.mxu0 0.0
    %1099 = vmatpush1.xpose.msra.mxu0 %v1052
    %1100 = vmatprep.subr.mxu0 0.0
    %1101 = vmatpush1.xpose.msra.mxu0 %v1055
    %1102 = vmatprep.subr.mxu0 0.0
    %1103 = vmatpush1.xpose.msra.mxu0 %v1058
    %1104 = vmatprep.subr.mxu0 0.0
    %1105 = vmatpush1.xpose.msra.mxu0 %v1061
    %1106 = vmatprep.subr.mxu0 0.0
    %1107 = vmatpush1.xpose.msra.mxu0 %v1064
    %1108 = vmatprep.subr.mxu0 0.0
    %1109 = vmatpush1.xpose.msra.mxu0 %v1067
    %1110 = vmatprep.subr.mxu0 0.0
    %1111 = vmatpush1.xpose.msra.mxu0 %v1070
    %1112 = vmatprep.subr.mxu0 0.0
    %1113 = vmatpush1.xpose.msra.mxu0 %v1073
    %1114 = vmatprep.subr.mxu0 0.0
    %1115 = vmatpush1.xpose.msra.mxu0 %v1076
    %1116 = vmatprep.subr.mxu0 0.0
    %1117 = vmatpush1.xpose.msra.mxu0 %v1079
    %1118 = vmatprep.subr.mxu0 0.0
    %1119 = vmatpush1.xpose.msra.mxu0 %v1082
    %1120 = vmatprep.subr.mxu0 0.0
    %1121 = vmatpush1.xpose.msra.mxu0 %v1085
    %1122 = vmatprep.subr.mxu0 0.0
    %1123 = vmatpush1.xpose.msra.mxu0 %v1088
    %1124 = vmatprep.subr.mxu0 0.0
    %1125 = vmatpush1.xpose.msra.mxu0 %v1091
    %1126 = vmatprep.subr.mxu0 0.0
    %1127 = vmatpush1.xpose.msra.mxu0 %v1094
    %1128 = vmatprep.subr.mxu0 0.0
    %1129 = vmatpush1.xpose.msra.mxu0 0.0
    %1130 = vmatprep.subr.mxu0 0.0
    %1131 = vmatpush1.xpose.msra.mxu0 0.0
    %1132 = vmatprep.subr.mxu0 0.0
    %1133 = vmatpush1.xpose.msra.mxu0 0.0
    %1134 = vmatprep.subr.mxu0 0.0
    %1135 = vmatpush1.xpose.msra.mxu0 0.0
    %1136 = vmatprep.subr.mxu0 0.0
    %1137 = vmatpush1.xpose.msra.mxu0 0.0
    %1138 = vmatprep.subr.mxu0 0.0
    %1139 = vmatpush1.xpose.msra.mxu0 0.0
    %1140 = vmatprep.subr.mxu0 0.0
    %1141 = vmatpush1.xpose.msra.mxu0 0.0
    %1142 = vmatprep.subr.mxu0 0.0
    %1143 = vmatpush1.xpose.msra.mxu0 0.0
    %1144 = vmatprep.subr.mxu0 0.0
    %1145 = vmatpush1.xpose.msra.mxu0 0.0
    %1146 = vmatprep.subr.mxu0 0.0
    %1147 = vmatpush1.xpose.msra.mxu0 0.0
    %1148 = vmatprep.subr.mxu0 0.0
    %1149 = vmatpush1.xpose.msra.mxu0 0.0
    %1150 = vmatprep.subr.mxu0 0.0
    %1151 = vmatpush1.xpose.msra.mxu0 0.0
    %1152 = vmatprep.subr.mxu0 0.0
    %1153 = vmatpush1.xpose.msra.mxu0 0.0
    %1154 = vmatprep.subr.mxu0 0.0
    %1155 = vmatpush1.xpose.msra.mxu0 0.0
    %1156 = vmatprep.subr.mxu0 0.0
    %1157 = vmatpush1.xpose.msra.mxu0 0.0
    %1158 = vmatprep.subr.mxu0 0.0
    %1159 = vmatpush1.xpose.msra.mxu0 0.0
    %1160 = vmatprep.mubr.f32.mxu0 0.0
    %1161 = vmatmul.mubr.f32.gmra.mrb[0].mxu0 %v1043
    %v1162 = vpop.f32.mrb[0].mxu0
    %v1163 = vadd.f32 0.0, %v1162
    %v1164 = vpop.f32.mrb[0].mxu0
    %1165 = vmatprep.mubr.f32.mxu0 0.0
    %1166 = vmatmul.mubr.f32.gmra.mrb[0].mxu0 %v1046
    %v1167 = vpop.f32.mrb[0].mxu0
    %v1168 = vadd.f32 0.0, %v1167
    %v1169 = vpop.f32.mrb[0].mxu0
    %1170 = vdwg.mxu0
    %v1172 = vsel %vm783, %v717, 0
    %v1175 = vsel %vm783, %v718, 0
    %v1178 = vsel %vm783, %v767, 0
    %v1181 = vsel %vm783, %v768, 0
    %v1184 = vsel %vm783, %v769, 0
    %v1187 = vsel %vm783, %v770, 0
    %v1190 = vsel %vm783, %v771, 0
    %v1193 = vsel %vm783, %v772, 0
    %v1196 = vsel %vm783, %v773, 0
    %v1199 = vsel %vm783, %v774, 0
    %v1202 = vsel %vm783, %v775, 0
    %v1205 = vsel %vm783, %v776, 0
    %v1208 = vsel %vm783, %v777, 0
    %v1211 = vsel %vm783, %v778, 0
    %v1214 = vsel %vm783, %v779, 0
    %v1217 = vsel %vm783, %v780, 0
    %v1220 = vsel %vm783, %v781, 0
    %v1223 = vsel %vm783, %v782, 0
    %1225 = vmatprep.subr.mxu0 0.0
    %1226 = vmatpush1.xpose.msra.mxu0 %v1178
    %1227 = vmatprep.subr.mxu0 0.0
    %1228 = vmatpush1.xpose.msra.mxu0 %v1181
    %1229 = vmatprep.subr.mxu0 0.0
    %1230 = vmatpush1.xpose.msra.mxu0 %v1184
    %1231 = vmatprep.subr.mxu0 0.0
    %1232 = vmatpush1.xpose.msra.mxu0 %v1187
    %1233 = vmatprep.subr.mxu0 0.0
    %1234 = vmatpush1.xpose.msra.mxu0 %v1190
    %1235 = vmatprep.subr.mxu0 0.0
    %1236 = vmatpush1.xpose.msra.mxu0 %v1193
    %1237 = vmatprep.subr.mxu0 0.0
    %1238 = vmatpush1.xpose.msra.mxu0 %v1196
    %1239 = vmatprep.subr.mxu0 0.0
    %1240 = vmatpush1.xpose.msra.mxu0 %v1199
    %1241 = vmatprep.subr.mxu0 0.0
    %1242 = vmatpush1.xpose.msra.mxu0 %v1202
    %1243 = vmatprep.subr.mxu0 0.0
    %1244 = vmatpush1.xpose.msra.mxu0 %v1205
    %1245 = vmatprep.subr.mxu0 0.0
    %1246 = vmatpush1.xpose.msra.mxu0 %v1208
    %1247 = vmatprep.subr.mxu0 0.0
    %1248 = vmatpush1.xpose.msra.mxu0 %v1211
    %1249 = vmatprep.subr.mxu0 0.0
    %1250 = vmatpush1.xpose.msra.mxu0 %v1214
    %1251 = vmatprep.subr.mxu0 0.0
    %1252 = vmatpush1.xpose.msra.mxu0 %v1217
    %1253 = vmatprep.subr.mxu0 0.0
    %1254 = vmatpush1.xpose.msra.mxu0 %v1220
    %1255 = vmatprep.subr.mxu0 0.0
    %1256 = vmatpush1.xpose.msra.mxu0 %v1223
    %1257 = vmatprep.subr.mxu0 0.0
    %1258 = vmatpush1.xpose.msra.mxu0 0.0
    %1259 = vmatprep.subr.mxu0 0.0
    %1260 = vmatpush1.xpose.msra.mxu0 0.0
    %1261 = vmatprep.subr.mxu0 0.0
    %1262 = vmatpush1.xpose.msra.mxu0 0.0
    %1263 = vmatprep.subr.mxu0 0.0
    %1264 = vmatpush1.xpose.msra.mxu0 0.0
    %1265 = vmatprep.subr.mxu0 0.0
    %1266 = vmatpush1.xpose.msra.mxu0 0.0
    %1267 = vmatprep.subr.mxu0 0.0
    %1268 = vmatpush1.xpose.msra.mxu0 0.0
    %1269 = vmatprep.subr.mxu0 0.0
    %1270 = vmatpush1.xpose.msra.mxu0 0.0
    %1271 = vmatprep.subr.mxu0 0.0
    %1272 = vmatpush1.xpose.msra.mxu0 0.0
    %1273 = vmatprep.subr.mxu0 0.0
    %1274 = vmatpush1.xpose.msra.mxu0 0.0
    %1275 = vmatprep.subr.mxu0 0.0
    %1276 = vmatpush1.xpose.msra.mxu0 0.0
    %1277 = vmatprep.subr.mxu0 0.0
    %1278 = vmatpush1.xpose.msra.mxu0 0.0
    %1279 = vmatprep.subr.mxu0 0.0
    %1280 = vmatpush1.xpose.msra.mxu0 0.0
    %1281 = vmatprep.subr.mxu0 0.0
    %1282 = vmatpush1.xpose.msra.mxu0 0.0
    %1283 = vmatprep.subr.mxu0 0.0
    %1284 = vmatpush1.xpose.msra.mxu0 0.0
    %1285 = vmatprep.subr.mxu0 0.0
    %1286 = vmatpush1.xpose.msra.mxu0 0.0
    %1287 = vmatprep.subr.mxu0 0.0
    %1288 = vmatpush1.xpose.msra.mxu0 0.0
    %1289 = vmatprep.mubr.f32.mxu0 0.0
    %1290 = vmatmul.mubr.f32.gmra.mrb[0].mxu0 %v1172
    %v1291 = vpop.f32.mrb[0].mxu0
    %v1292 = vadd.f32 0.0, %v1291
    %v1293 = vpop.f32.mrb[0].mxu0
    %1294 = vmatprep.mubr.f32.mxu0 0.0
    %1295 = vmatmul.mubr.f32.gmra.mrb[0].mxu0 %v1175
    %v1296 = vpop.f32.mrb[0].mxu0
    %v1297 = vadd.f32 0.0, %v1296
    %v1298 = vpop.f32.mrb[0].mxu0
    %1299 = vdwg.mxu0
    %v1300 = vld [vmem:[#allocation17 + $0x2] sm:$0x1]
    %v1301 = vld [vmem:[#allocation17 + $0xa] sm:$0x1]
    %v1302 = vld [vmem:[#allocation17 + $0x12] sm:$0x1]
    %v1303 = vld [vmem:[#allocation17 + $0x1a] sm:$0x1]
    %v1304 = vlaneseq
    %v1305 = vshrl.u32 %v1304, 7
    %v1306 = vsub.s32 0, %v1305
    %v1307 = vrot.slane %v1300, %v1306
    %v1308 = vlaneseq
    %v1309 = vshrl.u32 %v1308, 7
    %v1310 = vsub.s32 0, %v1309
    %v1311 = vrot.slane %v1301, %v1310
    %v1312 = vlaneseq
    %v1313 = vshrl.u32 %v1312, 7
    %v1314 = vsub.s32 0, %v1313
    %v1315 = vrot.slane %v1302, %v1314
    %v1316 = vlaneseq
    %v1317 = vshrl.u32 %v1316, 7
    %v1318 = vsub.s32 0, %v1317
    %v1319 = vrot.slane %v1303, %v1318
    %v1320 = vadd.f32 %v371, %v1307
    %v1321 = vadd.f32 %v372, %v1307
    %v1322 = vadd.f32 %v550, %v1311
    %v1323 = vadd.f32 %v552, %v1311
    %v1324 = vadd.f32 %v556, %v1315
    %v1325 = vadd.f32 %v558, %v1315
    %v1326 = vadd.f32 %v562, %v1319
    %v1327 = vadd.f32 %v564, %v1319
    %v1328 = vld [vmem:[#allocation20] sm:$0x3]
    %v1329 = vld [vmem:[#allocation20 + $0x2] sm:$0x3]
    %v1330 = vld [vmem:[#allocation20 + $0x4] sm:$0x3]
    %v1331 = vld [vmem:[#allocation20 + $0x6] sm:$0x3]
    %v1333 = vsel %vm783, %v1320, 0
    %v1336 = vsel %vm783, %v1321, 0
    %v1339 = vsel %vm783, %v1328, 0
    %1341 = vmatprep.subr.mxu0 0.0
    %1342 = vmatpush1.xpose.msra.mxu0 %v1339
    %1343 = vmatprep.subr.mxu0 0.0
    %1344 = vmatpush1.xpose.msra.mxu0 0.0
    %1345 = vmatprep.subr.mxu0 0.0
    %1346 = vmatpush1.xpose.msra.mxu0 0.0
    %1347 = vmatprep.subr.mxu0 0.0
    %1348 = vmatpush1.xpose.msra.mxu0 0.0
    %1349 = vmatprep.subr.mxu0 0.0
    %1350 = vmatpush1.xpose.msra.mxu0 0.0
    %1351 = vmatprep.subr.mxu0 0.0
    %1352 = vmatpush1.xpose.msra.mxu0 0.0
    %1353 = vmatprep.subr.mxu0 0.0
    %1354 = vmatpush1.xpose.msra.mxu0 0.0
    %1355 = vmatprep.subr.mxu0 0.0
    %1356 = vmatpush1.xpose.msra.mxu0 0.0
    %1357 = vmatprep.subr.mxu0 0.0
    %1358 = vmatpush1.xpose.msra.mxu0 0.0
    %1359 = vmatprep.subr.mxu0 0.0
    %1360 = vmatpush1.xpose.msra.mxu0 0.0
    %1361 = vmatprep.subr.mxu0 0.0
    %1362 = vmatpush1.xpose.msra.mxu0 0.0
    %1363 = vmatprep.subr.mxu0 0.0
    %1364 = vmatpush1.xpose.msra.mxu0 0.0
    %1365 = vmatprep.subr.mxu0 0.0
    %1366 = vmatpush1.xpose.msra.mxu0 0.0
    %1367 = vmatprep.subr.mxu0 0.0
    %1368 = vmatpush1.xpose.msra.mxu0 0.0
    %1369 = vmatprep.subr.mxu0 0.0
    %1370 = vmatpush1.xpose.msra.mxu0 0.0
    %1371 = vmatprep.subr.mxu0 0.0
    %1372 = vmatpush1.xpose.msra.mxu0 0.0
    %1373 = vmatprep.subr.mxu0 0.0
    %1374 = vmatpush1.xpose.msra.mxu0 0.0
    %1375 = vmatprep.subr.mxu0 0.0
    %1376 = vmatpush1.xpose.msra.mxu0 0.0
    %1377 = vmatprep.subr.mxu0 0.0
    %1378 = vmatpush1.xpose.msra.mxu0 0.0
    %1379 = vmatprep.subr.mxu0 0.0
    %1380 = vmatpush1.xpose.msra.mxu0 0.0
    %1381 = vmatprep.subr.mxu0 0.0
    %1382 = vmatpush1.xpose.msra.mxu0 0.0
    %1383 = vmatprep.subr.mxu0 0.0
    %1384 = vmatpush1.xpose.msra.mxu0 0.0
    %1385 = vmatprep.subr.mxu0 0.0
    %1386 = vmatpush1.xpose.msra.mxu0 0.0
    %1387 = vmatprep.subr.mxu0 0.0
    %1388 = vmatpush1.xpose.msra.mxu0 0.0
    %1389 = vmatprep.subr.mxu0 0.0
    %1390 = vmatpush1.xpose.msra.mxu0 0.0
    %1391 = vmatprep.subr.mxu0 0.0
    %1392 = vmatpush1.xpose.msra.mxu0 0.0
    %1393 = vmatprep.subr.mxu0 0.0
    %1394 = vmatpush1.xpose.msra.mxu0 0.0
    %1395 = vmatprep.subr.mxu0 0.0
    %1396 = vmatpush1.xpose.msra.mxu0 0.0
    %1397 = vmatprep.subr.mxu0 0.0
    %1398 = vmatpush1.xpose.msra.mxu0 0.0
    %1399 = vmatprep.subr.mxu0 0.0
    %1400 = vmatpush1.xpose.msra.mxu0 0.0
    %1401 = vmatprep.subr.mxu0 0.0
    %1402 = vmatpush1.xpose.msra.mxu0 0.0
    %1403 = vmatprep.subr.mxu0 0.0
    %1404 = vmatpush1.xpose.msra.mxu0 0.0
    %1405 = vmatprep.mubr.f32.mxu0 0.0
    %1406 = vmatmul.mubr.f32.gmra.mrb[0].mxu0 %v1333
    %v1407 = vpop.f32.mrb[0].mxu0
    %v1408 = vadd.f32 0.0, %v1407
    %v1409 = vpop.f32.mrb[0].mxu0
    %1410 = vmatprep.mubr.f32.mxu0 0.0
    %1411 = vmatmul.mubr.f32.gmra.mrb[0].mxu0 %v1336
    %v1412 = vpop.f32.mrb[0].mxu0
    %v1413 = vadd.f32 0.0, %v1412
    %v1414 = vpop.f32.mrb[0].mxu0
    %1415 = vdwg.mxu0
    %v1417 = vsel %vm783, %v1322, 0
    %v1420 = vsel %vm783, %v1323, 0
    %v1423 = vsel %vm783, %v1329, 0
    %1425 = vmatprep.subr.mxu0 0.0
    %1426 = vmatpush1.xpose.msra.mxu0 %v1423
    %1427 = vmatprep.subr.mxu0 0.0
    %1428 = vmatpush1.xpose.msra.mxu0 0.0
    %1429 = vmatprep.subr.mxu0 0.0
    %1430 = vmatpush1.xpose.msra.mxu0 0.0
    %1431 = vmatprep.subr.mxu0 0.0
    %1432 = vmatpush1.xpose.msra.mxu0 0.0
    %1433 = vmatprep.subr.mxu0 0.0
    %1434 = vmatpush1.xpose.msra.mxu0 0.0
    %1435 = vmatprep.subr.mxu0 0.0
    %1436 = vmatpush1.xpose.msra.mxu0 0.0
    %1437 = vmatprep.subr.mxu0 0.0
    %1438 = vmatpush1.xpose.msra.mxu0 0.0
    %1439 = vmatprep.subr.mxu0 0.0
    %1440 = vmatpush1.xpose.msra.mxu0 0.0
    %1441 = vmatprep.subr.mxu0 0.0
    %1442 = vmatpush1.xpose.msra.mxu0 0.0
    %1443 = vmatprep.subr.mxu0 0.0
    %1444 = vmatpush1.xpose.msra.mxu0 0.0
    %1445 = vmatprep.subr.mxu0 0.0
    %1446 = vmatpush1.xpose.msra.mxu0 0.0
    %1447 = vmatprep.subr.mxu0 0.0
    %1448 = vmatpush1.xpose.msra.mxu0 0.0
    %1449 = vmatprep.subr.mxu0 0.0
    %1450 = vmatpush1.xpose.msra.mxu0 0.0
    %1451 = vmatprep.subr.mxu0 0.0
    %1452 = vmatpush1.xpose.msra.mxu0 0.0
    %1453 = vmatprep.subr.mxu0 0.0
    %1454 = vmatpush1.xpose.msra.mxu0 0.0
    %1455 = vmatprep.subr.mxu0 0.0
    %1456 = vmatpush1.xpose.msra.mxu0 0.0
    %1457 = vmatprep.subr.mxu0 0.0
    %1458 = vmatpush1.xpose.msra.mxu0 0.0
    %1459 = vmatprep.subr.mxu0 0.0
    %1460 = vmatpush1.xpose.msra.mxu0 0.0
    %1461 = vmatprep.subr.mxu0 0.0
    %1462 = vmatpush1.xpose.msra.mxu0 0.0
    %1463 = vmatprep.subr.mxu0 0.0
    %1464 = vmatpush1.xpose.msra.mxu0 0.0
    %1465 = vmatprep.subr.mxu0 0.0
    %1466 = vmatpush1.xpose.msra.mxu0 0.0
    %1467 = vmatprep.subr.mxu0 0.0
    %1468 = vmatpush1.xpose.msra.mxu0 0.0
    %1469 = vmatprep.subr.mxu0 0.0
    %1470 = vmatpush1.xpose.msra.mxu0 0.0
    %1471 = vmatprep.subr.mxu0 0.0
    %1472 = vmatpush1.xpose.msra.mxu0 0.0
    %1473 = vmatprep.subr.mxu0 0.0
    %1474 = vmatpush1.xpose.msra.mxu0 0.0
    %1475 = vmatprep.subr.mxu0 0.0
    %1476 = vmatpush1.xpose.msra.mxu0 0.0
    %1477 = vmatprep.subr.mxu0 0.0
    %1478 = vmatpush1.xpose.msra.mxu0 0.0
    %1479 = vmatprep.subr.mxu0 0.0
    %1480 = vmatpush1.xpose.msra.mxu0 0.0
    %1481 = vmatprep.subr.mxu0 0.0
    %1482 = vmatpush1.xpose.msra.mxu0 0.0
    %1483 = vmatprep.subr.mxu0 0.0
    %1484 = vmatpush1.xpose.msra.mxu0 0.0
    %1485 = vmatprep.subr.mxu0 0.0
    %1486 = vmatpush1.xpose.msra.mxu0 0.0
    %1487 = vmatprep.subr.mxu0 0.0
    %1488 = vmatpush1.xpose.msra.mxu0 0.0
    %1489 = vmatprep.mubr.f32.mxu0 0.0
    %1490 = vmatmul.mubr.f32.gmra.mrb[0].mxu0 %v1417
    %v1491 = vpop.f32.mrb[0].mxu0
    %v1492 = vadd.f32 0.0, %v1491
    %v1493 = vpop.f32.mrb[0].mxu0
    %1494 = vmatprep.mubr.f32.mxu0 0.0
    %1495 = vmatmul.mubr.f32.gmra.mrb[0].mxu0 %v1420
    %v1496 = vpop.f32.mrb[0].mxu0
    %v1497 = vadd.f32 0.0, %v1496
    %v1498 = vpop.f32.mrb[0].mxu0
    %1499 = vdwg.mxu0
    %v1501 = vsel %vm783, %v1324, 0
    %v1504 = vsel %vm783, %v1325, 0
    %v1507 = vsel %vm783, %v1330, 0
    %1509 = vmatprep.subr.mxu0 0.0
    %1510 = vmatpush1.xpose.msra.mxu0 %v1507
    %1511 = vmatprep.subr.mxu0 0.0
    %1512 = vmatpush1.xpose.msra.mxu0 0.0
    %1513 = vmatprep.subr.mxu0 0.0
    %1514 = vmatpush1.xpose.msra.mxu0 0.0
    %1515 = vmatprep.subr.mxu0 0.0
    %1516 = vmatpush1.xpose.msra.mxu0 0.0
    %1517 = vmatprep.subr.mxu0 0.0
    %1518 = vmatpush1.xpose.msra.mxu0 0.0
    %1519 = vmatprep.subr.mxu0 0.0
    %1520 = vmatpush1.xpose.msra.mxu0 0.0
    %1521 = vmatprep.subr.mxu0 0.0
    %1522 = vmatpush1.xpose.msra.mxu0 0.0
    %1523 = vmatprep.subr.mxu0 0.0
    %1524 = vmatpush1.xpose.msra.mxu0 0.0
    %1525 = vmatprep.subr.mxu0 0.0
    %1526 = vmatpush1.xpose.msra.mxu0 0.0
    %1527 = vmatprep.subr.mxu0 0.0
    %1528 = vmatpush1.xpose.msra.mxu0 0.0
    %1529 = vmatprep.subr.mxu0 0.0
    %1530 = vmatpush1.xpose.msra.mxu0 0.0
    %1531 = vmatprep.subr.mxu0 0.0
    %1532 = vmatpush1.xpose.msra.mxu0 0.0
    %1533 = vmatprep.subr.mxu0 0.0
    %1534 = vmatpush1.xpose.msra.mxu0 0.0
    %1535 = vmatprep.subr.mxu0 0.0
    %1536 = vmatpush1.xpose.msra.mxu0 0.0
    %1537 = vmatprep.subr.mxu0 0.0
    %1538 = vmatpush1.xpose.msra.mxu0 0.0
    %1539 = vmatprep.subr.mxu0 0.0
    %1540 = vmatpush1.xpose.msra.mxu0 0.0
    %1541 = vmatprep.subr.mxu0 0.0
    %1542 = vmatpush1.xpose.msra.mxu0 0.0
    %1543 = vmatprep.subr.mxu0 0.0
    %1544 = vmatpush1.xpose.msra.mxu0 0.0
    %1545 = vmatprep.subr.mxu0 0.0
    %1546 = vmatpush1.xpose.msra.mxu0 0.0
    %1547 = vmatprep.subr.mxu0 0.0
    %1548 = vmatpush1.xpose.msra.mxu0 0.0
    %1549 = vmatprep.subr.mxu0 0.0
    %1550 = vmatpush1.xpose.msra.mxu0 0.0
    %1551 = vmatprep.subr.mxu0 0.0
    %1552 = vmatpush1.xpose.msra.mxu0 0.0
    %1553 = vmatprep.subr.mxu0 0.0
    %1554 = vmatpush1.xpose.msra.mxu0 0.0
    %1555 = vmatprep.subr.mxu0 0.0
    %1556 = vmatpush1.xpose.msra.mxu0 0.0
    %1557 = vmatprep.subr.mxu0 0.0
    %1558 = vmatpush1.xpose.msra.mxu0 0.0
    %1559 = vmatprep.subr.mxu0 0.0
    %1560 = vmatpush1.xpose.msra.mxu0 0.0
    %1561 = vmatprep.subr.mxu0 0.0
    %1562 = vmatpush1.xpose.msra.mxu0 0.0
    %1563 = vmatprep.subr.mxu0 0.0
    %1564 = vmatpush1.xpose.msra.mxu0 0.0
    %1565 = vmatprep.subr.mxu0 0.0
    %1566 = vmatpush1.xpose.msra.mxu0 0.0
    %1567 = vmatprep.subr.mxu0 0.0
    %1568 = vmatpush1.xpose.msra.mxu0 0.0
    %1569 = vmatprep.subr.mxu0 0.0
    %1570 = vmatpush1.xpose.msra.mxu0 0.0
    %1571 = vmatprep.subr.mxu0 0.0
    %1572 = vmatpush1.xpose.msra.mxu0 0.0
    %1573 = vmatprep.mubr.f32.mxu0 0.0
    %1574 = vmatmul.mubr.f32.gmra.mrb[0].mxu0 %v1501
    %v1575 = vpop.f32.mrb[0].mxu0
    %v1576 = vadd.f32 0.0, %v1575
    %v1577 = vpop.f32.mrb[0].mxu0
    %1578 = vmatprep.mubr.f32.mxu0 0.0
    %1579 = vmatmul.mubr.f32.gmra.mrb[0].mxu0 %v1504
    %v1580 = vpop.f32.mrb[0].mxu0
    %v1581 = vadd.f32 0.0, %v1580
    %v1582 = vpop.f32.mrb[0].mxu0
    %1583 = vdwg.mxu0
    %v1585 = vsel %vm783, %v1326, 0
    %v1588 = vsel %vm783, %v1327, 0
    %v1591 = vsel %vm783, %v1331, 0
    %1593 = vmatprep.subr.mxu0 0.0
    %1594 = vmatpush1.xpose.msra.mxu0 %v1591
    %1595 = vmatprep.subr.mxu0 0.0
    %1596 = vmatpush1.xpose.msra.mxu0 0.0
    %1597 = vmatprep.subr.mxu0 0.0
    %1598 = vmatpush1.xpose.msra.mxu0 0.0
    %1599 = vmatprep.subr.mxu0 0.0
    %1600 = vmatpush1.xpose.msra.mxu0 0.0
    %1601 = vmatprep.subr.mxu0 0.0
    %1602 = vmatpush1.xpose.msra.mxu0 0.0
    %1603 = vmatprep.subr.mxu0 0.0
    %1604 = vmatpush1.xpose.msra.mxu0 0.0
    %1605 = vmatprep.subr.mxu0 0.0
    %1606 = vmatpush1.xpose.msra.mxu0 0.0
    %1607 = vmatprep.subr.mxu0 0.0
    %1608 = vmatpush1.xpose.msra.mxu0 0.0
    %1609 = vmatprep.subr.mxu0 0.0
    %1610 = vmatpush1.xpose.msra.mxu0 0.0
    %1611 = vmatprep.subr.mxu0 0.0
    %1612 = vmatpush1.xpose.msra.mxu0 0.0
    %1613 = vmatprep.subr.mxu0 0.0
    %1614 = vmatpush1.xpose.msra.mxu0 0.0
    %1615 = vmatprep.subr.mxu0 0.0
    %1616 = vmatpush1.xpose.msra.mxu0 0.0
    %1617 = vmatprep.subr.mxu0 0.0
    %1618 = vmatpush1.xpose.msra.mxu0 0.0
    %1619 = vmatprep.subr.mxu0 0.0
    %1620 = vmatpush1.xpose.msra.mxu0 0.0
    %1621 = vmatprep.subr.mxu0 0.0
    %1622 = vmatpush1.xpose.msra.mxu0 0.0
    %1623 = vmatprep.subr.mxu0 0.0
    %1624 = vmatpush1.xpose.msra.mxu0 0.0
    %1625 = vmatprep.subr.mxu0 0.0
    %1626 = vmatpush1.xpose.msra.mxu0 0.0
    %1627 = vmatprep.subr.mxu0 0.0
    %1628 = vmatpush1.xpose.msra.mxu0 0.0
    %1629 = vmatprep.subr.mxu0 0.0
    %1630 = vmatpush1.xpose.msra.mxu0 0.0
    %1631 = vmatprep.subr.mxu0 0.0
    %1632 = vmatpush1.xpose.msra.mxu0 0.0
    %1633 = vmatprep.subr.mxu0 0.0
    %1634 = vmatpush1.xpose.msra.mxu0 0.0
    %1635 = vmatprep.subr.mxu0 0.0
    %1636 = vmatpush1.xpose.msra.mxu0 0.0
    %1637 = vmatprep.subr.mxu0 0.0
    %1638 = vmatpush1.xpose.msra.mxu0 0.0
    %1639 = vmatprep.subr.mxu0 0.0
    %1640 = vmatpush1.xpose.msra.mxu0 0.0
    %1641 = vmatprep.subr.mxu0 0.0
    %1642 = vmatpush1.xpose.msra.mxu0 0.0
    %1643 = vmatprep.subr.mxu0 0.0
    %1644 = vmatpush1.xpose.msra.mxu0 0.0
    %1645 = vmatprep.subr.mxu0 0.0
    %1646 = vmatpush1.xpose.msra.mxu0 0.0
    %1647 = vmatprep.subr.mxu0 0.0
    %1648 = vmatpush1.xpose.msra.mxu0 0.0
    %1649 = vmatprep.subr.mxu0 0.0
    %1650 = vmatpush1.xpose.msra.mxu0 0.0
    %1651 = vmatprep.subr.mxu0 0.0
    %1652 = vmatpush1.xpose.msra.mxu0 0.0
    %1653 = vmatprep.subr.mxu0 0.0
    %1654 = vmatpush1.xpose.msra.mxu0 0.0
    %1655 = vmatprep.subr.mxu0 0.0
    %1656 = vmatpush1.xpose.msra.mxu0 0.0
    %1657 = vmatprep.mubr.f32.mxu0 0.0
    %1658 = vmatmul.mubr.f32.gmra.mrb[0].mxu0 %v1585
    %v1659 = vpop.f32.mrb[0].mxu0
    %v1660 = vadd.f32 0.0, %v1659
    %v1661 = vpop.f32.mrb[0].mxu0
    %1662 = vmatprep.mubr.f32.mxu0 0.0
    %1663 = vmatmul.mubr.f32.gmra.mrb[0].mxu0 %v1588
    %v1664 = vpop.f32.mrb[0].mxu0
    %v1665 = vadd.f32 0.0, %v1664
    %v1666 = vpop.f32.mrb[0].mxu0
    %1667 = vdwg.mxu0
    %s1669 = sor.u32 256, 120
    %1670 = vrot.lane.b32.xlu0 %v905, %s1669
    %v1671 = vpop.permute.xlu0 %1670
    %s1673 = sor.u32 256, 120
    %1674 = vrot.lane.b32.xlu0 %v1034, %s1673
    %v1675 = vpop.permute.xlu0 %1674
    %s1677 = sor.u32 256, 120
    %1678 = vrot.lane.b32.xlu0 %v1163, %s1677
    %v1679 = vpop.permute.xlu0 %1678
    %s1681 = sor.u32 256, 120
    %1682 = vrot.lane.b32.xlu0 %v1292, %s1681
    %v1683 = vpop.permute.xlu0 %1682
    %s1685 = sor.u32 256, 120
    %1686 = vrot.lane.b32.xlu0 %v910, %s1685
    %v1687 = vpop.permute.xlu0 %1686
    %s1689 = sor.u32 256, 120
    %1690 = vrot.lane.b32.xlu0 %v1039, %s1689
    %v1691 = vpop.permute.xlu0 %1690
    %s1693 = sor.u32 256, 120
    %1694 = vrot.lane.b32.xlu0 %v1168, %s1693
    %v1695 = vpop.permute.xlu0 %1694
    %s1697 = sor.u32 256, 120
    %1698 = vrot.lane.b32.xlu0 %v1297, %s1697
    %v1699 = vpop.permute.xlu0 %1698
    %1708 = vrot.lane.b32.xlu0 %v1671, 8
    %v1709 = vpop.permute.xlu0 %1708
    %1710 = vrot.lane.b32.xlu0 %v1687, 8
    %v1711 = vpop.permute.xlu0 %1710
    %1712 = vrot.lane.b32.xlu0 %v1675, 8
    %v1713 = vpop.permute.xlu0 %1712
    %1714 = vrot.lane.b32.xlu0 %v1691, 8
    %v1715 = vpop.permute.xlu0 %1714
    %1716 = vrot.lane.b32.xlu0 %v1679, 8
    %v1717 = vpop.permute.xlu0 %1716
    %1718 = vrot.lane.b32.xlu0 %v1695, 8
    %v1719 = vpop.permute.xlu0 %1718
    %1720 = vrot.lane.b32.xlu0 %v1683, 8
    %v1721 = vpop.permute.xlu0 %1720
    %1722 = vrot.lane.b32.xlu0 %v1699, 8
    %v1723 = vpop.permute.xlu0 %1722
    %v1732 = vsel %vm783, %v1671, %v1709
    %v1733 = vsel %vm783, %v1687, %v1711
    %v1734 = vsel %vm783, %v1675, %v1713
    %v1735 = vsel %vm783, %v1691, %v1715
    %v1736 = vsel %vm783, %v1679, %v1717
    %v1737 = vsel %vm783, %v1695, %v1719
    %v1738 = vsel %vm783, %v1683, %v1721
    %v1739 = vsel %vm783, %v1699, %v1723
    %v1740 = vld [vmem:[#allocation8] sm:$0xff]
    %v1741 = vld [vmem:[#allocation8 + $0x8] sm:$0xff]
    %1750 = vrot.lane.b32.xlu0 %v1408, 1
    %v1751 = vpop.permute.xlu0 %1750
    %1752 = vrot.lane.b32.xlu0 %v1413, 1
    %v1753 = vpop.permute.xlu0 %1752
    %1754 = vrot.lane.b32.xlu0 %v1492, 1
    %v1755 = vpop.permute.xlu0 %1754
    %1756 = vrot.lane.b32.xlu0 %v1497, 1
    %v1757 = vpop.permute.xlu0 %1756
    %1758 = vrot.lane.b32.xlu0 %v1576, 1
    %v1759 = vpop.permute.xlu0 %1758
    %1760 = vrot.lane.b32.xlu0 %v1581, 1
    %v1761 = vpop.permute.xlu0 %1760
    %1762 = vrot.lane.b32.xlu0 %v1660, 1
    %v1763 = vpop.permute.xlu0 %1762
    %1764 = vrot.lane.b32.xlu0 %v1665, 1
    %v1765 = vpop.permute.xlu0 %1764
    %v1774 = vsub.f32 %v1408, %v1751
    %v1775 = vsub.f32 %v1413, %v1753
    %v1776 = vsub.f32 %v1492, %v1755
    %v1777 = vsub.f32 %v1497, %v1757
    %v1778 = vsub.f32 %v1576, %v1759
    %v1779 = vsub.f32 %v1581, %v1761
    %v1780 = vsub.f32 %v1660, %v1763
    %v1781 = vsub.f32 %v1665, %v1765
    %1783 = vset.pattern.permute.xlu0 1
    %1784 = vperm.xlu0 %1783, %v1774
    %v1785 = vpop.permute.xlu0 %1784
    %1788 = vset.pattern.permute.xlu0 1
    %1789 = vperm.xlu0 %1788, %v1775
    %v1790 = vpop.permute.xlu0 %1789
    %1793 = vset.pattern.permute.xlu0 1
    %1794 = vperm.xlu0 %1793, %v1776
    %v1795 = vpop.permute.xlu0 %1794
    %1798 = vset.pattern.permute.xlu0 1
    %1799 = vperm.xlu0 %1798, %v1777
    %v1800 = vpop.permute.xlu0 %1799
    %1803 = vset.pattern.permute.xlu0 1
    %1804 = vperm.xlu0 %1803, %v1778
    %v1805 = vpop.permute.xlu0 %1804
    %1808 = vset.pattern.permute.xlu0 1
    %1809 = vperm.xlu0 %1808, %v1779
    %v1810 = vpop.permute.xlu0 %1809
    %1813 = vset.pattern.permute.xlu0 1
    %1814 = vperm.xlu0 %1813, %v1780
    %v1815 = vpop.permute.xlu0 %1814
    %1818 = vset.pattern.permute.xlu0 1
    %1819 = vperm.xlu0 %1818, %v1781
    %v1820 = vpop.permute.xlu0 %1819
    %v1822 = vmul.f32 %v1740, %v1785
    %v1823 = vmul.f32 %v1741, %v1790
    %v1824 = vmul.f32 %v1740, %v1795
    %v1825 = vmul.f32 %v1741, %v1800
    %v1826 = vmul.f32 %v1740, %v1805
    %v1827 = vmul.f32 %v1741, %v1810
    %v1828 = vmul.f32 %v1740, %v1815
    %v1829 = vmul.f32 %v1741, %v1820
    %1830 = vset.pattern.permute.xlu0 0
    %1831 = vperm.xlu0 %1830, %v1408
    %v1832 = vpop.permute.xlu0 %1831
    %1834 = vset.pattern.permute.xlu0 0
    %1835 = vperm.xlu0 %1834, %v1413
    %v1836 = vpop.permute.xlu0 %1835
    %1838 = vset.pattern.permute.xlu0 0
    %1839 = vperm.xlu0 %1838, %v1492
    %v1840 = vpop.permute.xlu0 %1839
    %1842 = vset.pattern.permute.xlu0 0
    %1843 = vperm.xlu0 %1842, %v1497
    %v1844 = vpop.permute.xlu0 %1843
    %1846 = vset.pattern.permute.xlu0 0
    %1847 = vperm.xlu0 %1846, %v1576
    %v1848 = vpop.permute.xlu0 %1847
    %1850 = vset.pattern.permute.xlu0 0
    %1851 = vperm.xlu0 %1850, %v1581
    %v1852 = vpop.permute.xlu0 %1851
    %1854 = vset.pattern.permute.xlu0 0
    %1855 = vperm.xlu0 %1854, %v1660
    %v1856 = vpop.permute.xlu0 %1855
    %1858 = vset.pattern.permute.xlu0 0
    %1859 = vperm.xlu0 %1858, %v1665
    %v1860 = vpop.permute.xlu0 %1859
    %v1862 = vadd.f32 %v1832, %v1822
    %v1863 = vadd.f32 %v1836, %v1823
    %v1864 = vadd.f32 %v1840, %v1824
    %v1865 = vadd.f32 %v1844, %v1825
    %v1866 = vadd.f32 %v1848, %v1826
    %v1867 = vadd.f32 %v1852, %v1827
    %v1868 = vadd.f32 %v1856, %v1828
    %v1869 = vadd.f32 %v1860, %v1829
    %v1870 = vadd.f32 %v1732, %v1862
    %v1871 = vadd.f32 %v1733, %v1863
    %v1872 = vadd.f32 %v1734, %v1864
    %v1873 = vadd.f32 %v1735, %v1865
    %v1874 = vadd.f32 %v1736, %v1866
    %v1875 = vadd.f32 %v1737, %v1867
    %v1876 = vadd.f32 %v1738, %v1868
    %v1877 = vadd.f32 %v1739, %v1869
    %v1878 = vld [vmem:[#allocation10] sm:$0xff]
    %v1879 = vld [vmem:[#allocation10 + $0x8] sm:$0xff]
    %v1880 = vmul.f32 %v1870, %v1878
    %v1881 = vmul.f32 %v1871, %v1879
    %v1882 = vmul.f32 %v1872, %v1878
    %v1883 = vmul.f32 %v1873, %v1879
    %v1884 = vmul.f32 %v1874, %v1878
    %v1885 = vmul.f32 %v1875, %v1879
    %v1886 = vmul.f32 %v1876, %v1878
    %v1887 = vmul.f32 %v1877, %v1879
    %v1889 = vsel %vm783, %v683, 0
    %v1892 = vsel %vm783, %v684, 0
    %v1895 = vsel %vm783, %v607, 0
    %v1898 = vsel %vm783, %v608, 0
    %1900 = vmatprep.subr.mxu0 0.0
    %1901 = vmatpush1.xpose.msra.mxu0 %v1895
    %1902 = vmatprep.subr.mxu0 0.0
    %1903 = vmatpush1.xpose.msra.mxu0 %v1898
    %1904 = vmatprep.subr.mxu0 0.0
    %1905 = vmatpush1.xpose.msra.mxu0 0.0
    %1906 = vmatprep.subr.mxu0 0.0
    %1907 = vmatpush1.xpose.msra.mxu0 0.0
    %1908 = vmatprep.subr.mxu0 0.0
    %1909 = vmatpush1.xpose.msra.mxu0 0.0
    %1910 = vmatprep.subr.mxu0 0.0
    %1911 = vmatpush1.xpose.msra.mxu0 0.0
    %1912 = vmatprep.subr.mxu0 0.0
    %1913 = vmatpush1.xpose.msra.mxu0 0.0
    %1914 = vmatprep.subr.mxu0 0.0
    %1915 = vmatpush1.xpose.msra.mxu0 0.0
    %1916 = vmatprep.subr.mxu0 0.0
    %1917 = vmatpush1.xpose.msra.mxu0 0.0
    %1918 = vmatprep.subr.mxu0 0.0
    %1919 = vmatpush1.xpose.msra.mxu0 0.0
    %1920 = vmatprep.subr.mxu0 0.0
    %1921 = vmatpush1.xpose.msra.mxu0 0.0
    %1922 = vmatprep.subr.mxu0 0.0
    %1923 = vmatpush1.xpose.msra.mxu0 0.0
    %1924 = vmatprep.subr.mxu0 0.0
    %1925 = vmatpush1.xpose.msra.mxu0 0.0
    %1926 = vmatprep.subr.mxu0 0.0
    %1927 = vmatpush1.xpose.msra.mxu0 0.0
    %1928 = vmatprep.subr.mxu0 0.0
    %1929 = vmatpush1.xpose.msra.mxu0 0.0
    %1930 = vmatprep.subr.mxu0 0.0
    %1931 = vmatpush1.xpose.msra.mxu0 0.0
    %1932 = vmatprep.subr.mxu0 0.0
    %1933 = vmatpush1.xpose.msra.mxu0 0.0
    %1934 = vmatprep.subr.mxu0 0.0
    %1935 = vmatpush1.xpose.msra.mxu0 0.0
    %1936 = vmatprep.subr.mxu0 0.0
    %1937 = vmatpush1.xpose.msra.mxu0 0.0
    %1938 = vmatprep.subr.mxu0 0.0
    %1939 = vmatpush1.xpose.msra.mxu0 0.0
    %1940 = vmatprep.subr.mxu0 0.0
    %1941 = vmatpush1.xpose.msra.mxu0 0.0
    %1942 = vmatprep.subr.mxu0 0.0
    %1943 = vmatpush1.xpose.msra.mxu0 0.0
    %1944 = vmatprep.subr.mxu0 0.0
    %1945 = vmatpush1.xpose.msra.mxu0 0.0
    %1946 = vmatprep.subr.mxu0 0.0
    %1947 = vmatpush1.xpose.msra.mxu0 0.0
    %1948 = vmatprep.subr.mxu0 0.0
    %1949 = vmatpush1.xpose.msra.mxu0 0.0
    %1950 = vmatprep.subr.mxu0 0.0
    %1951 = vmatpush1.xpose.msra.mxu0 0.0
    %1952 = vmatprep.subr.mxu0 0.0
    %1953 = vmatpush1.xpose.msra.mxu0 0.0
    %1954 = vmatprep.subr.mxu0 0.0
    %1955 = vmatpush1.xpose.msra.mxu0 0.0
    %1956 = vmatprep.subr.mxu0 0.0
    %1957 = vmatpush1.xpose.msra.mxu0 0.0
    %1958 = vmatprep.subr.mxu0 0.0
    %1959 = vmatpush1.xpose.msra.mxu0 0.0
    %1960 = vmatprep.subr.mxu0 0.0
    %1961 = vmatpush1.xpose.msra.mxu0 0.0
    %1962 = vmatprep.subr.mxu0 0.0
    %1963 = vmatpush1.xpose.msra.mxu0 0.0
    %1964 = vmatprep.mubr.f32.mxu0 0.0
    %1965 = vmatmul.mubr.f32.gmra.mrb[0].mxu0 %v1889
    %v1966 = vpop.f32.mrb[0].mxu0
    %v1967 = vadd.f32 %v1880, %v1966
    %v1968 = vpop.f32.mrb[0].mxu0
    %1969 = vmatprep.mubr.f32.mxu0 0.0
    %1970 = vmatmul.mubr.f32.gmra.mrb[0].mxu0 %v1892
    %v1971 = vpop.f32.mrb[0].mxu0
    %v1972 = vadd.f32 %v1881, %v1971
    %v1973 = vpop.f32.mrb[0].mxu0
    %1974 = vdwg.mxu0
    %v1976 = vsel %vm783, %v685, 0
    %v1979 = vsel %vm783, %v686, 0
    %v1982 = vsel %vm783, %v609, 0
    %v1985 = vsel %vm783, %v610, 0
    %1987 = vmatprep.subr.mxu0 0.0
    %1988 = vmatpush1.xpose.msra.mxu0 %v1982
    %1989 = vmatprep.subr.mxu0 0.0
    %1990 = vmatpush1.xpose.msra.mxu0 %v1985
    %1991 = vmatprep.subr.mxu0 0.0
    %1992 = vmatpush1.xpose.msra.mxu0 0.0
    %1993 = vmatprep.subr.mxu0 0.0
    %1994 = vmatpush1.xpose.msra.mxu0 0.0
    %1995 = vmatprep.subr.mxu0 0.0
    %1996 = vmatpush1.xpose.msra.mxu0 0.0
    %1997 = vmatprep.subr.mxu0 0.0
    %1998 = vmatpush1.xpose.msra.mxu0 0.0
    %1999 = vmatprep.subr.mxu0 0.0
    %2000 = vmatpush1.xpose.msra.mxu0 0.0
    %2001 = vmatprep.subr.mxu0 0.0
    %2002 = vmatpush1.xpose.msra.mxu0 0.0
    %2003 = vmatprep.subr.mxu0 0.0
    %2004 = vmatpush1.xpose.msra.mxu0 0.0
    %2005 = vmatprep.subr.mxu0 0.0
    %2006 = vmatpush1.xpose.msra.mxu0 0.0
    %2007 = vmatprep.subr.mxu0 0.0
    %2008 = vmatpush1.xpose.msra.mxu0 0.0
    %2009 = vmatprep.subr.mxu0 0.0
    %2010 = vmatpush1.xpose.msra.mxu0 0.0
    %2011 = vmatprep.subr.mxu0 0.0
    %2012 = vmatpush1.xpose.msra.mxu0 0.0
    %2013 = vmatprep.subr.mxu0 0.0
    %2014 = vmatpush1.xpose.msra.mxu0 0.0
    %2015 = vmatprep.subr.mxu0 0.0
    %2016 = vmatpush1.xpose.msra.mxu0 0.0
    %2017 = vmatprep.subr.mxu0 0.0
    %2018 = vmatpush1.xpose.msra.mxu0 0.0
    %2019 = vmatprep.subr.mxu0 0.0
    %2020 = vmatpush1.xpose.msra.mxu0 0.0
    %2021 = vmatprep.subr.mxu0 0.0
    %2022 = vmatpush1.xpose.msra.mxu0 0.0
    %2023 = vmatprep.subr.mxu0 0.0
    %2024 = vmatpush1.xpose.msra.mxu0 0.0
    %2025 = vmatprep.subr.mxu0 0.0
    %2026 = vmatpush1.xpose.msra.mxu0 0.0
    %2027 = vmatprep.subr.mxu0 0.0
    %2028 = vmatpush1.xpose.msra.mxu0 0.0
    %2029 = vmatprep.subr.mxu0 0.0
    %2030 = vmatpush1.xpose.msra.mxu0 0.0
    %2031 = vmatprep.subr.mxu0 0.0
    %2032 = vmatpush1.xpose.msra.mxu0 0.0
    %2033 = vmatprep.subr.mxu0 0.0
    %2034 = vmatpush1.xpose.msra.mxu0 0.0
    %2035 = vmatprep.subr.mxu0 0.0
    %2036 = vmatpush1.xpose.msra.mxu0 0.0
    %2037 = vmatprep.subr.mxu0 0.0
    %2038 = vmatpush1.xpose.msra.mxu0 0.0
    %2039 = vmatprep.subr.mxu0 0.0
    %2040 = vmatpush1.xpose.msra.mxu0 0.0
    %2041 = vmatprep.subr.mxu0 0.0
    %2042 = vmatpush1.xpose.msra.mxu0 0.0
    %2043 = vmatprep.subr.mxu0 0.0
    %2044 = vmatpush1.xpose.msra.mxu0 0.0
    %2045 = vmatprep.subr.mxu0 0.0
    %2046 = vmatpush1.xpose.msra.mxu0 0.0
    %2047 = vmatprep.subr.mxu0 0.0
    %2048 = vmatpush1.xpose.msra.mxu0 0.0
    %2049 = vmatprep.subr.mxu0 0.0
    %2050 = vmatpush1.xpose.msra.mxu0 0.0
    %2051 = vmatprep.mubr.f32.mxu0 0.0
    %2052 = vmatmul.mubr.f32.gmra.mrb[0].mxu0 %v1976
    %v2053 = vpop.f32.mrb[0].mxu0
    %v2054 = vadd.f32 %v1882, %v2053
    %v2055 = vpop.f32.mrb[0].mxu0
    %2056 = vmatprep.mubr.f32.mxu0 0.0
    %2057 = vmatmul.mubr.f32.gmra.mrb[0].mxu0 %v1979
    %v2058 = vpop.f32.mrb[0].mxu0
    %v2059 = vadd.f32 %v1883, %v2058
    %v2060 = vpop.f32.mrb[0].mxu0
    %2061 = vdwg.mxu0
    %v2063 = vsel %vm783, %v687, 0
    %v2066 = vsel %vm783, %v688, 0
    %v2069 = vsel %vm783, %v611, 0
    %v2072 = vsel %vm783, %v612, 0
    %2074 = vmatprep.subr.mxu0 0.0
    %2075 = vmatpush1.xpose.msra.mxu0 %v2069
    %2076 = vmatprep.subr.mxu0 0.0
    %2077 = vmatpush1.xpose.msra.mxu0 %v2072
    %2078 = vmatprep.subr.mxu0 0.0
    %2079 = vmatpush1.xpose.msra.mxu0 0.0
    %2080 = vmatprep.subr.mxu0 0.0
    %2081 = vmatpush1.xpose.msra.mxu0 0.0
    %2082 = vmatprep.subr.mxu0 0.0
    %2083 = vmatpush1.xpose.msra.mxu0 0.0
    %2084 = vmatprep.subr.mxu0 0.0
    %2085 = vmatpush1.xpose.msra.mxu0 0.0
    %2086 = vmatprep.subr.mxu0 0.0
    %2087 = vmatpush1.xpose.msra.mxu0 0.0
    %2088 = vmatprep.subr.mxu0 0.0
    %2089 = vmatpush1.xpose.msra.mxu0 0.0
    %2090 = vmatprep.subr.mxu0 0.0
    %2091 = vmatpush1.xpose.msra.mxu0 0.0
    %2092 = vmatprep.subr.mxu0 0.0
    %2093 = vmatpush1.xpose.msra.mxu0 0.0
    %2094 = vmatprep.subr.mxu0 0.0
    %2095 = vmatpush1.xpose.msra.mxu0 0.0
    %2096 = vmatprep.subr.mxu0 0.0
    %2097 = vmatpush1.xpose.msra.mxu0 0.0
    %2098 = vmatprep.subr.mxu0 0.0
    %2099 = vmatpush1.xpose.msra.mxu0 0.0
    %2100 = vmatprep.subr.mxu0 0.0
    %2101 = vmatpush1.xpose.msra.mxu0 0.0
    %2102 = vmatprep.subr.mxu0 0.0
    %2103 = vmatpush1.xpose.msra.mxu0 0.0
    %2104 = vmatprep.subr.mxu0 0.0
    %2105 = vmatpush1.xpose.msra.mxu0 0.0
    %2106 = vmatprep.subr.mxu0 0.0
    %2107 = vmatpush1.xpose.msra.mxu0 0.0
    %2108 = vmatprep.subr.mxu0 0.0
    %2109 = vmatpush1.xpose.msra.mxu0 0.0
    %2110 = vmatprep.subr.mxu0 0.0
    %2111 = vmatpush1.xpose.msra.mxu0 0.0
    %2112 = vmatprep.subr.mxu0 0.0
    %2113 = vmatpush1.xpose.msra.mxu0 0.0
    %2114 = vmatprep.subr.mxu0 0.0
    %2115 = vmatpush1.xpose.msra.mxu0 0.0
    %2116 = vmatprep.subr.mxu0 0.0
    %2117 = vmatpush1.xpose.msra.mxu0 0.0
    %2118 = vmatprep.subr.mxu0 0.0
    %2119 = vmatpush1.xpose.msra.mxu0 0.0
    %2120 = vmatprep.subr.mxu0 0.0
    %2121 = vmatpush1.xpose.msra.mxu0 0.0
    %2122 = vmatprep.subr.mxu0 0.0
    %2123 = vmatpush1.xpose.msra.mxu0 0.0
    %2124 = vmatprep.subr.mxu0 0.0
    %2125 = vmatpush1.xpose.msra.mxu0 0.0
    %2126 = vmatprep.subr.mxu0 0.0
    %2127 = vmatpush1.xpose.msra.mxu0 0.0
    %2128 = vmatprep.subr.mxu0 0.0
    %2129 = vmatpush1.xpose.msra.mxu0 0.0
    %2130 = vmatprep.subr.mxu0 0.0
    %2131 = vmatpush1.xpose.msra.mxu0 0.0
    %2132 = vmatprep.subr.mxu0 0.0
    %2133 = vmatpush1.xpose.msra.mxu0 0.0
    %2134 = vmatprep.subr.mxu0 0.0
    %2135 = vmatpush1.xpose.msra.mxu0 0.0
    %2136 = vmatprep.subr.mxu0 0.0
    %2137 = vmatpush1.xpose.msra.mxu0 0.0
    %2138 = vmatprep.mubr.f32.mxu0 0.0
    %2139 = vmatmul.mubr.f32.gmra.mrb[0].mxu0 %v2063
    %v2140 = vpop.f32.mrb[0].mxu0
    %v2141 = vadd.f32 %v1884, %v2140
    %v2142 = vpop.f32.mrb[0].mxu0
    %2143 = vmatprep.mubr.f32.mxu0 0.0
    %2144 = vmatmul.mubr.f32.gmra.mrb[0].mxu0 %v2066
    %v2145 = vpop.f32.mrb[0].mxu0
    %v2146 = vadd.f32 %v1885, %v2145
    %v2147 = vpop.f32.mrb[0].mxu0
    %2148 = vdwg.mxu0
    %v2150 = vsel %vm783, %v689, 0
    %v2153 = vsel %vm783, %v690, 0
    %v2156 = vsel %vm783, %v613, 0
    %v2159 = vsel %vm783, %v614, 0
    %2161 = vmatprep.subr.mxu0 0.0
    %2162 = vmatpush1.xpose.msra.mxu0 %v2156
    %2163 = vmatprep.subr.mxu0 0.0
    %2164 = vmatpush1.xpose.msra.mxu0 %v2159
    %2165 = vmatprep.subr.mxu0 0.0
    %2166 = vmatpush1.xpose.msra.mxu0 0.0
    %2167 = vmatprep.subr.mxu0 0.0
    %2168 = vmatpush1.xpose.msra.mxu0 0.0
    %2169 = vmatprep.subr.mxu0 0.0
    %2170 = vmatpush1.xpose.msra.mxu0 0.0
    %2171 = vmatprep.subr.mxu0 0.0
    %2172 = vmatpush1.xpose.msra.mxu0 0.0
    %2173 = vmatprep.subr.mxu0 0.0
    %2174 = vmatpush1.xpose.msra.mxu0 0.0
    %2175 = vmatprep.subr.mxu0 0.0
    %2176 = vmatpush1.xpose.msra.mxu0 0.0
    %2177 = vmatprep.subr.mxu0 0.0
    %2178 = vmatpush1.xpose.msra.mxu0 0.0
    %2179 = vmatprep.subr.mxu0 0.0
    %2180 = vmatpush1.xpose.msra.mxu0 0.0
    %2181 = vmatprep.subr.mxu0 0.0
    %2182 = vmatpush1.xpose.msra.mxu0 0.0
    %2183 = vmatprep.subr.mxu0 0.0
    %2184 = vmatpush1.xpose.msra.mxu0 0.0
    %2185 = vmatprep.subr.mxu0 0.0
    %2186 = vmatpush1.xpose.msra.mxu0 0.0
    %2187 = vmatprep.subr.mxu0 0.0
    %2188 = vmatpush1.xpose.msra.mxu0 0.0
    %2189 = vmatprep.subr.mxu0 0.0
    %2190 = vmatpush1.xpose.msra.mxu0 0.0
    %2191 = vmatprep.subr.mxu0 0.0
    %2192 = vmatpush1.xpose.msra.mxu0 0.0
    %2193 = vmatprep.subr.mxu0 0.0
    %2194 = vmatpush1.xpose.msra.mxu0 0.0
    %2195 = vmatprep.subr.mxu0 0.0
    %2196 = vmatpush1.xpose.msra.mxu0 0.0
    %2197 = vmatprep.subr.mxu0 0.0
    %2198 = vmatpush1.xpose.msra.mxu0 0.0
    %2199 = vmatprep.subr.mxu0 0.0
    %2200 = vmatpush1.xpose.msra.mxu0 0.0
    %2201 = vmatprep.subr.mxu0 0.0
    %2202 = vmatpush1.xpose.msra.mxu0 0.0
    %2203 = vmatprep.subr.mxu0 0.0
    %2204 = vmatpush1.xpose.msra.mxu0 0.0
    %2205 = vmatprep.subr.mxu0 0.0
    %2206 = vmatpush1.xpose.msra.mxu0 0.0
    %2207 = vmatprep.subr.mxu0 0.0
    %2208 = vmatpush1.xpose.msra.mxu0 0.0
    %2209 = vmatprep.subr.mxu0 0.0
    %2210 = vmatpush1.xpose.msra.mxu0 0.0
    %2211 = vmatprep.subr.mxu0 0.0
    %2212 = vmatpush1.xpose.msra.mxu0 0.0
    %2213 = vmatprep.subr.mxu0 0.0
    %2214 = vmatpush1.xpose.msra.mxu0 0.0
    %2215 = vmatprep.subr.mxu0 0.0
    %2216 = vmatpush1.xpose.msra.mxu0 0.0
    %2217 = vmatprep.subr.mxu0 0.0
    %2218 = vmatpush1.xpose.msra.mxu0 0.0
    %2219 = vmatprep.subr.mxu0 0.0
    %2220 = vmatpush1.xpose.msra.mxu0 0.0
    %2221 = vmatprep.subr.mxu0 0.0
    %2222 = vmatpush1.xpose.msra.mxu0 0.0
    %2223 = vmatprep.subr.mxu0 0.0
    %2224 = vmatpush1.xpose.msra.mxu0 0.0
    %2225 = vmatprep.mubr.f32.mxu0 0.0
    %2226 = vmatmul.mubr.f32.gmra.mrb[0].mxu0 %v2150
    %v2227 = vpop.f32.mrb[0].mxu0
    %v2228 = vadd.f32 %v1886, %v2227
    %v2229 = vpop.f32.mrb[0].mxu0
    %2230 = vmatprep.mubr.f32.mxu0 0.0
    %2231 = vmatmul.mubr.f32.gmra.mrb[0].mxu0 %v2153
    %v2232 = vpop.f32.mrb[0].mxu0
    %v2233 = vadd.f32 %v1887, %v2232
    %v2234 = vpop.f32.mrb[0].mxu0
    %2235 = vdwg.mxu0
    %v2236 = vld [vmem:[#allocation11] sm:$0xff]
    %v2237 = vld [vmem:[#allocation11 + $0x8] sm:$0xff]
    %v2238 = vadd.f32 %v1967, %v2236
    %v2239 = vadd.f32 %v1972, %v2237
    %v2240 = vadd.f32 %v2054, %v2236
    %v2241 = vadd.f32 %v2059, %v2237
    %v2242 = vadd.f32 %v2141, %v2236
    %v2243 = vadd.f32 %v2146, %v2237
    %v2244 = vadd.f32 %v2228, %v2236
    %v2245 = vadd.f32 %v2233, %v2237
    %vm2246 = vcmask 130048
    %v2247 = vsel %vm2246, %v2238, -inf
    %2248 = vmax.xlane.f32.xlu0 %v2247
    %v2249 = vpop.xlane.xlu0 %2248
    %v2250 = vsel %vm2246, %v2239, -inf
    %2251 = vmax.xlane.f32.xlu0 %v2250
    %v2252 = vpop.xlane.xlu0 %2251
    %v2253 = vsel %vm2246, %v2240, -inf
    %2254 = vmax.xlane.f32.xlu0 %v2253
    %v2255 = vpop.xlane.xlu0 %2254
    %v2256 = vsel %vm2246, %v2241, -inf
    %2257 = vmax.xlane.f32.xlu0 %v2256
    %v2258 = vpop.xlane.xlu0 %2257
    %v2259 = vsel %vm2246, %v2242, -inf
    %2260 = vmax.xlane.f32.xlu0 %v2259
    %v2261 = vpop.xlane.xlu0 %2260
    %v2262 = vsel %vm2246, %v2243, -inf
    %2263 = vmax.xlane.f32.xlu0 %v2262
    %v2264 = vpop.xlane.xlu0 %2263
    %v2265 = vsel %vm2246, %v2244, -inf
    %2266 = vmax.xlane.f32.xlu0 %v2265
    %v2267 = vpop.xlane.xlu0 %2266
    %v2268 = vsel %vm2246, %v2245, -inf
    %2269 = vmax.xlane.f32.xlu0 %v2268
    %v2270 = vpop.xlane.xlu0 %2269
    %v2271 = vsub.f32 %v2238, %v2249
    %v2272 = vsub.f32 %v2239, %v2252
    %v2273 = vsub.f32 %v2240, %v2255
    %v2274 = vsub.f32 %v2241, %v2258
    %v2275 = vsub.f32 %v2242, %v2261
    %v2276 = vsub.f32 %v2243, %v2264
    %v2277 = vsub.f32 %v2244, %v2267
    %v2278 = vsub.f32 %v2245, %v2270
    %v2279 = vmul.f32 %v2271, 1.442695
    %v2280 = vpow.pop %v2279
    %v2281 = vmul.f32 %v2272, 1.442695
    %v2282 = vpow.pop %v2281
    %v2283 = vmul.f32 %v2273, 1.442695
    %v2284 = vpow.pop %v2283
    %v2285 = vmul.f32 %v2274, 1.442695
    %v2286 = vpow.pop %v2285
    %v2287 = vmul.f32 %v2275, 1.442695
    %v2288 = vpow.pop %v2287
    %v2289 = vmul.f32 %v2276, 1.442695
    %v2290 = vpow.pop %v2289
    %v2291 = vmul.f32 %v2277, 1.442695
    %v2292 = vpow.pop %v2291
    %v2293 = vmul.f32 %v2278, 1.442695
    %v2294 = vpow.pop %v2293
    %v2295 = vsel %vm2246, %v2280, 0.0
    %2296 = vadd.xlane.f32.xlu0 %v2295
    %v2297 = vpop.xlane.xlu0 %2296
    %v2298 = vsel %vm2246, %v2282, 0.0
    %2299 = vadd.xlane.f32.xlu0 %v2298
    %v2300 = vpop.xlane.xlu0 %2299
    %v2301 = vsel %vm2246, %v2284, 0.0
    %2302 = vadd.xlane.f32.xlu0 %v2301
    %v2303 = vpop.xlane.xlu0 %2302
    %v2304 = vsel %vm2246, %v2286, 0.0
    %2305 = vadd.xlane.f32.xlu0 %v2304
    %v2306 = vpop.xlane.xlu0 %2305
    %v2307 = vsel %vm2246, %v2288, 0.0
    %2308 = vadd.xlane.f32.xlu0 %v2307
    %v2309 = vpop.xlane.xlu0 %2308
    %v2310 = vsel %vm2246, %v2290, 0.0
    %2311 = vadd.xlane.f32.xlu0 %v2310
    %v2312 = vpop.xlane.xlu0 %2311
    %v2313 = vsel %vm2246, %v2292, 0.0
    %2314 = vadd.xlane.f32.xlu0 %v2313
    %v2315 = vpop.xlane.xlu0 %2314
    %v2316 = vsel %vm2246, %v2294, 0.0
    %2317 = vadd.xlane.f32.xlu0 %v2316
    %v2318 = vpop.xlane.xlu0 %2317
    %v2319 = vrcp.pop %v2297
    %v2320 = vrcp.pop %v2300
    %v2321 = vrcp.pop %v2303
    %v2322 = vrcp.pop %v2306
    %v2323 = vrcp.pop %v2309
    %v2324 = vrcp.pop %v2312
    %v2325 = vrcp.pop %v2315
    %v2326 = vrcp.pop %v2318
    %v2327 = vmul.f32 %v2280, %v2319
    %v2328 = vmul.f32 %v2282, %v2320
    %v2329 = vmul.f32 %v2284, %v2321
    %v2330 = vmul.f32 %v2286, %v2322
    %v2331 = vmul.f32 %v2288, %v2323
    %v2332 = vmul.f32 %v2290, %v2324
    %v2333 = vmul.f32 %v2292, %v2325
    %v2334 = vmul.f32 %v2294, %v2326
    %v2336 = vsel %vm2246, %v2327, 0
    %v2339 = vsel %vm2246, %v2328, 0
    %2341 = vmatprep.subr.mxu0 0.0
    %2342 = vmatpush1.msra.mxu0 %v655
    %2343 = vmatprep.subr.mxu0 0.0
    %2344 = vmatpush1.msra.mxu0 %v656
    %2345 = vmatprep.subr.mxu0 0.0
    %2346 = vmatpush1.msra.mxu0 0.0
    %2347 = vmatprep.subr.mxu0 0.0
    %2348 = vmatpush1.msra.mxu0 0.0
    %2349 = vmatprep.subr.mxu0 0.0
    %2350 = vmatpush1.msra.mxu0 0.0
    %2351 = vmatprep.subr.mxu0 0.0
    %2352 = vmatpush1.msra.mxu0 0.0
    %2353 = vmatprep.subr.mxu0 0.0
    %2354 = vmatpush1.msra.mxu0 0.0
    %2355 = vmatprep.subr.mxu0 0.0
    %2356 = vmatpush1.msra.mxu0 0.0
    %2357 = vmatprep.subr.mxu0 0.0
    %2358 = vmatpush1.msra.mxu0 0.0
    %2359 = vmatprep.subr.mxu0 0.0
    %2360 = vmatpush1.msra.mxu0 0.0
    %2361 = vmatprep.subr.mxu0 0.0
    %2362 = vmatpush1.msra.mxu0 0.0
    %2363 = vmatprep.subr.mxu0 0.0
    %2364 = vmatpush1.msra.mxu0 0.0
    %2365 = vmatprep.subr.mxu0 0.0
    %2366 = vmatpush1.msra.mxu0 0.0
    %2367 = vmatprep.subr.mxu0 0.0
    %2368 = vmatpush1.msra.mxu0 0.0
    %2369 = vmatprep.subr.mxu0 0.0
    %2370 = vmatpush1.msra.mxu0 0.0
    %2371 = vmatprep.subr.mxu0 0.0
    %2372 = vmatpush1.msra.mxu0 0.0
    %2373 = vmatprep.subr.mxu0 0.0
    %2374 = vmatpush1.msra.mxu0 0.0
    %2375 = vmatprep.subr.mxu0 0.0
    %2376 = vmatpush1.msra.mxu0 0.0
    %2377 = vmatprep.subr.mxu0 0.0
    %2378 = vmatpush1.msra.mxu0 0.0
    %2379 = vmatprep.subr.mxu0 0.0
    %2380 = vmatpush1.msra.mxu0 0.0
    %2381 = vmatprep.subr.mxu0 0.0
    %2382 = vmatpush1.msra.mxu0 0.0
    %2383 = vmatprep.subr.mxu0 0.0
    %2384 = vmatpush1.msra.mxu0 0.0
    %2385 = vmatprep.subr.mxu0 0.0
    %2386 = vmatpush1.msra.mxu0 0.0
    %2387 = vmatprep.subr.mxu0 0.0
    %2388 = vmatpush1.msra.mxu0 0.0
    %2389 = vmatprep.subr.mxu0 0.0
    %2390 = vmatpush1.msra.mxu0 0.0
    %2391 = vmatprep.subr.mxu0 0.0
    %2392 = vmatpush1.msra.mxu0 0.0
    %2393 = vmatprep.subr.mxu0 0.0
    %2394 = vmatpush1.msra.mxu0 0.0
    %2395 = vmatprep.subr.mxu0 0.0
    %2396 = vmatpush1.msra.mxu0 0.0
    %2397 = vmatprep.subr.mxu0 0.0
    %2398 = vmatpush1.msra.mxu0 0.0
    %2399 = vmatprep.subr.mxu0 0.0
    %2400 = vmatpush1.msra.mxu0 0.0
    %2401 = vmatprep.subr.mxu0 0.0
    %2402 = vmatpush1.msra.mxu0 0.0
    %2403 = vmatprep.subr.mxu0 0.0
    %2404 = vmatpush1.msra.mxu0 0.0
    %2405 = vmatprep.mubr.f32.mxu0 0.0
    %2406 = vmatmul.mubr.f32.gmra.mrb[0].mxu0 %v2336
    %v2407 = vpop.f32.mrb[0].mxu0
    %v2408 = vadd.f32 0.0, %v2407
    %v2409 = vpop.f32.mrb[0].mxu0
    %2410 = vmatprep.mubr.f32.mxu0 0.0
    %2411 = vmatmul.mubr.f32.gmra.mrb[0].mxu0 %v2339
    %v2412 = vpop.f32.mrb[0].mxu0
    %v2413 = vadd.f32 0.0, %v2412
    %v2414 = vpop.f32.mrb[0].mxu0
    %2415 = vdwg.mxu0
    %v2417 = vsel %vm2246, %v2329, 0
    %v2420 = vsel %vm2246, %v2330, 0
    %2422 = vmatprep.subr.mxu0 0.0
    %2423 = vmatpush1.msra.mxu0 %v657
    %2424 = vmatprep.subr.mxu0 0.0
    %2425 = vmatpush1.msra.mxu0 %v658
    %2426 = vmatprep.subr.mxu0 0.0
    %2427 = vmatpush1.msra.mxu0 0.0
    %2428 = vmatprep.subr.mxu0 0.0
    %2429 = vmatpush1.msra.mxu0 0.0
    %2430 = vmatprep.subr.mxu0 0.0
    %2431 = vmatpush1.msra.mxu0 0.0
    %2432 = vmatprep.subr.mxu0 0.0
    %2433 = vmatpush1.msra.mxu0 0.0
    %2434 = vmatprep.subr.mxu0 0.0
    %2435 = vmatpush1.msra.mxu0 0.0
    %2436 = vmatprep.subr.mxu0 0.0
    %2437 = vmatpush1.msra.mxu0 0.0
    %2438 = vmatprep.subr.mxu0 0.0
    %2439 = vmatpush1.msra.mxu0 0.0
    %2440 = vmatprep.subr.mxu0 0.0
    %2441 = vmatpush1.msra.mxu0 0.0
    %2442 = vmatprep.subr.mxu0 0.0
    %2443 = vmatpush1.msra.mxu0 0.0
    %2444 = vmatprep.subr.mxu0 0.0
    %2445 = vmatpush1.msra.mxu0 0.0
    %2446 = vmatprep.subr.mxu0 0.0
    %2447 = vmatpush1.msra.mxu0 0.0
    %2448 = vmatprep.subr.mxu0 0.0
    %2449 = vmatpush1.msra.mxu0 0.0
    %2450 = vmatprep.subr.mxu0 0.0
    %2451 = vmatpush1.msra.mxu0 0.0
    %2452 = vmatprep.subr.mxu0 0.0
    %2453 = vmatpush1.msra.mxu0 0.0
    %2454 = vmatprep.subr.mxu0 0.0
    %2455 = vmatpush1.msra.mxu0 0.0
    %2456 = vmatprep.subr.mxu0 0.0
    %2457 = vmatpush1.msra.mxu0 0.0
    %2458 = vmatprep.subr.mxu0 0.0
    %2459 = vmatpush1.msra.mxu0 0.0
    %2460 = vmatprep.subr.mxu0 0.0
    %2461 = vmatpush1.msra.mxu0 0.0
    %2462 = vmatprep.subr.mxu0 0.0
    %2463 = vmatpush1.msra.mxu0 0.0
    %2464 = vmatprep.subr.mxu0 0.0
    %2465 = vmatpush1.msra.mxu0 0.0
    %2466 = vmatprep.subr.mxu0 0.0
    %2467 = vmatpush1.msra.mxu0 0.0
    %2468 = vmatprep.subr.mxu0 0.0
    %2469 = vmatpush1.msra.mxu0 0.0
    %2470 = vmatprep.subr.mxu0 0.0
    %2471 = vmatpush1.msra.mxu0 0.0
    %2472 = vmatprep.subr.mxu0 0.0
    %2473 = vmatpush1.msra.mxu0 0.0
    %2474 = vmatprep.subr.mxu0 0.0
    %2475 = vmatpush1.msra.mxu0 0.0
    %2476 = vmatprep.subr.mxu0 0.0
    %2477 = vmatpush1.msra.mxu0 0.0
    %2478 = vmatprep.subr.mxu0 0.0
    %2479 = vmatpush1.msra.mxu0 0.0
    %2480 = vmatprep.subr.mxu0 0.0
    %2481 = vmatpush1.msra.mxu0 0.0
    %2482 = vmatprep.subr.mxu0 0.0
    %2483 = vmatpush1.msra.mxu0 0.0
    %2484 = vmatprep.subr.mxu0 0.0
    %2485 = vmatpush1.msra.mxu0 0.0
    %2486 = vmatprep.mubr.f32.mxu0 0.0
    %2487 = vmatmul.mubr.f32.gmra.mrb[0].mxu0 %v2417
    %v2488 = vpop.f32.mrb[0].mxu0
    %v2489 = vadd.f32 0.0, %v2488
    %v2490 = vpop.f32.mrb[0].mxu0
    %2491 = vmatprep.mubr.f32.mxu0 0.0
    %2492 = vmatmul.mubr.f32.gmra.mrb[0].mxu0 %v2420
    %v2493 = vpop.f32.mrb[0].mxu0
    %v2494 = vadd.f32 0.0, %v2493
    %v2495 = vpop.f32.mrb[0].mxu0
    %2496 = vdwg.mxu0
    %v2498 = vsel %vm2246, %v2331, 0
    %v2501 = vsel %vm2246, %v2332, 0
    %2503 = vmatprep.subr.mxu0 0.0
    %2504 = vmatpush1.msra.mxu0 %v659
    %2505 = vmatprep.subr.mxu0 0.0
    %2506 = vmatpush1.msra.mxu0 %v660
    %2507 = vmatprep.subr.mxu0 0.0
    %2508 = vmatpush1.msra.mxu0 0.0
    %2509 = vmatprep.subr.mxu0 0.0
    %2510 = vmatpush1.msra.mxu0 0.0
    %2511 = vmatprep.subr.mxu0 0.0
    %2512 = vmatpush1.msra.mxu0 0.0
    %2513 = vmatprep.subr.mxu0 0.0
    %2514 = vmatpush1.msra.mxu0 0.0
    %2515 = vmatprep.subr.mxu0 0.0
    %2516 = vmatpush1.msra.mxu0 0.0
    %2517 = vmatprep.subr.mxu0 0.0
    %2518 = vmatpush1.msra.mxu0 0.0
    %2519 = vmatprep.subr.mxu0 0.0
    %2520 = vmatpush1.msra.mxu0 0.0
    %2521 = vmatprep.subr.mxu0 0.0
    %2522 = vmatpush1.msra.mxu0 0.0
    %2523 = vmatprep.subr.mxu0 0.0
    %2524 = vmatpush1.msra.mxu0 0.0
    %2525 = vmatprep.subr.mxu0 0.0
    %2526 = vmatpush1.msra.mxu0 0.0
    %2527 = vmatprep.subr.mxu0 0.0
    %2528 = vmatpush1.msra.mxu0 0.0
    %2529 = vmatprep.subr.mxu0 0.0
    %2530 = vmatpush1.msra.mxu0 0.0
    %2531 = vmatprep.subr.mxu0 0.0
    %2532 = vmatpush1.msra.mxu0 0.0
    %2533 = vmatprep.subr.mxu0 0.0
    %2534 = vmatpush1.msra.mxu0 0.0
    %2535 = vmatprep.subr.mxu0 0.0
    %2536 = vmatpush1.msra.mxu0 0.0
    %2537 = vmatprep.subr.mxu0 0.0
    %2538 = vmatpush1.msra.mxu0 0.0
    %2539 = vmatprep.subr.mxu0 0.0
    %2540 = vmatpush1.msra.mxu0 0.0
    %2541 = vmatprep.subr.mxu0 0.0
    %2542 = vmatpush1.msra.mxu0 0.0
    %2543 = vmatprep.subr.mxu0 0.0
    %2544 = vmatpush1.msra.mxu0 0.0
    %2545 = vmatprep.subr.mxu0 0.0
    %2546 = vmatpush1.msra.mxu0 0.0
    %2547 = vmatprep.subr.mxu0 0.0
    %2548 = vmatpush1.msra.mxu0 0.0
    %2549 = vmatprep.subr.mxu0 0.0
    %2550 = vmatpush1.msra.mxu0 0.0
    %2551 = vmatprep.subr.mxu0 0.0
    %2552 = vmatpush1.msra.mxu0 0.0
    %2553 = vmatprep.subr.mxu0 0.0
    %2554 = vmatpush1.msra.mxu0 0.0
    %2555 = vmatprep.subr.mxu0 0.0
    %2556 = vmatpush1.msra.mxu0 0.0
    %2557 = vmatprep.subr.mxu0 0.0
    %2558 = vmatpush1.msra.mxu0 0.0
    %2559 = vmatprep.subr.mxu0 0.0
    %2560 = vmatpush1.msra.mxu0 0.0
    %2561 = vmatprep.subr.mxu0 0.0
    %2562 = vmatpush1.msra.mxu0 0.0
    %2563 = vmatprep.subr.mxu0 0.0
    %2564 = vmatpush1.msra.mxu0 0.0
    %2565 = vmatprep.subr.mxu0 0.0
    %2566 = vmatpush1.msra.mxu0 0.0
    %2567 = vmatprep.mubr.f32.mxu0 0.0
    %2568 = vmatmul.mubr.f32.gmra.mrb[0].mxu0 %v2498
    %v2569 = vpop.f32.mrb[0].mxu0
    %v2570 = vadd.f32 0.0, %v2569
    %v2571 = vpop.f32.mrb[0].mxu0
    %2572 = vmatprep.mubr.f32.mxu0 0.0
    %2573 = vmatmul.mubr.f32.gmra.mrb[0].mxu0 %v2501
    %v2574 = vpop.f32.mrb[0].mxu0
    %v2575 = vadd.f32 0.0, %v2574
    %v2576 = vpop.f32.mrb[0].mxu0
    %2577 = vdwg.mxu0
    %v2579 = vsel %vm2246, %v2333, 0
    %v2582 = vsel %vm2246, %v2334, 0
    %2584 = vmatprep.subr.mxu0 0.0
    %2585 = vmatpush1.msra.mxu0 %v661
    %2586 = vmatprep.subr.mxu0 0.0
    %2587 = vmatpush1.msra.mxu0 %v662
    %2588 = vmatprep.subr.mxu0 0.0
    %2589 = vmatpush1.msra.mxu0 0.0
    %2590 = vmatprep.subr.mxu0 0.0
    %2591 = vmatpush1.msra.mxu0 0.0
    %2592 = vmatprep.subr.mxu0 0.0
    %2593 = vmatpush1.msra.mxu0 0.0
    %2594 = vmatprep.subr.mxu0 0.0
    %2595 = vmatpush1.msra.mxu0 0.0
    %2596 = vmatprep.subr.mxu0 0.0
    %2597 = vmatpush1.msra.mxu0 0.0
    %2598 = vmatprep.subr.mxu0 0.0
    %2599 = vmatpush1.msra.mxu0 0.0
    %2600 = vmatprep.subr.mxu0 0.0
    %2601 = vmatpush1.msra.mxu0 0.0
    %2602 = vmatprep.subr.mxu0 0.0
    %2603 = vmatpush1.msra.mxu0 0.0
    %2604 = vmatprep.subr.mxu0 0.0
    %2605 = vmatpush1.msra.mxu0 0.0
    %2606 = vmatprep.subr.mxu0 0.0
    %2607 = vmatpush1.msra.mxu0 0.0
    %2608 = vmatprep.subr.mxu0 0.0
    %2609 = vmatpush1.msra.mxu0 0.0
    %2610 = vmatprep.subr.mxu0 0.0
    %2611 = vmatpush1.msra.mxu0 0.0
    %2612 = vmatprep.subr.mxu0 0.0
    %2613 = vmatpush1.msra.mxu0 0.0
    %2614 = vmatprep.subr.mxu0 0.0
    %2615 = vmatpush1.msra.mxu0 0.0
    %2616 = vmatprep.subr.mxu0 0.0
    %2617 = vmatpush1.msra.mxu0 0.0
    %2618 = vmatprep.subr.mxu0 0.0
    %2619 = vmatpush1.msra.mxu0 0.0
    %2620 = vmatprep.subr.mxu0 0.0
    %2621 = vmatpush1.msra.mxu0 0.0
    %2622 = vmatprep.subr.mxu0 0.0
    %2623 = vmatpush1.msra.mxu0 0.0
    %2624 = vmatprep.subr.mxu0 0.0
    %2625 = vmatpush1.msra.mxu0 0.0
    %2626 = vmatprep.subr.mxu0 0.0
    %2627 = vmatpush1.msra.mxu0 0.0
    %2628 = vmatprep.subr.mxu0 0.0
    %2629 = vmatpush1.msra.mxu0 0.0
    %2630 = vmatprep.subr.mxu0 0.0
    %2631 = vmatpush1.msra.mxu0 0.0
    %2632 = vmatprep.subr.mxu0 0.0
    %2633 = vmatpush1.msra.mxu0 0.0
    %2634 = vmatprep.subr.mxu0 0.0
    %2635 = vmatpush1.msra.mxu0 0.0
    %2636 = vmatprep.subr.mxu0 0.0
    %2637 = vmatpush1.msra.mxu0 0.0
    %2638 = vmatprep.subr.mxu0 0.0
    %2639 = vmatpush1.msra.mxu0 0.0
    %2640 = vmatprep.subr.mxu0 0.0
    %2641 = vmatpush1.msra.mxu0 0.0
    %2642 = vmatprep.subr.mxu0 0.0
    %2643 = vmatpush1.msra.mxu0 0.0
    %2644 = vmatprep.subr.mxu0 0.0
    %2645 = vmatpush1.msra.mxu0 0.0
    %2646 = vmatprep.subr.mxu0 0.0
    %2647 = vmatpush1.msra.mxu0 0.0
    %2648 = vmatprep.mubr.f32.mxu0 0.0
    %2649 = vmatmul.mubr.f32.gmra.mrb[0].mxu0 %v2579
    %v2650 = vpop.f32.mrb[0].mxu0
    %v2651 = vadd.f32 0.0, %v2650
    %v2652 = vpop.f32.mrb[0].mxu0
    %2653 = vmatprep.mubr.f32.mxu0 0.0
    %2654 = vmatmul.mubr.f32.gmra.mrb[0].mxu0 %v2582
    %v2655 = vpop.f32.mrb[0].mxu0
    %v2656 = vadd.f32 0.0, %v2655
    %v2657 = vpop.f32.mrb[0].mxu0
    %2658 = vdwg.mxu0
    %2661 = vrot.lane.b32.xlu0 %v2489, 8
    %v2662 = vpop.permute.xlu0 %2661
    %2663 = vrot.lane.b32.xlu0 %v2494, 8
    %v2664 = vpop.permute.xlu0 %2663
    %2669 = vrot.lane.b32.xlu0 %v2570, 16
    %v2670 = vpop.permute.xlu0 %2669
    %2671 = vrot.lane.b32.xlu0 %v2575, 16
    %v2672 = vpop.permute.xlu0 %2671
    %2677 = vrot.lane.b32.xlu0 %v2651, 24
    %v2678 = vpop.permute.xlu0 %2677
    %2679 = vrot.lane.b32.xlu0 %v2656, 24
    %v2680 = vpop.permute.xlu0 %2679
    %v2683 = vsel %vm783, %v2408, %v2662
    %v2684 = vsel %vm783, %v2413, %v2664
    %v2685 = vsel %vm2246, %v2683, %v2670
    %v2686 = vsel %vm2246, %v2684, %v2672
    %vm2687 = vcmask 195584
    %v2688 = vsel %vm2687, %v2685, %v2678
    %v2689 = vsel %vm2687, %v2686, %v2680
    %v2690 = vld [vmem:[#allocation22] sm:$0xff]
    %v2691 = vld [vmem:[#allocation22 + $0x8] sm:$0xff]
    %v2692 = vld [vmem:[#allocation22 + $0x10] sm:$0xff]
    %v2693 = vld [vmem:[#allocation22 + $0x18] sm:$0xff]
    %v2694 = vld [vmem:[#allocation23] sm:$0x1]
    %v2695 = vlaneseq
    %v2696 = vshrl.u32 %v2695, 7
    %v2697 = vsub.s32 0, %v2696
    %v2698 = vrot.slane %v2694, %v2697
    %v2700 = vsel %vm289, %v2688, 0
    %v2703 = vsel %vm289, %v2689, 0
    %2705 = vmatprep.subr.mxu0 0.0
    %2706 = vmatpush1.msra.mxu0 %v2690
    %2707 = vmatprep.subr.mxu0 0.0
    %2708 = vmatpush1.msra.mxu0 %v2691
    %2709 = vmatprep.subr.mxu0 0.0
    %2710 = vmatpush1.msra.mxu0 %v2692
    %2711 = vmatprep.subr.mxu0 0.0
    %2712 = vmatpush1.msra.mxu0 %v2693
    %2713 = vmatprep.subr.mxu0 0.0
    %2714 = vmatpush1.msra.mxu0 0.0
    %2715 = vmatprep.subr.mxu0 0.0
    %2716 = vmatpush1.msra.mxu0 0.0
    %2717 = vmatprep.subr.mxu0 0.0
    %2718 = vmatpush1.msra.mxu0 0.0
    %2719 = vmatprep.subr.mxu0 0.0
    %2720 = vmatpush1.msra.mxu0 0.0
    %2721 = vmatprep.subr.mxu0 0.0
    %2722 = vmatpush1.msra.mxu0 0.0
    %2723 = vmatprep.subr.mxu0 0.0
    %2724 = vmatpush1.msra.mxu0 0.0
    %2725 = vmatprep.subr.mxu0 0.0
    %2726 = vmatpush1.msra.mxu0 0.0
    %2727 = vmatprep.subr.mxu0 0.0
    %2728 = vmatpush1.msra.mxu0 0.0
    %2729 = vmatprep.subr.mxu0 0.0
    %2730 = vmatpush1.msra.mxu0 0.0
    %2731 = vmatprep.subr.mxu0 0.0
    %2732 = vmatpush1.msra.mxu0 0.0
    %2733 = vmatprep.subr.mxu0 0.0
    %2734 = vmatpush1.msra.mxu0 0.0
    %2735 = vmatprep.subr.mxu0 0.0
    %2736 = vmatpush1.msra.mxu0 0.0
    %2737 = vmatprep.subr.mxu0 0.0
    %2738 = vmatpush1.msra.mxu0 0.0
    %2739 = vmatprep.subr.mxu0 0.0
    %2740 = vmatpush1.msra.mxu0 0.0
    %2741 = vmatprep.subr.mxu0 0.0
    %2742 = vmatpush1.msra.mxu0 0.0
    %2743 = vmatprep.subr.mxu0 0.0
    %2744 = vmatpush1.msra.mxu0 0.0
    %2745 = vmatprep.subr.mxu0 0.0
    %2746 = vmatpush1.msra.mxu0 0.0
    %2747 = vmatprep.subr.mxu0 0.0
    %2748 = vmatpush1.msra.mxu0 0.0
    %2749 = vmatprep.subr.mxu0 0.0
    %2750 = vmatpush1.msra.mxu0 0.0
    %2751 = vmatprep.subr.mxu0 0.0
    %2752 = vmatpush1.msra.mxu0 0.0
    %2753 = vmatprep.subr.mxu0 0.0
    %2754 = vmatpush1.msra.mxu0 0.0
    %2755 = vmatprep.subr.mxu0 0.0
    %2756 = vmatpush1.msra.mxu0 0.0
    %2757 = vmatprep.subr.mxu0 0.0
    %2758 = vmatpush1.msra.mxu0 0.0
    %2759 = vmatprep.subr.mxu0 0.0
    %2760 = vmatpush1.msra.mxu0 0.0
    %2761 = vmatprep.subr.mxu0 0.0
    %2762 = vmatpush1.msra.mxu0 0.0
    %2763 = vmatprep.subr.mxu0 0.0
    %2764 = vmatpush1.msra.mxu0 0.0
    %2765 = vmatprep.subr.mxu0 0.0
    %2766 = vmatpush1.msra.mxu0 0.0
    %2767 = vmatprep.subr.mxu0 0.0
    %2768 = vmatpush1.msra.mxu0 0.0
    %2769 = vmatprep.mubr.f32.mxu0 0.0
    %2770 = vmatmul.mubr.f32.gmra.mrb[0].mxu0 %v2700
    %v2771 = vpop.f32.mrb[0].mxu0
    %v2772 = vadd.f32 %v2698, %v2771
    %v2773 = vpop.f32.mrb[0].mxu0
    %2774 = vmatprep.mubr.f32.mxu0 0.0
    %2775 = vmatmul.mubr.f32.gmra.mrb[0].mxu0 %v2703
    %v2776 = vpop.f32.mrb[0].mxu0
    %v2777 = vadd.f32 %v2698, %v2776
    %v2778 = vpop.f32.mrb[0].mxu0
    %2779 = vdwg.mxu0
    %v2780 = vadd.f32 %v283, %v2772
    %v2781 = vadd.f32 %v284, %v2777
    %v2782 = vld [vmem:[#allocation23 + $0x1] sm:$0x1]
    %v2783 = vld [vmem:[#allocation23 + $0x2] sm:$0x1]
    %v2784 = vsel %vm289, %v2780, 0.0
    %2785 = vadd.xlane.f32.xlu0 %v2784
    %v2786 = vpop.xlane.xlu0 %2785
    %v2787 = vsel %vm289, %v2781, 0.0
    %2788 = vadd.xlane.f32.xlu0 %v2787
    %v2789 = vpop.xlane.xlu0 %2788
    %v2790 = vrcp.pop 32.0
    %v2791 = vmul.f32 %v2786, %v2790
    %v2792 = vmul.f32 %v2789, %v2790
    %v2793 = vsub.f32 %v2780, %v2791
    %v2794 = vsub.f32 %v2781, %v2792
    %v2795 = vmul.f32 %v2793, %v2793
    %v2796 = vmul.f32 %v2794, %v2794
    %v2797 = vsel %vm289, %v2795, 0.0
    %2798 = vadd.xlane.f32.xlu0 %v2797
    %v2799 = vpop.xlane.xlu0 %2798
    %v2800 = vsel %vm289, %v2796, 0.0
    %2801 = vadd.xlane.f32.xlu0 %v2800
    %v2802 = vpop.xlane.xlu0 %2801
    %v2803 = vmul.f32 %v2799, %v2790
    %v2804 = vmul.f32 %v2802, %v2790
    %v2805 = vadd.f32 %v2803, 1e-09
    %v2806 = vadd.f32 %v2804, 1e-09
    %v2807 = vrsqrt.pop %v2805
    %v2808 = vrsqrt.pop %v2806
    %v2809 = vmul.f32 %v2793, %v2807
    %v2810 = vmul.f32 %v2794, %v2808
    %v2811 = vlaneseq
    %v2812 = vshrl.u32 %v2811, 7
    %v2813 = vsub.s32 0, %v2812
    %v2814 = vrot.slane %v2782, %v2813
    %v2815 = vmul.f32 %v2809, %v2814
    %v2816 = vmul.f32 %v2810, %v2814
    %v2817 = vlaneseq
    %v2818 = vshrl.u32 %v2817, 7
    %v2819 = vsub.s32 0, %v2818
    %v2820 = vrot.slane %v2783, %v2819
    %v2821 = vadd.f32 %v2815, %v2820
    %v2822 = vadd.f32 %v2816, %v2820
    %v2823 = vld [vmem:[#allocation25] sm:$0xff]
    %v2824 = vld [vmem:[#allocation25 + $0x8] sm:$0xff]
    %v2825 = vld [vmem:[#allocation25 + $0x10] sm:$0xff]
    %v2826 = vld [vmem:[#allocation25 + $0x18] sm:$0xff]
    %v2827 = vld [vmem:[#allocation26] sm:$0x1]
    %v2829 = vlaneseq
    %v2830 = vshrl.u32 %v2829, 7
    %v2831 = vsub.s32 0, %v2830
    %v2832 = vrot.slane %v2827, %v2831
    %v2835 = vsel %vm289, %v2821, 0
    %v2838 = vsel %vm289, %v2822, 0
    %2840 = vmatprep.subr.mxu0 0.0
    %2841 = vmatpush1.msra.mxu0 %v2823
    %2842 = vmatprep.subr.mxu0 0.0
    %2843 = vmatpush1.msra.mxu0 %v2824
    %2844 = vmatprep.subr.mxu0 0.0
    %2845 = vmatpush1.msra.mxu0 %v2825
    %2846 = vmatprep.subr.mxu0 0.0
    %2847 = vmatpush1.msra.mxu0 %v2826
    %2848 = vmatprep.subr.mxu0 0.0
    %2849 = vmatpush1.msra.mxu0 0.0
    %2850 = vmatprep.subr.mxu0 0.0
    %2851 = vmatpush1.msra.mxu0 0.0
    %2852 = vmatprep.subr.mxu0 0.0
    %2853 = vmatpush1.msra.mxu0 0.0
    %2854 = vmatprep.subr.mxu0 0.0
    %2855 = vmatpush1.msra.mxu0 0.0
    %2856 = vmatprep.subr.mxu0 0.0
    %2857 = vmatpush1.msra.mxu0 0.0
    %2858 = vmatprep.subr.mxu0 0.0
    %2859 = vmatpush1.msra.mxu0 0.0
    %2860 = vmatprep.subr.mxu0 0.0
    %2861 = vmatpush1.msra.mxu0 0.0
    %2862 = vmatprep.subr.mxu0 0.0
    %2863 = vmatpush1.msra.mxu0 0.0
    %2864 = vmatprep.subr.mxu0 0.0
    %2865 = vmatpush1.msra.mxu0 0.0
    %2866 = vmatprep.subr.mxu0 0.0
    %2867 = vmatpush1.msra.mxu0 0.0
    %2868 = vmatprep.subr.mxu0 0.0
    %2869 = vmatpush1.msra.mxu0 0.0
    %2870 = vmatprep.subr.mxu0 0.0
    %2871 = vmatpush1.msra.mxu0 0.0
    %2872 = vmatprep.subr.mxu0 0.0
    %2873 = vmatpush1.msra.mxu0 0.0
    %2874 = vmatprep.subr.mxu0 0.0
    %2875 = vmatpush1.msra.mxu0 0.0
    %2876 = vmatprep.subr.mxu0 0.0
    %2877 = vmatpush1.msra.mxu0 0.0
    %2878 = vmatprep.subr.mxu0 0.0
    %2879 = vmatpush1.msra.mxu0 0.0
    %2880 = vmatprep.subr.mxu0 0.0
    %2881 = vmatpush1.msra.mxu0 0.0
    %2882 = vmatprep.subr.mxu0 0.0
    %2883 = vmatpush1.msra.mxu0 0.0
    %2884 = vmatprep.subr.mxu0 0.0
    %2885 = vmatpush1.msra.mxu0 0.0
    %2886 = vmatprep.subr.mxu0 0.0
    %2887 = vmatpush1.msra.mxu0 0.0
    %2888 = vmatprep.subr.mxu0 0.0
    %2889 = vmatpush1.msra.mxu0 0.0
    %2890 = vmatprep.subr.mxu0 0.0
    %2891 = vmatpush1.msra.mxu0 0.0
    %2892 = vmatprep.subr.mxu0 0.0
    %2893 = vmatpush1.msra.mxu0 0.0
    %2894 = vmatprep.subr.mxu0 0.0
    %2895 = vmatpush1.msra.mxu0 0.0
    %2896 = vmatprep.subr.mxu0 0.0
    %2897 = vmatpush1.msra.mxu0 0.0
    %2898 = vmatprep.subr.mxu0 0.0
    %2899 = vmatpush1.msra.mxu0 0.0
    %2900 = vmatprep.subr.mxu0 0.0
    %2901 = vmatpush1.msra.mxu0 0.0
    %2902 = vmatprep.subr.mxu0 0.0
    %2903 = vmatpush1.msra.mxu0 0.0
    %2904 = vmatprep.mubr.f32.mxu0 0.0
    %2905 = vmatmul.mubr.f32.gmra.mrb[0].mxu0 %v2835
    %v2906 = vpop.f32.mrb[0].mxu0
    %v2907 = vadd.f32 %v2832, %v2906
    %v2908 = vpop.f32.mrb[0].mxu0
    %2909 = vmatprep.mubr.f32.mxu0 0.0
    %2910 = vmatmul.mubr.f32.gmra.mrb[0].mxu0 %v2838
    %v2911 = vpop.f32.mrb[0].mxu0
    %v2912 = vadd.f32 %v2832, %v2911
    %v2913 = vpop.f32.mrb[0].mxu0
    %2914 = vdwg.mxu0
    %v2915 = vmul.f32 %v2907, 0.5
    %v2916 = vmul.f32 %v2912, 0.5
    %v2917 = vmul.f32 %v2907, 0.044715
    %v2918 = vmul.f32 %v2912, 0.044715
    %v2919 = vmul.f32 %v2917, %v2907
    %v2920 = vmul.f32 %v2918, %v2912
    %v2921 = vmul.f32 %v2919, %v2907
    %v2922 = vmul.f32 %v2920, %v2912
    %v2923 = vadd.f32 %v2907, %v2921
    %v2924 = vadd.f32 %v2912, %v2922
    %v2925 = vmul.f32 %v2923, 0.7978846
    %v2926 = vmul.f32 %v2924, 0.7978846
    %v2927 = vtanh.pop %v2925
    %v2928 = vtanh.pop %v2926
    %v2929 = vadd.f32 %v2927, 1.0
    %v2930 = vadd.f32 %v2928, 1.0
    %v2931 = vmul.f32 %v2915, %v2929
    %v2932 = vmul.f32 %v2916, %v2930
    %v2933 = vld [vmem:[#allocation28] sm:$0xff]
    %v2934 = vld [vmem:[#allocation28 + $0x8] sm:$0xff]
    %v2935 = vld [vmem:[#allocation28 + $0x10] sm:$0xff]
    %v2936 = vld [vmem:[#allocation28 + $0x18] sm:$0xff]
    %v2937 = vld [vmem:[#allocation28 + $0x20] sm:$0xff]
    %v2938 = vld [vmem:[#allocation28 + $0x28] sm:$0xff]
    %v2939 = vld [vmem:[#allocation28 + $0x30] sm:$0xff]
    %v2940 = vld [vmem:[#allocation28 + $0x38] sm:$0xff]
    %v2941 = vld [vmem:[#allocation23 + $0x3] sm:$0x1]
    %v2942 = vlaneseq
    %v2943 = vshrl.u32 %v2942, 7
    %v2944 = vsub.s32 0, %v2943
    %v2945 = vrot.slane %v2941, %v2944
    %vm2946 = vcmask 523264
    %v2948 = vsel %vm2946, %v2931, 0
    %v2951 = vsel %vm2946, %v2932, 0
    %2953 = vmatprep.subr.mxu0 0.0
    %2954 = vmatpush1.msra.mxu0 %v2933
    %2955 = vmatprep.subr.mxu0 0.0
    %2956 = vmatpush1.msra.mxu0 %v2934
    %2957 = vmatprep.subr.mxu0 0.0
    %2958 = vmatpush1.msra.mxu0 %v2935
    %2959 = vmatprep.subr.mxu0 0.0
    %2960 = vmatpush1.msra.mxu0 %v2936
    %2961 = vmatprep.subr.mxu0 0.0
    %2962 = vmatpush1.msra.mxu0 %v2937
    %2963 = vmatprep.subr.mxu0 0.0
    %2964 = vmatpush1.msra.mxu0 %v2938
    %2965 = vmatprep.subr.mxu0 0.0
    %2966 = vmatpush1.msra.mxu0 %v2939
    %2967 = vmatprep.subr.mxu0 0.0
    %2968 = vmatpush1.msra.mxu0 %v2940
    %2969 = vmatprep.subr.mxu0 0.0
    %2970 = vmatpush1.msra.mxu0 0.0
    %2971 = vmatprep.subr.mxu0 0.0
    %2972 = vmatpush1.msra.mxu0 0.0
    %2973 = vmatprep.subr.mxu0 0.0
    %2974 = vmatpush1.msra.mxu0 0.0
    %2975 = vmatprep.subr.mxu0 0.0
    %2976 = vmatpush1.msra.mxu0 0.0
    %2977 = vmatprep.subr.mxu0 0.0
    %2978 = vmatpush1.msra.mxu0 0.0
    %2979 = vmatprep.subr.mxu0 0.0
    %2980 = vmatpush1.msra.mxu0 0.0
    %2981 = vmatprep.subr.mxu0 0.0
    %2982 = vmatpush1.msra.mxu0 0.0
    %2983 = vmatprep.subr.mxu0 0.0
    %2984 = vmatpush1.msra.mxu0 0.0
    %2985 = vmatprep.subr.mxu0 0.0
    %2986 = vmatpush1.msra.mxu0 0.0
    %2987 = vmatprep.subr.mxu0 0.0
    %2988 = vmatpush1.msra.mxu0 0.0
    %2989 = vmatprep.subr.mxu0 0.0
    %2990 = vmatpush1.msra.mxu0 0.0
    %2991 = vmatprep.subr.mxu0 0.0
    %2992 = vmatpush1.msra.mxu0 0.0
    %2993 = vmatprep.subr.mxu0 0.0
    %2994 = vmatpush1.msra.mxu0 0.0
    %2995 = vmatprep.subr.mxu0 0.0
    %2996 = vmatpush1.msra.mxu0 0.0
    %2997 = vmatprep.subr.mxu0 0.0
    %2998 = vmatpush1.msra.mxu0 0.0
    %2999 = vmatprep.subr.mxu0 0.0
    %3000 = vmatpush1.msra.mxu0 0.0
    %3001 = vmatprep.subr.mxu0 0.0
    %3002 = vmatpush1.msra.mxu0 0.0
    %3003 = vmatprep.subr.mxu0 0.0
    %3004 = vmatpush1.msra.mxu0 0.0
    %3005 = vmatprep.subr.mxu0 0.0
    %3006 = vmatpush1.msra.mxu0 0.0
    %3007 = vmatprep.subr.mxu0 0.0
    %3008 = vmatpush1.msra.mxu0 0.0
    %3009 = vmatprep.subr.mxu0 0.0
    %3010 = vmatpush1.msra.mxu0 0.0
    %3011 = vmatprep.subr.mxu0 0.0
    %3012 = vmatpush1.msra.mxu0 0.0
    %3013 = vmatprep.subr.mxu0 0.0
    %3014 = vmatpush1.msra.mxu0 0.0
    %3015 = vmatprep.subr.mxu0 0.0
    %3016 = vmatpush1.msra.mxu0 0.0
    %3017 = vmatprep.mubr.f32.mxu0 0.0
    %3018 = vmatmul.mubr.f32.gmra.mrb[0].mxu0 %v2948
    %v3019 = vpop.f32.mrb[0].mxu0
    %v3020 = vadd.f32 %v2945, %v3019
    %v3021 = vpop.f32.mrb[0].mxu0
    %3022 = vmatprep.mubr.f32.mxu0 0.0
    %3023 = vmatmul.mubr.f32.gmra.mrb[0].mxu0 %v2951
    %v3024 = vpop.f32.mrb[0].mxu0
    %v3025 = vadd.f32 %v2945, %v3024
    %v3026 = vpop.f32.mrb[0].mxu0
    %3027 = vdwg.mxu0
    %v3028 = vadd.f32 %v2821, %v3020
    %v3029 = vadd.f32 %v2822, %v3025
    %v3030 = vld [vmem:[#allocation23 + $0x4] sm:$0x1]
    %v3031 = vld [vmem:[#allocation23 + $0x5] sm:$0x1]
    %v3032 = vsel %vm289, %v3028, 0.0
    %3033 = vadd.xlane.f32.xlu0 %v3032
    %v3034 = vpop.xlane.xlu0 %3033
    %v3035 = vsel %vm289, %v3029, 0.0
    %3036 = vadd.xlane.f32.xlu0 %v3035
    %v3037 = vpop.xlane.xlu0 %3036
    %v3038 = vmul.f32 %v3034, %v2790
    %v3039 = vmul.f32 %v3037, %v2790
    %v3040 = vsub.f32 %v3028, %v3038
    %v3041 = vsub.f32 %v3029, %v3039
    %v3042 = vmul.f32 %v3040, %v3040
    %v3043 = vmul.f32 %v3041, %v3041
    %v3044 = vsel %vm289, %v3042, 0.0
    %3045 = vadd.xlane.f32.xlu0 %v3044
    %v3046 = vpop.xlane.xlu0 %3045
    %v3047 = vsel %vm289, %v3043, 0.0
    %3048 = vadd.xlane.f32.xlu0 %v3047
    %v3049 = vpop.xlane.xlu0 %3048
    %v3050 = vmul.f32 %v3046, %v2790
    %v3051 = vmul.f32 %v3049, %v2790
    %v3052 = vadd.f32 %v3050, 1e-09
    %v3053 = vadd.f32 %v3051, 1e-09
    %v3054 = vrsqrt.pop %v3052
    %v3055 = vrsqrt.pop %v3053
    %v3056 = vmul.f32 %v3040, %v3054
    %v3057 = vmul.f32 %v3041, %v3055
    %v3058 = vlaneseq
    %v3059 = vshrl.u32 %v3058, 7
    %v3060 = vsub.s32 0, %v3059
    %v3061 = vrot.slane %v3030, %v3060
    %v3062 = vmul.f32 %v3056, %v3061
    %v3063 = vmul.f32 %v3057, %v3061
    %v3064 = vlaneseq
    %v3065 = vshrl.u32 %v3064, 7
    %v3066 = vsub.s32 0, %v3065
    %v3067 = vrot.slane %v3031, %v3066
    %v3068 = vadd.f32 %v3062, %v3067
    %v3069 = vadd.f32 %v3063, %v3067
    %3070 = vst.msk [vmem:[#allocation29] sm:$0xff] %vm289, %v3068
    %3071 = vst.msk [vmem:[#allocation29 + $0x8] sm:$0xff] %vm289, %v3069
    // Predicated region
    $region138: #{funnel_layer_pallas.1} parent=1 // pred_check
      _
    $region139: #{funnel_layer_pallas.1} parent=1 // pred_check_branch
      %3073 = sbr.rel (0) target = $region141
    $region140: #{funnel_layer_pallas.1} parent=1 // pred_region
      %s3075 = ssub.s32 256, 256
      %3076 = vsyncadd [#allocation4], %s3075
      %s3077 = sshll.u32 [#allocation29], 4
      %s3078 = int_to_ptr.vmem [resolvable:$true] %s3077
      %3083 = dma.vmem_to_hbm [thread:$0]  %s3078, 256, %s17, [#allocation4], 128, 128, 8
    $region141: #{funnel_layer_pallas.1} parent=1 // pred_fallthru
      _
    // Predicated region
    $region142: #{funnel_layer_pallas.1} parent=1 // pred_check
      _
    $region143: #{funnel_layer_pallas.1} parent=1 // pred_check_branch
      %3085 = sbr.rel (0) target = $region145
    $region144: #{funnel_layer_pallas.1} parent=1 // pred_region
      %3086 = dma.done [#allocation4], 256
    $region145: #{funnel_layer_pallas.1} parent=1 // pred_fallthru
      _
    %3087 = vsyncpa [#allocation3], 1
    %3088 = vsyncpa [#allocation6], 1
    %3089 = vsyncpa [#allocation9], 1
    %3090 = vsyncpa [#allocation12], 1
    %3091 = vsyncpa [#allocation15], 1
    %3092 = vsyncpa [#allocation18], 1
    %3093 = vsyncpa [#allocation21], 1
    %3094 = vsyncpa [#allocation24], 1
    %3095 = vsyncpa [#allocation27], 1
    %3096 = vsyncpa [#allocation4], 1

</llo_original>
